<compile_context>
chip_gen: v7x
topology: tpu7x:2x2x1
jax: 0.10.0
libtpu: 0.0.40
codegen_flags: <defaults>
</compile_context>

<pallas_src>
import functools
import numpy as np
import jax
import jax.numpy as jnp
from jax import lax
from jax.experimental import pallas as pl
from jax.experimental.pallas import tpu as pltpu

BN_EPS = 1e-5

# ------------------------- config (small, synthetic) -------------------------
ATOM_IN = 9          # image region features (intensity, feret, orientation, ...)
EDGE_BINS = 16       # RBFExpansion(0, 8, bins) for bond "length" (RAG weight)
ANGLE_BINS = 16      # RBFExpansion(-1, 1, bins) for line-graph edge feature
EMBED = 32           # embedding_features
HIDDEN = 32          # hidden_features
N_ALIGNN = 2         # alignn_layers
N_GCN = 2            # gcn_layers
N_CLASSES = 5        # classification head (LogSoftmax)

ATOM_IN_PAD = 16     # atom feature columns zero-padded for aligned bf16 matmul
OUT_PAD = 128        # lane-dense output width (classes padded to 128)
ROW_PAD = 16         # node/edge/triplet row padding (bf16 sublane pack of 2)


def _round_up(n, m):
    return ((n + m - 1) // m) * m


# ------------------------------ kernel helpers -------------------------------
def _silu(v):
    return v * jax.nn.sigmoid(v)


def _mdot(a, b):
    # bf16 operands feed the MXU at full rate on v5e/v6e/v7x; accumulate in f32.
    # (v7x has no int MXU path, so bf16 incidence is the portable choice.)
    return jnp.dot(a.astype(jnp.bfloat16), b.astype(jnp.bfloat16),
                   preferred_element_type=jnp.float32)


def _rbf(d, vmin, vmax, bins):
    # RBFExpansion: exp(-gamma * (d - centers)^2), gamma = 1/mean(diff(centers))
    idx = lax.broadcasted_iota(jnp.int32, (1, bins), 1).astype(jnp.float32)
    centers = vmin + idx * ((vmax - vmin) / (bins - 1))
    gamma = (bins - 1) / (vmax - vmin)
    return jnp.exp(-gamma * (d - centers) ** 2)


# ------------------------------ the fused kernel ------------------------------
def alignn_fused_kernel(H, schedule, Ep, Tp,
                        inv_n_ref,
                        node_feats_ref, bond_r_ref, angle_h_ref, node_mask_ref,
                        sd_g_ref, dt_g_ref, sd_l_ref, dt_l_ref,
                        w_atom_ref, b_atom_ref,
                        w_emb1_ref, b_emb1_ref, w_emb2_ref, b_emb2_ref,
                        wcat_ref, bcat_ref, wedge_ref, bedge_ref, bn_ref,
                        fc_w_ref, fc_b_ref,
                        out_ref):
    b = pl.program_id(0)

    node_feats = node_feats_ref[0]      # [Np, ATOM_IN_PAD]
    bond_r = bond_r_ref[0]              # [Ep, 1]
    angle_h = angle_h_ref[0]            # [Tp, 1]
    node_mask = node_mask_ref[0]        # [Np, 1]

    # ------------------------------ embeddings --------------------------------
    # atom embedding: MLPLayer(ATOM_IN -> H)   (BN folded into the linear)
    x = _silu(_mdot(node_feats, w_atom_ref[...]) + b_atom_ref[...])

    # edge embedding: RBF(0, 8) -> MLP -> MLP
    rbf_e = _rbf(bond_r, 0.0, 8.0, EDGE_BINS)
    y = _silu(_mdot(rbf_e, w_emb1_ref[0]) + b_emb1_ref[0])
    y = _silu(_mdot(y, w_emb2_ref[0]) + b_emb2_ref[0])

    # angle embedding: RBF(-1, 1) -> MLP -> MLP
    rbf_a = _rbf(angle_h, -1.0, 1.0, ANGLE_BINS)
    z = _silu(_mdot(rbf_a, w_emb1_ref[1]) + b_emb1_ref[1])
    z = _silu(_mdot(z, w_emb2_ref[1]) + b_emb2_ref[1])

    # graph structure (bf16, pre-cast host-side), loaded once; VMEM-resident
    SDg, DTg = sd_g_ref[...], dt_g_ref[...]
    SDl, DTl = sd_l_ref[...], dt_l_ref[...]

    # -------------------------- EdgeGatedGraphConv -----------------------------
    def egc(xin, yin, SD, DT, rows_e, l):
        # one lane-dense [rows_n, H] @ [H, 4H] matmul for all four node gates;
        # columns: [src_gate | dst_update(Bh) | dst_gate | src_update]
        gates = _mdot(xin, wcat_ref[l]) + bcat_ref[l]            # [rows_n, 4H]
        # fused gather: [S; D] @ gates in a single MXU push
        gath = _mdot(SD, gates)                                  # [2*rows_e, 4H]
        e_src_e = gath[0:rows_e, 0:H]                            # S @ src_gate
        bh_e = gath[0:rows_e, H:2 * H]                           # S @ dst_update
        e_dst_e = gath[rows_e:2 * rows_e, 2 * H:3 * H]           # D @ dst_gate
        m = e_src_e + e_dst_e + _mdot(yin, wedge_ref[l]) + bedge_ref[l]
        sigma = jax.nn.sigmoid(m)
        # scatter back onto destination nodes (two matmuls; no lane concat)
        sum_sh = _mdot(DT, sigma * bh_e)
        sum_s = _mdot(DT, sigma)
        h = sum_sh * pl.reciprocal(sum_s + 1e-6, approx=True)
        x_pre = gates[:, 3 * H:4 * H] + h
        bn = bn_ref[l]                                           # [4, H]
        x_new = xin + _silu(x_pre * bn[0:1] + bn[1:2])           # residual nodes
        y_new = yin + _silu(m * bn[2:3] + bn[3:4])               # residual edges
        return x_new, y_new

    # ALIGNN layers alternate g / line-graph; GCN layers run on g only.
    for l, kind in enumerate(schedule):
        if kind == 0:     # crystal graph g : features (x, y)
            x, y = egc(x, y, SDg, DTg, Ep, l)
        else:             # line graph lg : features (y(=m), z)
            y, z = egc(y, z, SDl, DTl, Tp, l)

    # --------------------- readout: AvgPool + fc + LogSoftmax ------------------
    inv_n = inv_n_ref[b]                                         # SMEM scalar
    h = jnp.sum(x * node_mask, axis=0, keepdims=True) * inv_n
    logits = jnp.dot(h, fc_w_ref[...],
                     preferred_element_type=jnp.float32) + fc_b_ref[...]
    mx = jnp.max(logits, axis=1, keepdims=True)
    lse = mx + jnp.log(jnp.sum(jnp.exp(logits - mx), axis=1, keepdims=True))
    out_ref[0] = logits - lse                                    # [1, OUT_PAD]


# ---------------------------- pallas_call wrapper -----------------------------
def _graph_spec(arr):
    tail = arr.shape[1:]
    n_tail = len(tail)
    return pl.BlockSpec((1,) + tail, lambda b, _n=n_tail: (b,) + (0,) * _n)


def _resident_spec(arr):
    zeros = (0,) * arr.ndim
    return pl.BlockSpec(arr.shape, lambda b, _z=zeros: _z)


def run_alignn_fused(inputs, params, inv_n_nodes):
    B, Np, _ = inputs["node_feats"].shape
    Ep = inputs["bond_r"].shape[1]
    Tp = inputs["angle_h"].shape[1]
    schedule = tuple([0, 1] * N_ALIGNN + [0] * N_GCN)
    kernel = functools.partial(alignn_fused_kernel, HIDDEN, schedule, Ep, Tp)

    args = (inv_n_nodes,
            inputs["node_feats"], inputs["bond_r"], inputs["angle_h"],
            inputs["node_mask"],
            inputs["SD_g"], inputs["DT_g"], inputs["SD_l"], inputs["DT_l"],
            params["w_atom"], params["b_atom"],
            params["w_emb1"], params["b_emb1"],
            params["w_emb2"], params["b_emb2"],
            params["wcat"], params["bcat"],
            params["wedge"], params["bedge"], params["bn"],
            params["fc_w_pad"], params["fc_b_pad"])

    in_specs = [pl.BlockSpec(memory_space=pltpu.MemorySpace.SMEM)]  # inv_n
    in_specs += [_graph_spec(a) for a in args[1:5]]                 # per-graph
    in_specs += [_resident_spec(a) for a in args[5:]]               # shared

    out = pl.pallas_call(
        kernel,
        grid=(B,),
        out_shape=jax.ShapeDtypeStruct((B, 1, OUT_PAD), jnp.float32),
        in_specs=in_specs,
        out_specs=pl.BlockSpec((1, 1, OUT_PAD), lambda b: (b, 0, 0)),
        compiler_params=pltpu.CompilerParams(
            dimension_semantics=("parallel",)),
    )(*args)
    return out[:, 0, :N_CLASSES]          # [B, N_CLASSES]


# ------------------------------- parameter init -------------------------------
def _default_bn(h):
    # rows = (gamma, beta, running_mean, running_var) — PyTorch eval defaults
    return jnp.stack([jnp.ones(h), jnp.zeros(h), jnp.zeros(h), jnp.ones(h)]
                     ).astype(jnp.float32)


def _bn_affine(bn):
    # inference BatchNorm as y = v * scale + shift
    gamma, beta, mean, var = bn[0], bn[1], bn[2], bn[3]
    scale = gamma / jnp.sqrt(var + BN_EPS)
    shift = beta - mean * scale
    return scale, shift


def _init_linear(key, fin, fout):
    kw, kb = jax.random.split(key)
    bound = 1.0 / np.sqrt(fin)
    w = jax.random.uniform(kw, (fin, fout), jnp.float32, -bound, bound)
    b = jax.random.uniform(kb, (1, fout), jnp.float32, -bound, bound)
    return w, b


def _init_mlp(key, fin, fout):
    w, b = _init_linear(key, fin, fout)
    return {"w": w, "b": b, "bn": _default_bn(fout)}


def _fold_mlp(p):
    # MLPLayer = SiLU(BN(Linear(x))) -> SiLU(x @ w' + b')  (exact, inference BN)
    scale, shift = _bn_affine(p["bn"])
    return p["w"] * scale[None, :], p["b"] * scale[None, :] + shift[None, :]


def _init_egc(key, h):
    # 5 linears: 0=src_gate, 1=dst_gate, 2=edge_gate, 3=src_update, 4=dst_update
    keys = jax.random.split(key, 5)
    ws, bs = zip(*[_init_linear(k, h, h) for k in keys])
    return {"w": list(ws), "b": list(bs),
            "bn_nodes": _default_bn(h), "bn_edges": _default_bn(h)}


def init_params(key):
    n_egc = 2 * N_ALIGNN + N_GCN
    ks = jax.random.split(key, 6 + n_egc)
    i = iter(range(len(ks)))
    raw = {
        "atom_emb": _init_mlp(ks[next(i)], ATOM_IN, HIDDEN),
        "edge_emb1": _init_mlp(ks[next(i)], EDGE_BINS, EMBED),
        "edge_emb2": _init_mlp(ks[next(i)], EMBED, HIDDEN),
        "angle_emb1": _init_mlp(ks[next(i)], ANGLE_BINS, EMBED),
        "angle_emb2": _init_mlp(ks[next(i)], EMBED, HIDDEN),
        # call order: [alignn0.node, alignn0.edge, alignn1.node, alignn1.edge,
        #              gcn0, gcn1]
        "egc": [_init_egc(ks[next(i)], HIDDEN) for _ in range(n_egc)],
    }
    raw["fc_w"], raw["fc_b"] = _init_linear(ks[next(i)], HIDDEN, N_CLASSES)
    return raw


def pack_params(raw):
    """Fold BN, concatenate per-layer gate weights, stack all EGC layers."""
    h = HIDDEN
    w_atom, b_atom = _fold_mlp(raw["atom_emb"])
    # zero-pad atom input features 9 -> 16 for an aligned bf16 contraction
    w_atom = jnp.zeros((ATOM_IN_PAD, h), jnp.float32).at[:ATOM_IN].set(w_atom)
    we1, be1 = _fold_mlp(raw["edge_emb1"])
    wa1, ba1 = _fold_mlp(raw["angle_emb1"])
    we2, be2 = _fold_mlp(raw["edge_emb2"])
    wa2, ba2 = _fold_mlp(raw["angle_emb2"])

    wcat, bcat, wedge, bedge, bn = [], [], [], [], []
    for lp in raw["egc"]:
        w, b = lp["w"], lp["b"]
        # column order used by the kernel: src_gate | dst_update | dst_gate | src_update
        wcat.append(jnp.concatenate([w[0], w[4], w[1], w[3]], axis=1))
        bcat.append(jnp.concatenate([b[0], b[4], b[1], b[3]], axis=1))
        wedge.append(w[2])
        bedge.append(b[2])
        sn, tn = _bn_affine(lp["bn_nodes"])
        se, te = _bn_affine(lp["bn_edges"])
        bn.append(jnp.stack([sn, tn, se, te]))

    fc_w, fc_b = raw["fc_w"], raw["fc_b"]
    # lane-dense classifier head: pad classes 5 -> 128; padded logits get a
    # -1e30 bias so they contribute nothing to the LogSoftmax over real classes.
    fc_w_pad = jnp.zeros((h, OUT_PAD), jnp.float32).at[:, :N_CLASSES].set(fc_w)
    fc_b_pad = jnp.full((1, OUT_PAD), -1e30, jnp.float32
                        ).at[:, :N_CLASSES].set(fc_b)

    return {
        "w_atom": w_atom, "b_atom": b_atom,
        "w_emb1": jnp.stack([we1, wa1]), "b_emb1": jnp.stack([be1, ba1]),
        "w_emb2": jnp.stack([we2, wa2]), "b_emb2": jnp.stack([be2, ba2]),
        "wcat": jnp.stack(wcat),     # [L, H, 4H] = [6, 32, 128]
        "bcat": jnp.stack(bcat),     # [L, 1, 4H]
        "wedge": jnp.stack(wedge),   # [L, H, H]
        "bedge": jnp.stack(bedge),   # [L, 1, H]
        "bn": jnp.stack(bn),         # [L, 4, H] = (s_nodes, t_nodes, s_edges, t_edges)
        "fc_w": fc_w, "fc_b": fc_b,            # raw head (for f32 reference)
        "fc_w_pad": fc_w_pad, "fc_b_pad": fc_b_pad,
    }


# -------------------------- synthetic graph construction ----------------------
def build_graph(n_nodes, pad=ROW_PAD):
    # directed ring in both directions (stands in for the RAG from the image)
    edges = []
    for i in range(n_nodes):
        edges.append((i, (i + 1) % n_nodes))
        edges.append(((i + 1) % n_nodes, i))
    src = np.array([e[0] for e in edges], np.int32)
    dst = np.array([e[1] for e in edges], np.int32)
    E = len(edges)

    # line graph (DGL default, includes backtracking): e1->e2 if dst(e1)==src(e2)
    lg = [(e1, e2) for e1 in range(E) for e2 in range(E) if dst[e1] == src[e2]]
    T = len(lg)
    lsrc = np.array([e[0] for e in lg], np.int32)
    ldst = np.array([e[1] for e in lg], np.int32)

    Np, Ep, Tp = _round_up(n_nodes, pad), _round_up(E, pad), _round_up(T, pad)

    S_g = np.zeros((Ep, Np), np.float32); S_g[np.arange(E), src] = 1.0
    D_g = np.zeros((Ep, Np), np.float32); D_g[np.arange(E), dst] = 1.0
    S_l = np.zeros((Tp, Ep), np.float32); S_l[np.arange(T), lsrc] = 1.0
    D_l = np.zeros((Tp, Ep), np.float32); D_l[np.arange(T), ldst] = 1.0

    return dict(
        src=src, dst=dst, lsrc=lsrc, ldst=ldst,
        n_nodes=n_nodes, n_edges=E, n_trip=T, Np=Np, Ep=Ep, Tp=Tp,
        # f32 copies for the pure-JAX reference
        S_g=jnp.asarray(S_g), D_g=jnp.asarray(D_g),
        S_l=jnp.asarray(S_l), D_l=jnp.asarray(D_l),
        # bf16, host pre-cast, stacked [S; D] gather + D^T scatter for the kernel
        SD_g=jnp.asarray(np.concatenate([S_g, D_g], 0), dtype=jnp.bfloat16),
        DT_g=jnp.asarray(D_g.T, dtype=jnp.bfloat16),
        SD_l=jnp.asarray(np.concatenate([S_l, D_l], 0), dtype=jnp.bfloat16),
        DT_l=jnp.asarray(D_l.T, dtype=jnp.bfloat16))


# ------------------------- pure-JAX f32 reference ------------------------------
def alignn_reference(g, node_feats, bond_r, angle_h, node_mask, params, n_real):
    H = HIDDEN
    schedule = [0, 1] * N_ALIGNN + [0] * N_GCN
    S_g, D_g, S_l, D_l = g["S_g"], g["D_g"], g["S_l"], g["D_l"]

    def silu(v):
        return v * jax.nn.sigmoid(v)

    def rbf(d, vmin, vmax, bins):
        centers = jnp.linspace(vmin, vmax, bins).reshape(1, bins)
        gamma = (bins - 1) / (vmax - vmin)
        return jnp.exp(-gamma * (d - centers) ** 2)

    x = silu(node_feats @ params["w_atom"] + params["b_atom"])
    y = silu(rbf(bond_r, 0.0, 8.0, EDGE_BINS) @ params["w_emb1"][0]
             + params["b_emb1"][0])
    y = silu(y @ params["w_emb2"][0] + params["b_emb2"][0])
    z = silu(rbf(angle_h, -1.0, 1.0, ANGLE_BINS) @ params["w_emb1"][1]
             + params["b_emb1"][1])
    z = silu(z @ params["w_emb2"][1] + params["b_emb2"][1])

    def egc(xin, yin, S, D, l):
        gates = xin @ params["wcat"][l] + params["bcat"][l]
        e_src = S @ gates[:, 0:H]
        bh = S @ gates[:, H:2 * H]
        e_dst = D @ gates[:, 2 * H:3 * H]
        m = e_src + e_dst + yin @ params["wedge"][l] + params["bedge"][l]
        sigma = jax.nn.sigmoid(m)
        sum_sh = D.T @ (sigma * bh)
        sum_s = D.T @ sigma
        h = sum_sh / (sum_s + 1e-6)
        bn = params["bn"][l]
        x_new = xin + silu((gates[:, 3 * H:4 * H] + h) * bn[0:1] + bn[1:2])
        y_new = yin + silu(m * bn[2:3] + bn[3:4])
        return x_new, y_new

    for l, kind in enumerate(schedule):
        if kind == 0:
            x, y = egc(x, y, S_g, D_g, l)
        else:
            y, z = egc(y, z, S_l, D_l, l)

    hpool = jnp.sum(x * node_mask, axis=0, keepdims=True) / n_real
    logits = hpool @ params["fc_w"] + params["fc_b"]
    return jax.nn.log_softmax(logits, axis=1)[0]


if __name__ == "__main__":
    key = jax.random.PRNGKey(0)
    k_feat, k_r, k_params = jax.random.split(key, 3)

    B = 8                      # graphs per batch (one per grid step)
    N_NODES = 12
    g = build_graph(N_NODES)
    N, E, T = g["n_nodes"], g["n_edges"], g["n_trip"]
    Np, Ep, Tp = g["Np"], g["Ep"], g["Tp"]

    # g.ndata['atom_features'] : 9 region features per node (zero-padded rows/cols)
    feats = jax.random.uniform(k_feat, (B, N, ATOM_IN), jnp.float32)
    node_feats = jnp.zeros((B, Np, ATOM_IN_PAD), jnp.float32
                           ).at[:, :N, :ATOM_IN].set(feats)
    # g.edata['r'] : scalar RAG edge weight per directed edge, in [0, 8)
    r = jax.random.uniform(k_r, (B, E), jnp.float32, 0.0, 8.0)
    bond_r = jnp.zeros((B, Ep, 1), jnp.float32).at[:, :E, 0].set(r)
    # lg.edata['h'] = compute_edge_props: r2 - (-r1) = r[dst_edge] + r[src_edge]
    angle = r[:, g["ldst"]] + r[:, g["lsrc"]]
    angle_h = jnp.zeros((B, Tp, 1), jnp.float32).at[:, :T, 0].set(angle)
    node_mask = jnp.zeros((B, Np, 1), jnp.float32).at[:, :N, :].set(1.0)
    inv_n_nodes = jnp.full((B,), 1.0 / N, jnp.float32)   # per-graph, via SMEM

    inputs = {"node_feats": node_feats, "bond_r": bond_r, "angle_h": angle_h,
              "node_mask": node_mask,
              "SD_g": g["SD_g"], "DT_g": g["DT_g"],
              "SD_l": g["SD_l"], "DT_l": g["DT_l"]}

    params = pack_params(init_params(k_params))

    out = run_alignn_fused(inputs, params, inv_n_nodes)
    out = jax.block_until_ready(out)
    out_np = np.asarray(out)

    assert out.shape == (B, N_CLASSES)
    assert np.isfinite(out_np).all()
    # log-softmax output: exp(out) must sum to ~1 per graph
    sums = np.asarray(jnp.sum(jnp.exp(out), axis=1))
    assert np.all(np.abs(sums - 1.0) < 1e-4)

    # tolerance-checked pure-JAX f32 reference (bf16 MXU operands + approx
    # reciprocal in the kernel are the only deviations)
    ref = np.stack([np.asarray(alignn_reference(
        g, node_feats[b], bond_r[b], angle_h[b], node_mask[b], params, N))
        for b in range(B)])
    assert np.max(np.abs(ref - out_np)) < 0.2

    print("KERNEL_OK")
</pallas_src>

<mosaic_0001>
module attributes {stable_mosaic.version = 11 : i64} {
  func.func @alignn_fused_kernel(%arg0: i32, %arg1: memref<8xf32, #tpu.memory_space<smem>>, %arg2: memref<1x16x16xf32, #tpu.memory_space<vmem>>, %arg3: memref<1x32x1xf32, #tpu.memory_space<vmem>>, %arg4: memref<1x48x1xf32, #tpu.memory_space<vmem>>, %arg5: memref<1x16x1xf32, #tpu.memory_space<vmem>>, %arg6: memref<64x16xbf16, #tpu.memory_space<vmem>>, %arg7: memref<16x32xbf16, #tpu.memory_space<vmem>>, %arg8: memref<96x32xbf16, #tpu.memory_space<vmem>>, %arg9: memref<32x48xbf16, #tpu.memory_space<vmem>>, %arg10: memref<16x32xf32, #tpu.memory_space<vmem>>, %arg11: memref<1x32xf32, #tpu.memory_space<vmem>>, %arg12: memref<2x16x32xf32, #tpu.memory_space<vmem>>, %arg13: memref<2x1x32xf32, #tpu.memory_space<vmem>>, %arg14: memref<2x32x32xf32, #tpu.memory_space<vmem>>, %arg15: memref<2x1x32xf32, #tpu.memory_space<vmem>>, %arg16: memref<6x32x128xf32, #tpu.memory_space<vmem>>, %arg17: memref<6x1x128xf32, #tpu.memory_space<vmem>>, %arg18: memref<6x32x32xf32, #tpu.memory_space<vmem>>, %arg19: memref<6x1x32xf32, #tpu.memory_space<vmem>>, %arg20: memref<6x4x32xf32, #tpu.memory_space<vmem>>, %arg21: memref<32x128xf32, #tpu.memory_space<vmem>>, %arg22: memref<1x128xf32, #tpu.memory_space<vmem>>, %arg23: memref<1x1x128xf32, #tpu.memory_space<vmem>>) attributes {dimension_semantics = [#tpu.dimension_semantics<parallel>], iteration_bounds = array<i64: 8>, scalar_prefetch = 0 : i64, scratch_operands = 0 : i64, tpu.core_type = #tpu.core_type<tc>, window_params = [{transform_indices = @transform_0, window_bounds = array<i64: 8>}, {transform_indices = @transform_1, window_bounds = array<i64: 1, 16, 16>}, {transform_indices = @transform_2, window_bounds = array<i64: 1, 32, 1>}, {transform_indices = @transform_3, window_bounds = array<i64: 1, 48, 1>}, {transform_indices = @transform_4, window_bounds = array<i64: 1, 16, 1>}, {pipeline_mode = #tpu.pipeline_mode<synchronous>, transform_indices = @transform_5, window_bounds = array<i64: 64, 16>}, {pipeline_mode = #tpu.pipeline_mode<synchronous>, transform_indices = @transform_6, window_bounds = array<i64: 16, 32>}, {pipeline_mode = #tpu.pipeline_mode<synchronous>, transform_indices = @transform_7, window_bounds = array<i64: 96, 32>}, {pipeline_mode = #tpu.pipeline_mode<synchronous>, transform_indices = @transform_8, window_bounds = array<i64: 32, 48>}, {pipeline_mode = #tpu.pipeline_mode<synchronous>, transform_indices = @transform_9, window_bounds = array<i64: 16, 32>}, {pipeline_mode = #tpu.pipeline_mode<synchronous>, transform_indices = @transform_10, window_bounds = array<i64: 1, 32>}, {pipeline_mode = #tpu.pipeline_mode<synchronous>, transform_indices = @transform_11, window_bounds = array<i64: 2, 16, 32>}, {pipeline_mode = #tpu.pipeline_mode<synchronous>, transform_indices = @transform_12, window_bounds = array<i64: 2, 1, 32>}, {pipeline_mode = #tpu.pipeline_mode<synchronous>, transform_indices = @transform_13, window_bounds = array<i64: 2, 32, 32>}, {pipeline_mode = #tpu.pipeline_mode<synchronous>, transform_indices = @transform_14, window_bounds = array<i64: 2, 1, 32>}, {pipeline_mode = #tpu.pipeline_mode<synchronous>, transform_indices = @transform_15, window_bounds = array<i64: 6, 32, 128>}, {pipeline_mode = #tpu.pipeline_mode<synchronous>, transform_indices = @transform_16, window_bounds = array<i64: 6, 1, 128>}, {pipeline_mode = #tpu.pipeline_mode<synchronous>, transform_indices = @transform_17, window_bounds = array<i64: 6, 32, 32>}, {pipeline_mode = #tpu.pipeline_mode<synchronous>, transform_indices = @transform_18, window_bounds = array<i64: 6, 1, 32>}, {pipeline_mode = #tpu.pipeline_mode<synchronous>, transform_indices = @transform_19, window_bounds = array<i64: 6, 4, 32>}, {pipeline_mode = #tpu.pipeline_mode<synchronous>, transform_indices = @transform_20, window_bounds = array<i64: 32, 128>}, {pipeline_mode = #tpu.pipeline_mode<synchronous>, transform_indices = @transform_21, window_bounds = array<i64: 1, 128>}, {transform_indices = @transform_22, window_bounds = array<i64: 1, 1, 128>}]} {
    %c0 = arith.constant 0 : index
    %c0_0 = arith.constant 0 : index
    %c0_1 = arith.constant 0 : index
    %0 = vector.load %arg2[%c0, %c0_0, %c0_1] : memref<1x16x16xf32, #tpu.memory_space<vmem>>, vector<1x16x16xf32>
    %1 = vector.shape_cast %0 : vector<1x16x16xf32> to vector<16x16xf32>
    %c0_2 = arith.constant 0 : index
    %c0_3 = arith.constant 0 : index
    %c0_4 = arith.constant 0 : index
    %2 = vector.load %arg3[%c0_2, %c0_3, %c0_4] : memref<1x32x1xf32, #tpu.memory_space<vmem>>, vector<1x32x1xf32>
    %3 = vector.shape_cast %2 : vector<1x32x1xf32> to vector<32x1xf32>
    %c0_5 = arith.constant 0 : index
    %c0_6 = arith.constant 0 : index
    %c0_7 = arith.constant 0 : index
    %4 = vector.load %arg4[%c0_5, %c0_6, %c0_7] : memref<1x48x1xf32, #tpu.memory_space<vmem>>, vector<1x48x1xf32>
    %5 = vector.shape_cast %4 : vector<1x48x1xf32> to vector<48x1xf32>
    %c0_8 = arith.constant 0 : index
    %c0_9 = arith.constant 0 : index
    %c0_10 = arith.constant 0 : index
    %6 = vector.load %arg5[%c0_8, %c0_9, %c0_10] : memref<1x16x1xf32, #tpu.memory_space<vmem>>, vector<1x16x1xf32>
    %7 = vector.shape_cast %6 : vector<1x16x1xf32> to vector<16x1xf32>
    %c0_11 = arith.constant 0 : index
    %c0_12 = arith.constant 0 : index
    %8 = vector.load %arg10[%c0_11, %c0_12] : memref<16x32xf32, #tpu.memory_space<vmem>>, vector<16x32xf32>
    %9 = arith.truncf %1 : vector<16x16xf32> to vector<16x16xbf16>
    %10 = arith.truncf %8 : vector<16x32xf32> to vector<16x32xbf16>
    %cst = arith.constant dense<0.000000e+00> : vector<16x32xf32>
    %11 = tpu.matmul %9, %10, %cst {dimension_numbers = #tpu.dot_dimension_numbers<[1], [0], [0], [1], [0, 0, 1, 1], [], []>} : vector<16x16xbf16>, vector<16x32xbf16>, vector<16x32xf32> -> vector<16x32xf32>
    %c0_13 = arith.constant 0 : index
    %c0_14 = arith.constant 0 : index
    %12 = vector.load %arg11[%c0_13, %c0_14] : memref<1x32xf32, #tpu.memory_space<vmem>>, vector<1x32xf32>
    %13 = vector.broadcast %12 : vector<1x32xf32> to vector<16x32xf32>
    %14 = arith.addf %11, %13 : vector<16x32xf32>
    %15 = arith.negf %14 : vector<16x32xf32>
    %16 = math.exp %15 : vector<16x32xf32>
    %cst_15 = arith.constant 1.000000e+00 : f32
    %17 = vector.broadcast %cst_15 : f32 to vector<16x32xf32>
    %18 = arith.addf %17, %16 : vector<16x32xf32>
    %19 = arith.divf %17, %18 : vector<16x32xf32>
    %20 = arith.mulf %14, %19 : vector<16x32xf32>
    %21 = tpu.iota {dimensions = array<i32: 1>} : vector<1x16xi32>
    %22 = arith.sitofp %21 : vector<1x16xi32> to vector<1x16xf32>
    %cst_16 = arith.constant 0.533333361 : f32
    %23 = vector.broadcast %cst_16 : f32 to vector<1x16xf32>
    %24 = arith.mulf %22, %23 : vector<1x16xf32>
    %cst_17 = arith.constant 0.000000e+00 : f32
    %25 = vector.broadcast %cst_17 : f32 to vector<1x16xf32>
    %26 = arith.addf %25, %24 : vector<1x16xf32>
    %27 = vector.broadcast %3 : vector<32x1xf32> to vector<32x16xf32>
    %28 = vector.broadcast %26 : vector<1x16xf32> to vector<32x16xf32>
    %29 = arith.subf %27, %28 : vector<32x16xf32>
    %30 = arith.mulf %29, %29 : vector<32x16xf32>
    %cst_18 = arith.constant -1.875000e+00 : f32
    %31 = vector.broadcast %cst_18 : f32 to vector<32x16xf32>
    %32 = arith.mulf %31, %30 : vector<32x16xf32>
    %33 = math.exp %32 : vector<32x16xf32>
    %c0_19 = arith.constant 0 : index
    %c0_20 = arith.constant 0 : index
    %c0_21 = arith.constant 0 : index
    %34 = vector.load %arg12[%c0_19, %c0_20, %c0_21] : memref<2x16x32xf32, #tpu.memory_space<vmem>>, vector<1x16x32xf32>
    %35 = vector.shape_cast %34 : vector<1x16x32xf32> to vector<16x32xf32>
    %36 = arith.truncf %33 : vector<32x16xf32> to vector<32x16xbf16>
    %37 = arith.truncf %35 : vector<16x32xf32> to vector<16x32xbf16>
    %cst_22 = arith.constant dense<0.000000e+00> : vector<32x32xf32>
    %38 = tpu.matmul %36, %37, %cst_22 {dimension_numbers = #tpu.dot_dimension_numbers<[1], [0], [0], [1], [0, 0, 1, 1], [], []>} : vector<32x16xbf16>, vector<16x32xbf16>, vector<32x32xf32> -> vector<32x32xf32>
    %c0_23 = arith.constant 0 : index
    %c0_24 = arith.constant 0 : index
    %c0_25 = arith.constant 0 : index
    %39 = vector.load %arg13[%c0_23, %c0_24, %c0_25] : memref<2x1x32xf32, #tpu.memory_space<vmem>>, vector<1x1x32xf32>
    %40 = vector.shape_cast %39 : vector<1x1x32xf32> to vector<1x32xf32>
    %41 = vector.broadcast %40 : vector<1x32xf32> to vector<32x32xf32>
    %42 = arith.addf %38, %41 : vector<32x32xf32>
    %43 = arith.negf %42 : vector<32x32xf32>
    %44 = math.exp %43 : vector<32x32xf32>
    %cst_26 = arith.constant 1.000000e+00 : f32
    %45 = vector.broadcast %cst_26 : f32 to vector<32x32xf32>
    %46 = arith.addf %45, %44 : vector<32x32xf32>
    %47 = arith.divf %45, %46 : vector<32x32xf32>
    %48 = arith.mulf %42, %47 : vector<32x32xf32>
    %c0_27 = arith.constant 0 : index
    %c0_28 = arith.constant 0 : index
    %c0_29 = arith.constant 0 : index
    %49 = vector.load %arg14[%c0_27, %c0_28, %c0_29] : memref<2x32x32xf32, #tpu.memory_space<vmem>>, vector<1x32x32xf32>
    %50 = vector.shape_cast %49 : vector<1x32x32xf32> to vector<32x32xf32>
    %51 = arith.truncf %48 : vector<32x32xf32> to vector<32x32xbf16>
    %52 = arith.truncf %50 : vector<32x32xf32> to vector<32x32xbf16>
    %cst_30 = arith.constant dense<0.000000e+00> : vector<32x32xf32>
    %53 = tpu.matmul %51, %52, %cst_30 {dimension_numbers = #tpu.dot_dimension_numbers<[1], [0], [0], [1], [0, 0, 1, 1], [], []>} : vector<32x32xbf16>, vector<32x32xbf16>, vector<32x32xf32> -> vector<32x32xf32>
    %c0_31 = arith.constant 0 : index
    %c0_32 = arith.constant 0 : index
    %c0_33 = arith.constant 0 : index
    %54 = vector.load %arg15[%c0_31, %c0_32, %c0_33] : memref<2x1x32xf32, #tpu.memory_space<vmem>>, vector<1x1x32xf32>
    %55 = vector.shape_cast %54 : vector<1x1x32xf32> to vector<1x32xf32>
    %56 = vector.broadcast %55 : vector<1x32xf32> to vector<32x32xf32>
    %57 = arith.addf %53, %56 : vector<32x32xf32>
    %58 = arith.negf %57 : vector<32x32xf32>
    %59 = math.exp %58 : vector<32x32xf32>
    %cst_34 = arith.constant 1.000000e+00 : f32
    %60 = vector.broadcast %cst_34 : f32 to vector<32x32xf32>
    %61 = arith.addf %60, %59 : vector<32x32xf32>
    %62 = arith.divf %60, %61 : vector<32x32xf32>
    %63 = arith.mulf %57, %62 : vector<32x32xf32>
    %64 = tpu.iota {dimensions = array<i32: 1>} : vector<1x16xi32>
    %65 = arith.sitofp %64 : vector<1x16xi32> to vector<1x16xf32>
    %cst_35 = arith.constant 0.13333334 : f32
    %66 = vector.broadcast %cst_35 : f32 to vector<1x16xf32>
    %67 = arith.mulf %65, %66 : vector<1x16xf32>
    %cst_36 = arith.constant -1.000000e+00 : f32
    %68 = vector.broadcast %cst_36 : f32 to vector<1x16xf32>
    %69 = arith.addf %68, %67 : vector<1x16xf32>
    %70 = vector.broadcast %5 : vector<48x1xf32> to vector<48x16xf32>
    %71 = vector.broadcast %69 : vector<1x16xf32> to vector<48x16xf32>
    %72 = arith.subf %70, %71 : vector<48x16xf32>
    %73 = arith.mulf %72, %72 : vector<48x16xf32>
    %cst_37 = arith.constant -7.500000e+00 : f32
    %74 = vector.broadcast %cst_37 : f32 to vector<48x16xf32>
    %75 = arith.mulf %74, %73 : vector<48x16xf32>
    %76 = math.exp %75 : vector<48x16xf32>
    %c1 = arith.constant 1 : index
    %c0_38 = arith.constant 0 : index
    %c0_39 = arith.constant 0 : index
    %77 = vector.load %arg12[%c1, %c0_38, %c0_39] : memref<2x16x32xf32, #tpu.memory_space<vmem>>, vector<1x16x32xf32>
    %78 = vector.shape_cast %77 : vector<1x16x32xf32> to vector<16x32xf32>
    %79 = arith.truncf %76 : vector<48x16xf32> to vector<48x16xbf16>
    %80 = arith.truncf %78 : vector<16x32xf32> to vector<16x32xbf16>
    %cst_40 = arith.constant dense<0.000000e+00> : vector<48x32xf32>
    %81 = tpu.matmul %79, %80, %cst_40 {dimension_numbers = #tpu.dot_dimension_numbers<[1], [0], [0], [1], [0, 0, 1, 1], [], []>} : vector<48x16xbf16>, vector<16x32xbf16>, vector<48x32xf32> -> vector<48x32xf32>
    %c1_41 = arith.constant 1 : index
    %c0_42 = arith.constant 0 : index
    %c0_43 = arith.constant 0 : index
    %82 = vector.load %arg13[%c1_41, %c0_42, %c0_43] : memref<2x1x32xf32, #tpu.memory_space<vmem>>, vector<1x1x32xf32>
    %83 = vector.shape_cast %82 : vector<1x1x32xf32> to vector<1x32xf32>
    %84 = vector.broadcast %83 : vector<1x32xf32> to vector<48x32xf32>
    %85 = arith.addf %81, %84 : vector<48x32xf32>
    %86 = arith.negf %85 : vector<48x32xf32>
    %87 = math.exp %86 : vector<48x32xf32>
    %cst_44 = arith.constant 1.000000e+00 : f32
    %88 = vector.broadcast %cst_44 : f32 to vector<48x32xf32>
    %89 = arith.addf %88, %87 : vector<48x32xf32>
    %90 = arith.divf %88, %89 : vector<48x32xf32>
    %91 = arith.mulf %85, %90 : vector<48x32xf32>
    %c1_45 = arith.constant 1 : index
    %c0_46 = arith.constant 0 : index
    %c0_47 = arith.constant 0 : index
    %92 = vector.load %arg14[%c1_45, %c0_46, %c0_47] : memref<2x32x32xf32, #tpu.memory_space<vmem>>, vector<1x32x32xf32>
    %93 = vector.shape_cast %92 : vector<1x32x32xf32> to vector<32x32xf32>
    %94 = arith.truncf %91 : vector<48x32xf32> to vector<48x32xbf16>
    %95 = arith.truncf %93 : vector<32x32xf32> to vector<32x32xbf16>
    %cst_48 = arith.constant dense<0.000000e+00> : vector<48x32xf32>
    %96 = tpu.matmul %94, %95, %cst_48 {dimension_numbers = #tpu.dot_dimension_numbers<[1], [0], [0], [1], [0, 0, 1, 1], [], []>} : vector<48x32xbf16>, vector<32x32xbf16>, vector<48x32xf32> -> vector<48x32xf32>
    %c1_49 = arith.constant 1 : index
    %c0_50 = arith.constant 0 : index
    %c0_51 = arith.constant 0 : index
    %97 = vector.load %arg15[%c1_49, %c0_50, %c0_51] : memref<2x1x32xf32, #tpu.memory_space<vmem>>, vector<1x1x32xf32>
    %98 = vector.shape_cast %97 : vector<1x1x32xf32> to vector<1x32xf32>
    %99 = vector.broadcast %98 : vector<1x32xf32> to vector<48x32xf32>
    %100 = arith.addf %96, %99 : vector<48x32xf32>
    %101 = arith.negf %100 : vector<48x32xf32>
    %102 = math.exp %101 : vector<48x32xf32>
    %cst_52 = arith.constant 1.000000e+00 : f32
    %103 = vector.broadcast %cst_52 : f32 to vector<48x32xf32>
    %104 = arith.addf %103, %102 : vector<48x32xf32>
    %105 = arith.divf %103, %104 : vector<48x32xf32>
    %106 = arith.mulf %100, %105 : vector<48x32xf32>
    %c0_53 = arith.constant 0 : index
    %c0_54 = arith.constant 0 : index
    %107 = vector.load %arg6[%c0_53, %c0_54] : memref<64x16xbf16, #tpu.memory_space<vmem>>, vector<64x16xbf16>
    %c0_55 = arith.constant 0 : index
    %c0_56 = arith.constant 0 : index
    %108 = vector.load %arg7[%c0_55, %c0_56] : memref<16x32xbf16, #tpu.memory_space<vmem>>, vector<16x32xbf16>
    %c0_57 = arith.constant 0 : index
    %c0_58 = arith.constant 0 : index
    %109 = vector.load %arg8[%c0_57, %c0_58] : memref<96x32xbf16, #tpu.memory_space<vmem>>, vector<96x32xbf16>
    %c0_59 = arith.constant 0 : index
    %c0_60 = arith.constant 0 : index
    %110 = vector.load %arg9[%c0_59, %c0_60] : memref<32x48xbf16, #tpu.memory_space<vmem>>, vector<32x48xbf16>
    %c0_61 = arith.constant 0 : index
    %c0_62 = arith.constant 0 : index
    %c0_63 = arith.constant 0 : index
    %111 = vector.load %arg16[%c0_61, %c0_62, %c0_63] : memref<6x32x128xf32, #tpu.memory_space<vmem>>, vector<1x32x128xf32>
    %112 = vector.shape_cast %111 : vector<1x32x128xf32> to vector<32x128xf32>
    %113 = arith.truncf %20 : vector<16x32xf32> to vector<16x32xbf16>
    %114 = arith.truncf %112 : vector<32x128xf32> to vector<32x128xbf16>
    %cst_64 = arith.constant dense<0.000000e+00> : vector<16x128xf32>
    %115 = tpu.matmul %113, %114, %cst_64 {dimension_numbers = #tpu.dot_dimension_numbers<[1], [0], [0], [1], [0, 0, 1, 1], [], []>} : vector<16x32xbf16>, vector<32x128xbf16>, vector<16x128xf32> -> vector<16x128xf32>
    %c0_65 = arith.constant 0 : index
    %c0_66 = arith.constant 0 : index
    %c0_67 = arith.constant 0 : index
    %116 = vector.load %arg17[%c0_65, %c0_66, %c0_67] : memref<6x1x128xf32, #tpu.memory_space<vmem>>, vector<1x1x128xf32>
    %117 = vector.shape_cast %116 : vector<1x1x128xf32> to vector<1x128xf32>
    %118 = vector.broadcast %117 : vector<1x128xf32> to vector<16x128xf32>
    %119 = arith.addf %115, %118 : vector<16x128xf32>
    %120 = arith.truncf %119 : vector<16x128xf32> to vector<16x128xbf16>
    %cst_68 = arith.constant dense<0.000000e+00> : vector<64x128xf32>
    %121 = tpu.matmul %107, %120, %cst_68 {dimension_numbers = #tpu.dot_dimension_numbers<[1], [0], [0], [1], [0, 0, 1, 1], [], []>} : vector<64x16xbf16>, vector<16x128xbf16>, vector<64x128xf32> -> vector<64x128xf32>
    %122 = vector.extract_strided_slice %121 {offsets = [0, 0], sizes = [32, 32], strides = [1, 1]} : vector<64x128xf32> to vector<32x32xf32>
    %123 = vector.extract_strided_slice %121 {offsets = [0, 32], sizes = [32, 32], strides = [1, 1]} : vector<64x128xf32> to vector<32x32xf32>
    %124 = vector.extract_strided_slice %121 {offsets = [32, 64], sizes = [32, 32], strides = [1, 1]} : vector<64x128xf32> to vector<32x32xf32>
    %125 = arith.addf %122, %124 : vector<32x32xf32>
    %c0_69 = arith.constant 0 : index
    %c0_70 = arith.constant 0 : index
    %c0_71 = arith.constant 0 : index
    %126 = vector.load %arg18[%c0_69, %c0_70, %c0_71] : memref<6x32x32xf32, #tpu.memory_space<vmem>>, vector<1x32x32xf32>
    %127 = vector.shape_cast %126 : vector<1x32x32xf32> to vector<32x32xf32>
    %128 = arith.truncf %63 : vector<32x32xf32> to vector<32x32xbf16>
    %129 = arith.truncf %127 : vector<32x32xf32> to vector<32x32xbf16>
    %cst_72 = arith.constant dense<0.000000e+00> : vector<32x32xf32>
    %130 = tpu.matmul %128, %129, %cst_72 {dimension_numbers = #tpu.dot_dimension_numbers<[1], [0], [0], [1], [0, 0, 1, 1], [], []>} : vector<32x32xbf16>, vector<32x32xbf16>, vector<32x32xf32> -> vector<32x32xf32>
    %131 = arith.addf %125, %130 : vector<32x32xf32>
    %c0_73 = arith.constant 0 : index
    %c0_74 = arith.constant 0 : index
    %c0_75 = arith.constant 0 : index
    %132 = vector.load %arg19[%c0_73, %c0_74, %c0_75] : memref<6x1x32xf32, #tpu.memory_space<vmem>>, vector<1x1x32xf32>
    %133 = vector.shape_cast %132 : vector<1x1x32xf32> to vector<1x32xf32>
    %134 = vector.broadcast %133 : vector<1x32xf32> to vector<32x32xf32>
    %135 = arith.addf %131, %134 : vector<32x32xf32>
    %136 = arith.negf %135 : vector<32x32xf32>
    %137 = math.exp %136 : vector<32x32xf32>
    %cst_76 = arith.constant 1.000000e+00 : f32
    %138 = vector.broadcast %cst_76 : f32 to vector<32x32xf32>
    %139 = arith.addf %138, %137 : vector<32x32xf32>
    %140 = arith.divf %138, %139 : vector<32x32xf32>
    %141 = arith.mulf %140, %123 : vector<32x32xf32>
    %142 = arith.truncf %141 : vector<32x32xf32> to vector<32x32xbf16>
    %cst_77 = arith.constant dense<0.000000e+00> : vector<16x32xf32>
    %143 = tpu.matmul %108, %142, %cst_77 {dimension_numbers = #tpu.dot_dimension_numbers<[1], [0], [0], [1], [0, 0, 1, 1], [], []>} : vector<16x32xbf16>, vector<32x32xbf16>, vector<16x32xf32> -> vector<16x32xf32>
    %144 = arith.truncf %140 : vector<32x32xf32> to vector<32x32xbf16>
    %cst_78 = arith.constant dense<0.000000e+00> : vector<16x32xf32>
    %145 = tpu.matmul %108, %144, %cst_78 {dimension_numbers = #tpu.dot_dimension_numbers<[1], [0], [0], [1], [0, 0, 1, 1], [], []>} : vector<16x32xbf16>, vector<32x32xbf16>, vector<16x32xf32> -> vector<16x32xf32>
    %cst_79 = arith.constant 9.99999997E-7 : f32
    %146 = vector.broadcast %cst_79 : f32 to vector<16x32xf32>
    %147 = arith.addf %145, %146 : vector<16x32xf32>
    %148 = tpu.reciprocal %147 {approx = true} : vector<16x32xf32> -> vector<16x32xf32>
    %149 = arith.mulf %143, %148 : vector<16x32xf32>
    %150 = vector.extract_strided_slice %119 {offsets = [0, 96], sizes = [16, 32], strides = [1, 1]} : vector<16x128xf32> to vector<16x32xf32>
    %151 = arith.addf %150, %149 : vector<16x32xf32>
    %c0_80 = arith.constant 0 : index
    %c0_81 = arith.constant 0 : index
    %c0_82 = arith.constant 0 : index
    %152 = vector.load %arg20[%c0_80, %c0_81, %c0_82] : memref<6x4x32xf32, #tpu.memory_space<vmem>>, vector<1x4x32xf32>
    %153 = vector.shape_cast %152 : vector<1x4x32xf32> to vector<4x32xf32>
    %154 = vector.extract_strided_slice %153 {offsets = [0, 0], sizes = [1, 32], strides = [1, 1]} : vector<4x32xf32> to vector<1x32xf32>
    %155 = vector.broadcast %154 : vector<1x32xf32> to vector<16x32xf32>
    %156 = arith.mulf %151, %155 : vector<16x32xf32>
    %157 = vector.extract_strided_slice %153 {offsets = [1, 0], sizes = [1, 32], strides = [1, 1]} : vector<4x32xf32> to vector<1x32xf32>
    %158 = vector.broadcast %157 : vector<1x32xf32> to vector<16x32xf32>
    %159 = arith.addf %156, %158 : vector<16x32xf32>
    %160 = arith.negf %159 : vector<16x32xf32>
    %161 = math.exp %160 : vector<16x32xf32>
    %cst_83 = arith.constant 1.000000e+00 : f32
    %162 = vector.broadcast %cst_83 : f32 to vector<16x32xf32>
    %163 = arith.addf %162, %161 : vector<16x32xf32>
    %164 = arith.divf %162, %163 : vector<16x32xf32>
    %165 = arith.mulf %159, %164 : vector<16x32xf32>
    %166 = arith.addf %20, %165 : vector<16x32xf32>
    %167 = vector.extract_strided_slice %153 {offsets = [2, 0], sizes = [1, 32], strides = [1, 1]} : vector<4x32xf32> to vector<1x32xf32>
    %168 = vector.broadcast %167 : vector<1x32xf32> to vector<32x32xf32>
    %169 = arith.mulf %135, %168 : vector<32x32xf32>
    %170 = vector.extract_strided_slice %153 {offsets = [3, 0], sizes = [1, 32], strides = [1, 1]} : vector<4x32xf32> to vector<1x32xf32>
    %171 = vector.broadcast %170 : vector<1x32xf32> to vector<32x32xf32>
    %172 = arith.addf %169, %171 : vector<32x32xf32>
    %173 = arith.negf %172 : vector<32x32xf32>
    %174 = math.exp %173 : vector<32x32xf32>
    %cst_84 = arith.constant 1.000000e+00 : f32
    %175 = vector.broadcast %cst_84 : f32 to vector<32x32xf32>
    %176 = arith.addf %175, %174 : vector<32x32xf32>
    %177 = arith.divf %175, %176 : vector<32x32xf32>
    %178 = arith.mulf %172, %177 : vector<32x32xf32>
    %179 = arith.addf %63, %178 : vector<32x32xf32>
    %c1_85 = arith.constant 1 : index
    %c0_86 = arith.constant 0 : index
    %c0_87 = arith.constant 0 : index
    %180 = vector.load %arg16[%c1_85, %c0_86, %c0_87] : memref<6x32x128xf32, #tpu.memory_space<vmem>>, vector<1x32x128xf32>
    %181 = vector.shape_cast %180 : vector<1x32x128xf32> to vector<32x128xf32>
    %182 = arith.truncf %179 : vector<32x32xf32> to vector<32x32xbf16>
    %183 = arith.truncf %181 : vector<32x128xf32> to vector<32x128xbf16>
    %cst_88 = arith.constant dense<0.000000e+00> : vector<32x128xf32>
    %184 = tpu.matmul %182, %183, %cst_88 {dimension_numbers = #tpu.dot_dimension_numbers<[1], [0], [0], [1], [0, 0, 1, 1], [], []>} : vector<32x32xbf16>, vector<32x128xbf16>, vector<32x128xf32> -> vector<32x128xf32>
    %c1_89 = arith.constant 1 : index
    %c0_90 = arith.constant 0 : index
    %c0_91 = arith.constant 0 : index
    %185 = vector.load %arg17[%c1_89, %c0_90, %c0_91] : memref<6x1x128xf32, #tpu.memory_space<vmem>>, vector<1x1x128xf32>
    %186 = vector.shape_cast %185 : vector<1x1x128xf32> to vector<1x128xf32>
    %187 = vector.broadcast %186 : vector<1x128xf32> to vector<32x128xf32>
    %188 = arith.addf %184, %187 : vector<32x128xf32>
    %189 = arith.truncf %188 : vector<32x128xf32> to vector<32x128xbf16>
    %cst_92 = arith.constant dense<0.000000e+00> : vector<96x128xf32>
    %190 = tpu.matmul %109, %189, %cst_92 {dimension_numbers = #tpu.dot_dimension_numbers<[1], [0], [0], [1], [0, 0, 1, 1], [], []>} : vector<96x32xbf16>, vector<32x128xbf16>, vector<96x128xf32> -> vector<96x128xf32>
    %191 = vector.extract_strided_slice %190 {offsets = [0, 0], sizes = [48, 32], strides = [1, 1]} : vector<96x128xf32> to vector<48x32xf32>
    %192 = vector.extract_strided_slice %190 {offsets = [0, 32], sizes = [48, 32], strides = [1, 1]} : vector<96x128xf32> to vector<48x32xf32>
    %193 = vector.extract_strided_slice %190 {offsets = [48, 64], sizes = [48, 32], strides = [1, 1]} : vector<96x128xf32> to vector<48x32xf32>
    %194 = arith.addf %191, %193 : vector<48x32xf32>
    %c1_93 = arith.constant 1 : index
    %c0_94 = arith.constant 0 : index
    %c0_95 = arith.constant 0 : index
    %195 = vector.load %arg18[%c1_93, %c0_94, %c0_95] : memref<6x32x32xf32, #tpu.memory_space<vmem>>, vector<1x32x32xf32>
    %196 = vector.shape_cast %195 : vector<1x32x32xf32> to vector<32x32xf32>
    %197 = arith.truncf %106 : vector<48x32xf32> to vector<48x32xbf16>
    %198 = arith.truncf %196 : vector<32x32xf32> to vector<32x32xbf16>
    %cst_96 = arith.constant dense<0.000000e+00> : vector<48x32xf32>
    %199 = tpu.matmul %197, %198, %cst_96 {dimension_numbers = #tpu.dot_dimension_numbers<[1], [0], [0], [1], [0, 0, 1, 1], [], []>} : vector<48x32xbf16>, vector<32x32xbf16>, vector<48x32xf32> -> vector<48x32xf32>
    %200 = arith.addf %194, %199 : vector<48x32xf32>
    %c1_97 = arith.constant 1 : index
    %c0_98 = arith.constant 0 : index
    %c0_99 = arith.constant 0 : index
    %201 = vector.load %arg19[%c1_97, %c0_98, %c0_99] : memref<6x1x32xf32, #tpu.memory_space<vmem>>, vector<1x1x32xf32>
    %202 = vector.shape_cast %201 : vector<1x1x32xf32> to vector<1x32xf32>
    %203 = vector.broadcast %202 : vector<1x32xf32> to vector<48x32xf32>
    %204 = arith.addf %200, %203 : vector<48x32xf32>
    %205 = arith.negf %204 : vector<48x32xf32>
    %206 = math.exp %205 : vector<48x32xf32>
    %cst_100 = arith.constant 1.000000e+00 : f32
    %207 = vector.broadcast %cst_100 : f32 to vector<48x32xf32>
    %208 = arith.addf %207, %206 : vector<48x32xf32>
    %209 = arith.divf %207, %208 : vector<48x32xf32>
    %210 = arith.mulf %209, %192 : vector<48x32xf32>
    %211 = arith.truncf %210 : vector<48x32xf32> to vector<48x32xbf16>
    %cst_101 = arith.constant dense<0.000000e+00> : vector<32x32xf32>
    %212 = tpu.matmul %110, %211, %cst_101 {dimension_numbers = #tpu.dot_dimension_numbers<[1], [0], [0], [1], [0, 0, 1, 1], [], []>} : vector<32x48xbf16>, vector<48x32xbf16>, vector<32x32xf32> -> vector<32x32xf32>
    %213 = arith.truncf %209 : vector<48x32xf32> to vector<48x32xbf16>
    %cst_102 = arith.constant dense<0.000000e+00> : vector<32x32xf32>
    %214 = tpu.matmul %110, %213, %cst_102 {dimension_numbers = #tpu.dot_dimension_numbers<[1], [0], [0], [1], [0, 0, 1, 1], [], []>} : vector<32x48xbf16>, vector<48x32xbf16>, vector<32x32xf32> -> vector<32x32xf32>
    %cst_103 = arith.constant 9.99999997E-7 : f32
    %215 = vector.broadcast %cst_103 : f32 to vector<32x32xf32>
    %216 = arith.addf %214, %215 : vector<32x32xf32>
    %217 = tpu.reciprocal %216 {approx = true} : vector<32x32xf32> -> vector<32x32xf32>
    %218 = arith.mulf %212, %217 : vector<32x32xf32>
    %219 = vector.extract_strided_slice %188 {offsets = [0, 96], sizes = [32, 32], strides = [1, 1]} : vector<32x128xf32> to vector<32x32xf32>
    %220 = arith.addf %219, %218 : vector<32x32xf32>
    %c1_104 = arith.constant 1 : index
    %c0_105 = arith.constant 0 : index
    %c0_106 = arith.constant 0 : index
    %221 = vector.load %arg20[%c1_104, %c0_105, %c0_106] : memref<6x4x32xf32, #tpu.memory_space<vmem>>, vector<1x4x32xf32>
    %222 = vector.shape_cast %221 : vector<1x4x32xf32> to vector<4x32xf32>
    %223 = vector.extract_strided_slice %222 {offsets = [0, 0], sizes = [1, 32], strides = [1, 1]} : vector<4x32xf32> to vector<1x32xf32>
    %224 = vector.broadcast %223 : vector<1x32xf32> to vector<32x32xf32>
    %225 = arith.mulf %220, %224 : vector<32x32xf32>
    %226 = vector.extract_strided_slice %222 {offsets = [1, 0], sizes = [1, 32], strides = [1, 1]} : vector<4x32xf32> to vector<1x32xf32>
    %227 = vector.broadcast %226 : vector<1x32xf32> to vector<32x32xf32>
    %228 = arith.addf %225, %227 : vector<32x32xf32>
    %229 = arith.negf %228 : vector<32x32xf32>
    %230 = math.exp %229 : vector<32x32xf32>
    %cst_107 = arith.constant 1.000000e+00 : f32
    %231 = vector.broadcast %cst_107 : f32 to vector<32x32xf32>
    %232 = arith.addf %231, %230 : vector<32x32xf32>
    %233 = arith.divf %231, %232 : vector<32x32xf32>
    %234 = arith.mulf %228, %233 : vector<32x32xf32>
    %235 = arith.addf %179, %234 : vector<32x32xf32>
    %236 = vector.extract_strided_slice %222 {offsets = [2, 0], sizes = [1, 32], strides = [1, 1]} : vector<4x32xf32> to vector<1x32xf32>
    %237 = vector.broadcast %236 : vector<1x32xf32> to vector<48x32xf32>
    %238 = arith.mulf %204, %237 : vector<48x32xf32>
    %239 = vector.extract_strided_slice %222 {offsets = [3, 0], sizes = [1, 32], strides = [1, 1]} : vector<4x32xf32> to vector<1x32xf32>
    %240 = vector.broadcast %239 : vector<1x32xf32> to vector<48x32xf32>
    %241 = arith.addf %238, %240 : vector<48x32xf32>
    %242 = arith.negf %241 : vector<48x32xf32>
    %243 = math.exp %242 : vector<48x32xf32>
    %cst_108 = arith.constant 1.000000e+00 : f32
    %244 = vector.broadcast %cst_108 : f32 to vector<48x32xf32>
    %245 = arith.addf %244, %243 : vector<48x32xf32>
    %246 = arith.divf %244, %245 : vector<48x32xf32>
    %247 = arith.mulf %241, %246 : vector<48x32xf32>
    %248 = arith.addf %106, %247 : vector<48x32xf32>
    %c2 = arith.constant 2 : index
    %c0_109 = arith.constant 0 : index
    %c0_110 = arith.constant 0 : index
    %249 = vector.load %arg16[%c2, %c0_109, %c0_110] : memref<6x32x128xf32, #tpu.memory_space<vmem>>, vector<1x32x128xf32>
    %250 = vector.shape_cast %249 : vector<1x32x128xf32> to vector<32x128xf32>
    %251 = arith.truncf %166 : vector<16x32xf32> to vector<16x32xbf16>
    %252 = arith.truncf %250 : vector<32x128xf32> to vector<32x128xbf16>
    %cst_111 = arith.constant dense<0.000000e+00> : vector<16x128xf32>
    %253 = tpu.matmul %251, %252, %cst_111 {dimension_numbers = #tpu.dot_dimension_numbers<[1], [0], [0], [1], [0, 0, 1, 1], [], []>} : vector<16x32xbf16>, vector<32x128xbf16>, vector<16x128xf32> -> vector<16x128xf32>
    %c2_112 = arith.constant 2 : index
    %c0_113 = arith.constant 0 : index
    %c0_114 = arith.constant 0 : index
    %254 = vector.load %arg17[%c2_112, %c0_113, %c0_114] : memref<6x1x128xf32, #tpu.memory_space<vmem>>, vector<1x1x128xf32>
    %255 = vector.shape_cast %254 : vector<1x1x128xf32> to vector<1x128xf32>
    %256 = vector.broadcast %255 : vector<1x128xf32> to vector<16x128xf32>
    %257 = arith.addf %253, %256 : vector<16x128xf32>
    %258 = arith.truncf %257 : vector<16x128xf32> to vector<16x128xbf16>
    %cst_115 = arith.constant dense<0.000000e+00> : vector<64x128xf32>
    %259 = tpu.matmul %107, %258, %cst_115 {dimension_numbers = #tpu.dot_dimension_numbers<[1], [0], [0], [1], [0, 0, 1, 1], [], []>} : vector<64x16xbf16>, vector<16x128xbf16>, vector<64x128xf32> -> vector<64x128xf32>
    %260 = vector.extract_strided_slice %259 {offsets = [0, 0], sizes = [32, 32], strides = [1, 1]} : vector<64x128xf32> to vector<32x32xf32>
    %261 = vector.extract_strided_slice %259 {offsets = [0, 32], sizes = [32, 32], strides = [1, 1]} : vector<64x128xf32> to vector<32x32xf32>
    %262 = vector.extract_strided_slice %259 {offsets = [32, 64], sizes = [32, 32], strides = [1, 1]} : vector<64x128xf32> to vector<32x32xf32>
    %263 = arith.addf %260, %262 : vector<32x32xf32>
    %c2_116 = arith.constant 2 : index
    %c0_117 = arith.constant 0 : index
    %c0_118 = arith.constant 0 : index
    %264 = vector.load %arg18[%c2_116, %c0_117, %c0_118] : memref<6x32x32xf32, #tpu.memory_space<vmem>>, vector<1x32x32xf32>
    %265 = vector.shape_cast %264 : vector<1x32x32xf32> to vector<32x32xf32>
    %266 = arith.truncf %235 : vector<32x32xf32> to vector<32x32xbf16>
    %267 = arith.truncf %265 : vector<32x32xf32> to vector<32x32xbf16>
    %cst_119 = arith.constant dense<0.000000e+00> : vector<32x32xf32>
    %268 = tpu.matmul %266, %267, %cst_119 {dimension_numbers = #tpu.dot_dimension_numbers<[1], [0], [0], [1], [0, 0, 1, 1], [], []>} : vector<32x32xbf16>, vector<32x32xbf16>, vector<32x32xf32> -> vector<32x32xf32>
    %269 = arith.addf %263, %268 : vector<32x32xf32>
    %c2_120 = arith.constant 2 : index
    %c0_121 = arith.constant 0 : index
    %c0_122 = arith.constant 0 : index
    %270 = vector.load %arg19[%c2_120, %c0_121, %c0_122] : memref<6x1x32xf32, #tpu.memory_space<vmem>>, vector<1x1x32xf32>
    %271 = vector.shape_cast %270 : vector<1x1x32xf32> to vector<1x32xf32>
    %272 = vector.broadcast %271 : vector<1x32xf32> to vector<32x32xf32>
    %273 = arith.addf %269, %272 : vector<32x32xf32>
    %274 = arith.negf %273 : vector<32x32xf32>
    %275 = math.exp %274 : vector<32x32xf32>
    %cst_123 = arith.constant 1.000000e+00 : f32
    %276 = vector.broadcast %cst_123 : f32 to vector<32x32xf32>
    %277 = arith.addf %276, %275 : vector<32x32xf32>
    %278 = arith.divf %276, %277 : vector<32x32xf32>
    %279 = arith.mulf %278, %261 : vector<32x32xf32>
    %280 = arith.truncf %279 : vector<32x32xf32> to vector<32x32xbf16>
    %cst_124 = arith.constant dense<0.000000e+00> : vector<16x32xf32>
    %281 = tpu.matmul %108, %280, %cst_124 {dimension_numbers = #tpu.dot_dimension_numbers<[1], [0], [0], [1], [0, 0, 1, 1], [], []>} : vector<16x32xbf16>, vector<32x32xbf16>, vector<16x32xf32> -> vector<16x32xf32>
    %282 = arith.truncf %278 : vector<32x32xf32> to vector<32x32xbf16>
    %cst_125 = arith.constant dense<0.000000e+00> : vector<16x32xf32>
    %283 = tpu.matmul %108, %282, %cst_125 {dimension_numbers = #tpu.dot_dimension_numbers<[1], [0], [0], [1], [0, 0, 1, 1], [], []>} : vector<16x32xbf16>, vector<32x32xbf16>, vector<16x32xf32> -> vector<16x32xf32>
    %cst_126 = arith.constant 9.99999997E-7 : f32
    %284 = vector.broadcast %cst_126 : f32 to vector<16x32xf32>
    %285 = arith.addf %283, %284 : vector<16x32xf32>
    %286 = tpu.reciprocal %285 {approx = true} : vector<16x32xf32> -> vector<16x32xf32>
    %287 = arith.mulf %281, %286 : vector<16x32xf32>
    %288 = vector.extract_strided_slice %257 {offsets = [0, 96], sizes = [16, 32], strides = [1, 1]} : vector<16x128xf32> to vector<16x32xf32>
    %289 = arith.addf %288, %287 : vector<16x32xf32>
    %c2_127 = arith.constant 2 : index
    %c0_128 = arith.constant 0 : index
    %c0_129 = arith.constant 0 : index
    %290 = vector.load %arg20[%c2_127, %c0_128, %c0_129] : memref<6x4x32xf32, #tpu.memory_space<vmem>>, vector<1x4x32xf32>
    %291 = vector.shape_cast %290 : vector<1x4x32xf32> to vector<4x32xf32>
    %292 = vector.extract_strided_slice %291 {offsets = [0, 0], sizes = [1, 32], strides = [1, 1]} : vector<4x32xf32> to vector<1x32xf32>
    %293 = vector.broadcast %292 : vector<1x32xf32> to vector<16x32xf32>
    %294 = arith.mulf %289, %293 : vector<16x32xf32>
    %295 = vector.extract_strided_slice %291 {offsets = [1, 0], sizes = [1, 32], strides = [1, 1]} : vector<4x32xf32> to vector<1x32xf32>
    %296 = vector.broadcast %295 : vector<1x32xf32> to vector<16x32xf32>
    %297 = arith.addf %294, %296 : vector<16x32xf32>
    %298 = arith.negf %297 : vector<16x32xf32>
    %299 = math.exp %298 : vector<16x32xf32>
    %cst_130 = arith.constant 1.000000e+00 : f32
    %300 = vector.broadcast %cst_130 : f32 to vector<16x32xf32>
    %301 = arith.addf %300, %299 : vector<16x32xf32>
    %302 = arith.divf %300, %301 : vector<16x32xf32>
    %303 = arith.mulf %297, %302 : vector<16x32xf32>
    %304 = arith.addf %166, %303 : vector<16x32xf32>
    %305 = vector.extract_strided_slice %291 {offsets = [2, 0], sizes = [1, 32], strides = [1, 1]} : vector<4x32xf32> to vector<1x32xf32>
    %306 = vector.broadcast %305 : vector<1x32xf32> to vector<32x32xf32>
    %307 = arith.mulf %273, %306 : vector<32x32xf32>
    %308 = vector.extract_strided_slice %291 {offsets = [3, 0], sizes = [1, 32], strides = [1, 1]} : vector<4x32xf32> to vector<1x32xf32>
    %309 = vector.broadcast %308 : vector<1x32xf32> to vector<32x32xf32>
    %310 = arith.addf %307, %309 : vector<32x32xf32>
    %311 = arith.negf %310 : vector<32x32xf32>
    %312 = math.exp %311 : vector<32x32xf32>
    %cst_131 = arith.constant 1.000000e+00 : f32
    %313 = vector.broadcast %cst_131 : f32 to vector<32x32xf32>
    %314 = arith.addf %313, %312 : vector<32x32xf32>
    %315 = arith.divf %313, %314 : vector<32x32xf32>
    %316 = arith.mulf %310, %315 : vector<32x32xf32>
    %317 = arith.addf %235, %316 : vector<32x32xf32>
    %c3 = arith.constant 3 : index
    %c0_132 = arith.constant 0 : index
    %c0_133 = arith.constant 0 : index
    %318 = vector.load %arg16[%c3, %c0_132, %c0_133] : memref<6x32x128xf32, #tpu.memory_space<vmem>>, vector<1x32x128xf32>
    %319 = vector.shape_cast %318 : vector<1x32x128xf32> to vector<32x128xf32>
    %320 = arith.truncf %317 : vector<32x32xf32> to vector<32x32xbf16>
    %321 = arith.truncf %319 : vector<32x128xf32> to vector<32x128xbf16>
    %cst_134 = arith.constant dense<0.000000e+00> : vector<32x128xf32>
    %322 = tpu.matmul %320, %321, %cst_134 {dimension_numbers = #tpu.dot_dimension_numbers<[1], [0], [0], [1], [0, 0, 1, 1], [], []>} : vector<32x32xbf16>, vector<32x128xbf16>, vector<32x128xf32> -> vector<32x128xf32>
    %c3_135 = arith.constant 3 : index
    %c0_136 = arith.constant 0 : index
    %c0_137 = arith.constant 0 : index
    %323 = vector.load %arg17[%c3_135, %c0_136, %c0_137] : memref<6x1x128xf32, #tpu.memory_space<vmem>>, vector<1x1x128xf32>
    %324 = vector.shape_cast %323 : vector<1x1x128xf32> to vector<1x128xf32>
    %325 = vector.broadcast %324 : vector<1x128xf32> to vector<32x128xf32>
    %326 = arith.addf %322, %325 : vector<32x128xf32>
    %327 = arith.truncf %326 : vector<32x128xf32> to vector<32x128xbf16>
    %cst_138 = arith.constant dense<0.000000e+00> : vector<96x128xf32>
    %328 = tpu.matmul %109, %327, %cst_138 {dimension_numbers = #tpu.dot_dimension_numbers<[1], [0], [0], [1], [0, 0, 1, 1], [], []>} : vector<96x32xbf16>, vector<32x128xbf16>, vector<96x128xf32> -> vector<96x128xf32>
    %329 = vector.extract_strided_slice %328 {offsets = [0, 0], sizes = [48, 32], strides = [1, 1]} : vector<96x128xf32> to vector<48x32xf32>
    %330 = vector.extract_strided_slice %328 {offsets = [0, 32], sizes = [48, 32], strides = [1, 1]} : vector<96x128xf32> to vector<48x32xf32>
    %331 = vector.extract_strided_slice %328 {offsets = [48, 64], sizes = [48, 32], strides = [1, 1]} : vector<96x128xf32> to vector<48x32xf32>
    %332 = arith.addf %329, %331 : vector<48x32xf32>
    %c3_139 = arith.constant 3 : index
    %c0_140 = arith.constant 0 : index
    %c0_141 = arith.constant 0 : index
    %333 = vector.load %arg18[%c3_139, %c0_140, %c0_141] : memref<6x32x32xf32, #tpu.memory_space<vmem>>, vector<1x32x32xf32>
    %334 = vector.shape_cast %333 : vector<1x32x32xf32> to vector<32x32xf32>
    %335 = arith.truncf %248 : vector<48x32xf32> to vector<48x32xbf16>
    %336 = arith.truncf %334 : vector<32x32xf32> to vector<32x32xbf16>
    %cst_142 = arith.constant dense<0.000000e+00> : vector<48x32xf32>
    %337 = tpu.matmul %335, %336, %cst_142 {dimension_numbers = #tpu.dot_dimension_numbers<[1], [0], [0], [1], [0, 0, 1, 1], [], []>} : vector<48x32xbf16>, vector<32x32xbf16>, vector<48x32xf32> -> vector<48x32xf32>
    %338 = arith.addf %332, %337 : vector<48x32xf32>
    %c3_143 = arith.constant 3 : index
    %c0_144 = arith.constant 0 : index
    %c0_145 = arith.constant 0 : index
    %339 = vector.load %arg19[%c3_143, %c0_144, %c0_145] : memref<6x1x32xf32, #tpu.memory_space<vmem>>, vector<1x1x32xf32>
    %340 = vector.shape_cast %339 : vector<1x1x32xf32> to vector<1x32xf32>
    %341 = vector.broadcast %340 : vector<1x32xf32> to vector<48x32xf32>
    %342 = arith.addf %338, %341 : vector<48x32xf32>
    %343 = arith.negf %342 : vector<48x32xf32>
    %344 = math.exp %343 : vector<48x32xf32>
    %cst_146 = arith.constant 1.000000e+00 : f32
    %345 = vector.broadcast %cst_146 : f32 to vector<48x32xf32>
    %346 = arith.addf %345, %344 : vector<48x32xf32>
    %347 = arith.divf %345, %346 : vector<48x32xf32>
    %348 = arith.mulf %347, %330 : vector<48x32xf32>
    %349 = arith.truncf %348 : vector<48x32xf32> to vector<48x32xbf16>
    %cst_147 = arith.constant dense<0.000000e+00> : vector<32x32xf32>
    %350 = tpu.matmul %110, %349, %cst_147 {dimension_numbers = #tpu.dot_dimension_numbers<[1], [0], [0], [1], [0, 0, 1, 1], [], []>} : vector<32x48xbf16>, vector<48x32xbf16>, vector<32x32xf32> -> vector<32x32xf32>
    %351 = arith.truncf %347 : vector<48x32xf32> to vector<48x32xbf16>
    %cst_148 = arith.constant dense<0.000000e+00> : vector<32x32xf32>
    %352 = tpu.matmul %110, %351, %cst_148 {dimension_numbers = #tpu.dot_dimension_numbers<[1], [0], [0], [1], [0, 0, 1, 1], [], []>} : vector<32x48xbf16>, vector<48x32xbf16>, vector<32x32xf32> -> vector<32x32xf32>
    %cst_149 = arith.constant 9.99999997E-7 : f32
    %353 = vector.broadcast %cst_149 : f32 to vector<32x32xf32>
    %354 = arith.addf %352, %353 : vector<32x32xf32>
    %355 = tpu.reciprocal %354 {approx = true} : vector<32x32xf32> -> vector<32x32xf32>
    %356 = arith.mulf %350, %355 : vector<32x32xf32>
    %357 = vector.extract_strided_slice %326 {offsets = [0, 96], sizes = [32, 32], strides = [1, 1]} : vector<32x128xf32> to vector<32x32xf32>
    %358 = arith.addf %357, %356 : vector<32x32xf32>
    %c3_150 = arith.constant 3 : index
    %c0_151 = arith.constant 0 : index
    %c0_152 = arith.constant 0 : index
    %359 = vector.load %arg20[%c3_150, %c0_151, %c0_152] : memref<6x4x32xf32, #tpu.memory_space<vmem>>, vector<1x4x32xf32>
    %360 = vector.shape_cast %359 : vector<1x4x32xf32> to vector<4x32xf32>
    %361 = vector.extract_strided_slice %360 {offsets = [0, 0], sizes = [1, 32], strides = [1, 1]} : vector<4x32xf32> to vector<1x32xf32>
    %362 = vector.broadcast %361 : vector<1x32xf32> to vector<32x32xf32>
    %363 = arith.mulf %358, %362 : vector<32x32xf32>
    %364 = vector.extract_strided_slice %360 {offsets = [1, 0], sizes = [1, 32], strides = [1, 1]} : vector<4x32xf32> to vector<1x32xf32>
    %365 = vector.broadcast %364 : vector<1x32xf32> to vector<32x32xf32>
    %366 = arith.addf %363, %365 : vector<32x32xf32>
    %367 = arith.negf %366 : vector<32x32xf32>
    %368 = math.exp %367 : vector<32x32xf32>
    %cst_153 = arith.constant 1.000000e+00 : f32
    %369 = vector.broadcast %cst_153 : f32 to vector<32x32xf32>
    %370 = arith.addf %369, %368 : vector<32x32xf32>
    %371 = arith.divf %369, %370 : vector<32x32xf32>
    %372 = arith.mulf %366, %371 : vector<32x32xf32>
    %373 = arith.addf %317, %372 : vector<32x32xf32>
    %c4 = arith.constant 4 : index
    %c0_154 = arith.constant 0 : index
    %c0_155 = arith.constant 0 : index
    %374 = vector.load %arg16[%c4, %c0_154, %c0_155] : memref<6x32x128xf32, #tpu.memory_space<vmem>>, vector<1x32x128xf32>
    %375 = vector.shape_cast %374 : vector<1x32x128xf32> to vector<32x128xf32>
    %376 = arith.truncf %304 : vector<16x32xf32> to vector<16x32xbf16>
    %377 = arith.truncf %375 : vector<32x128xf32> to vector<32x128xbf16>
    %cst_156 = arith.constant dense<0.000000e+00> : vector<16x128xf32>
    %378 = tpu.matmul %376, %377, %cst_156 {dimension_numbers = #tpu.dot_dimension_numbers<[1], [0], [0], [1], [0, 0, 1, 1], [], []>} : vector<16x32xbf16>, vector<32x128xbf16>, vector<16x128xf32> -> vector<16x128xf32>
    %c4_157 = arith.constant 4 : index
    %c0_158 = arith.constant 0 : index
    %c0_159 = arith.constant 0 : index
    %379 = vector.load %arg17[%c4_157, %c0_158, %c0_159] : memref<6x1x128xf32, #tpu.memory_space<vmem>>, vector<1x1x128xf32>
    %380 = vector.shape_cast %379 : vector<1x1x128xf32> to vector<1x128xf32>
    %381 = vector.broadcast %380 : vector<1x128xf32> to vector<16x128xf32>
    %382 = arith.addf %378, %381 : vector<16x128xf32>
    %383 = arith.truncf %382 : vector<16x128xf32> to vector<16x128xbf16>
    %cst_160 = arith.constant dense<0.000000e+00> : vector<64x128xf32>
    %384 = tpu.matmul %107, %383, %cst_160 {dimension_numbers = #tpu.dot_dimension_numbers<[1], [0], [0], [1], [0, 0, 1, 1], [], []>} : vector<64x16xbf16>, vector<16x128xbf16>, vector<64x128xf32> -> vector<64x128xf32>
    %385 = vector.extract_strided_slice %384 {offsets = [0, 0], sizes = [32, 32], strides = [1, 1]} : vector<64x128xf32> to vector<32x32xf32>
    %386 = vector.extract_strided_slice %384 {offsets = [0, 32], sizes = [32, 32], strides = [1, 1]} : vector<64x128xf32> to vector<32x32xf32>
    %387 = vector.extract_strided_slice %384 {offsets = [32, 64], sizes = [32, 32], strides = [1, 1]} : vector<64x128xf32> to vector<32x32xf32>
    %388 = arith.addf %385, %387 : vector<32x32xf32>
    %c4_161 = arith.constant 4 : index
    %c0_162 = arith.constant 0 : index
    %c0_163 = arith.constant 0 : index
    %389 = vector.load %arg18[%c4_161, %c0_162, %c0_163] : memref<6x32x32xf32, #tpu.memory_space<vmem>>, vector<1x32x32xf32>
    %390 = vector.shape_cast %389 : vector<1x32x32xf32> to vector<32x32xf32>
    %391 = arith.truncf %373 : vector<32x32xf32> to vector<32x32xbf16>
    %392 = arith.truncf %390 : vector<32x32xf32> to vector<32x32xbf16>
    %cst_164 = arith.constant dense<0.000000e+00> : vector<32x32xf32>
    %393 = tpu.matmul %391, %392, %cst_164 {dimension_numbers = #tpu.dot_dimension_numbers<[1], [0], [0], [1], [0, 0, 1, 1], [], []>} : vector<32x32xbf16>, vector<32x32xbf16>, vector<32x32xf32> -> vector<32x32xf32>
    %394 = arith.addf %388, %393 : vector<32x32xf32>
    %c4_165 = arith.constant 4 : index
    %c0_166 = arith.constant 0 : index
    %c0_167 = arith.constant 0 : index
    %395 = vector.load %arg19[%c4_165, %c0_166, %c0_167] : memref<6x1x32xf32, #tpu.memory_space<vmem>>, vector<1x1x32xf32>
    %396 = vector.shape_cast %395 : vector<1x1x32xf32> to vector<1x32xf32>
    %397 = vector.broadcast %396 : vector<1x32xf32> to vector<32x32xf32>
    %398 = arith.addf %394, %397 : vector<32x32xf32>
    %399 = arith.negf %398 : vector<32x32xf32>
    %400 = math.exp %399 : vector<32x32xf32>
    %cst_168 = arith.constant 1.000000e+00 : f32
    %401 = vector.broadcast %cst_168 : f32 to vector<32x32xf32>
    %402 = arith.addf %401, %400 : vector<32x32xf32>
    %403 = arith.divf %401, %402 : vector<32x32xf32>
    %404 = arith.mulf %403, %386 : vector<32x32xf32>
    %405 = arith.truncf %404 : vector<32x32xf32> to vector<32x32xbf16>
    %cst_169 = arith.constant dense<0.000000e+00> : vector<16x32xf32>
    %406 = tpu.matmul %108, %405, %cst_169 {dimension_numbers = #tpu.dot_dimension_numbers<[1], [0], [0], [1], [0, 0, 1, 1], [], []>} : vector<16x32xbf16>, vector<32x32xbf16>, vector<16x32xf32> -> vector<16x32xf32>
    %407 = arith.truncf %403 : vector<32x32xf32> to vector<32x32xbf16>
    %cst_170 = arith.constant dense<0.000000e+00> : vector<16x32xf32>
    %408 = tpu.matmul %108, %407, %cst_170 {dimension_numbers = #tpu.dot_dimension_numbers<[1], [0], [0], [1], [0, 0, 1, 1], [], []>} : vector<16x32xbf16>, vector<32x32xbf16>, vector<16x32xf32> -> vector<16x32xf32>
    %cst_171 = arith.constant 9.99999997E-7 : f32
    %409 = vector.broadcast %cst_171 : f32 to vector<16x32xf32>
    %410 = arith.addf %408, %409 : vector<16x32xf32>
    %411 = tpu.reciprocal %410 {approx = true} : vector<16x32xf32> -> vector<16x32xf32>
    %412 = arith.mulf %406, %411 : vector<16x32xf32>
    %413 = vector.extract_strided_slice %382 {offsets = [0, 96], sizes = [16, 32], strides = [1, 1]} : vector<16x128xf32> to vector<16x32xf32>
    %414 = arith.addf %413, %412 : vector<16x32xf32>
    %c4_172 = arith.constant 4 : index
    %c0_173 = arith.constant 0 : index
    %c0_174 = arith.constant 0 : index
    %415 = vector.load %arg20[%c4_172, %c0_173, %c0_174] : memref<6x4x32xf32, #tpu.memory_space<vmem>>, vector<1x4x32xf32>
    %416 = vector.shape_cast %415 : vector<1x4x32xf32> to vector<4x32xf32>
    %417 = vector.extract_strided_slice %416 {offsets = [0, 0], sizes = [1, 32], strides = [1, 1]} : vector<4x32xf32> to vector<1x32xf32>
    %418 = vector.broadcast %417 : vector<1x32xf32> to vector<16x32xf32>
    %419 = arith.mulf %414, %418 : vector<16x32xf32>
    %420 = vector.extract_strided_slice %416 {offsets = [1, 0], sizes = [1, 32], strides = [1, 1]} : vector<4x32xf32> to vector<1x32xf32>
    %421 = vector.broadcast %420 : vector<1x32xf32> to vector<16x32xf32>
    %422 = arith.addf %419, %421 : vector<16x32xf32>
    %423 = arith.negf %422 : vector<16x32xf32>
    %424 = math.exp %423 : vector<16x32xf32>
    %cst_175 = arith.constant 1.000000e+00 : f32
    %425 = vector.broadcast %cst_175 : f32 to vector<16x32xf32>
    %426 = arith.addf %425, %424 : vector<16x32xf32>
    %427 = arith.divf %425, %426 : vector<16x32xf32>
    %428 = arith.mulf %422, %427 : vector<16x32xf32>
    %429 = arith.addf %304, %428 : vector<16x32xf32>
    %430 = vector.extract_strided_slice %416 {offsets = [2, 0], sizes = [1, 32], strides = [1, 1]} : vector<4x32xf32> to vector<1x32xf32>
    %431 = vector.broadcast %430 : vector<1x32xf32> to vector<32x32xf32>
    %432 = arith.mulf %398, %431 : vector<32x32xf32>
    %433 = vector.extract_strided_slice %416 {offsets = [3, 0], sizes = [1, 32], strides = [1, 1]} : vector<4x32xf32> to vector<1x32xf32>
    %434 = vector.broadcast %433 : vector<1x32xf32> to vector<32x32xf32>
    %435 = arith.addf %432, %434 : vector<32x32xf32>
    %436 = arith.negf %435 : vector<32x32xf32>
    %437 = math.exp %436 : vector<32x32xf32>
    %cst_176 = arith.constant 1.000000e+00 : f32
    %438 = vector.broadcast %cst_176 : f32 to vector<32x32xf32>
    %439 = arith.addf %438, %437 : vector<32x32xf32>
    %440 = arith.divf %438, %439 : vector<32x32xf32>
    %441 = arith.mulf %435, %440 : vector<32x32xf32>
    %442 = arith.addf %373, %441 : vector<32x32xf32>
    %c5 = arith.constant 5 : index
    %c0_177 = arith.constant 0 : index
    %c0_178 = arith.constant 0 : index
    %443 = vector.load %arg16[%c5, %c0_177, %c0_178] : memref<6x32x128xf32, #tpu.memory_space<vmem>>, vector<1x32x128xf32>
    %444 = vector.shape_cast %443 : vector<1x32x128xf32> to vector<32x128xf32>
    %445 = arith.truncf %429 : vector<16x32xf32> to vector<16x32xbf16>
    %446 = arith.truncf %444 : vector<32x128xf32> to vector<32x128xbf16>
    %cst_179 = arith.constant dense<0.000000e+00> : vector<16x128xf32>
    %447 = tpu.matmul %445, %446, %cst_179 {dimension_numbers = #tpu.dot_dimension_numbers<[1], [0], [0], [1], [0, 0, 1, 1], [], []>} : vector<16x32xbf16>, vector<32x128xbf16>, vector<16x128xf32> -> vector<16x128xf32>
    %c5_180 = arith.constant 5 : index
    %c0_181 = arith.constant 0 : index
    %c0_182 = arith.constant 0 : index
    %448 = vector.load %arg17[%c5_180, %c0_181, %c0_182] : memref<6x1x128xf32, #tpu.memory_space<vmem>>, vector<1x1x128xf32>
    %449 = vector.shape_cast %448 : vector<1x1x128xf32> to vector<1x128xf32>
    %450 = vector.broadcast %449 : vector<1x128xf32> to vector<16x128xf32>
    %451 = arith.addf %447, %450 : vector<16x128xf32>
    %452 = arith.truncf %451 : vector<16x128xf32> to vector<16x128xbf16>
    %cst_183 = arith.constant dense<0.000000e+00> : vector<64x128xf32>
    %453 = tpu.matmul %107, %452, %cst_183 {dimension_numbers = #tpu.dot_dimension_numbers<[1], [0], [0], [1], [0, 0, 1, 1], [], []>} : vector<64x16xbf16>, vector<16x128xbf16>, vector<64x128xf32> -> vector<64x128xf32>
    %454 = vector.extract_strided_slice %453 {offsets = [0, 0], sizes = [32, 32], strides = [1, 1]} : vector<64x128xf32> to vector<32x32xf32>
    %455 = vector.extract_strided_slice %453 {offsets = [0, 32], sizes = [32, 32], strides = [1, 1]} : vector<64x128xf32> to vector<32x32xf32>
    %456 = vector.extract_strided_slice %453 {offsets = [32, 64], sizes = [32, 32], strides = [1, 1]} : vector<64x128xf32> to vector<32x32xf32>
    %457 = arith.addf %454, %456 : vector<32x32xf32>
    %c5_184 = arith.constant 5 : index
    %c0_185 = arith.constant 0 : index
    %c0_186 = arith.constant 0 : index
    %458 = vector.load %arg18[%c5_184, %c0_185, %c0_186] : memref<6x32x32xf32, #tpu.memory_space<vmem>>, vector<1x32x32xf32>
    %459 = vector.shape_cast %458 : vector<1x32x32xf32> to vector<32x32xf32>
    %460 = arith.truncf %442 : vector<32x32xf32> to vector<32x32xbf16>
    %461 = arith.truncf %459 : vector<32x32xf32> to vector<32x32xbf16>
    %cst_187 = arith.constant dense<0.000000e+00> : vector<32x32xf32>
    %462 = tpu.matmul %460, %461, %cst_187 {dimension_numbers = #tpu.dot_dimension_numbers<[1], [0], [0], [1], [0, 0, 1, 1], [], []>} : vector<32x32xbf16>, vector<32x32xbf16>, vector<32x32xf32> -> vector<32x32xf32>
    %463 = arith.addf %457, %462 : vector<32x32xf32>
    %c5_188 = arith.constant 5 : index
    %c0_189 = arith.constant 0 : index
    %c0_190 = arith.constant 0 : index
    %464 = vector.load %arg19[%c5_188, %c0_189, %c0_190] : memref<6x1x32xf32, #tpu.memory_space<vmem>>, vector<1x1x32xf32>
    %465 = vector.shape_cast %464 : vector<1x1x32xf32> to vector<1x32xf32>
    %466 = vector.broadcast %465 : vector<1x32xf32> to vector<32x32xf32>
    %467 = arith.addf %463, %466 : vector<32x32xf32>
    %468 = arith.negf %467 : vector<32x32xf32>
    %469 = math.exp %468 : vector<32x32xf32>
    %cst_191 = arith.constant 1.000000e+00 : f32
    %470 = vector.broadcast %cst_191 : f32 to vector<32x32xf32>
    %471 = arith.addf %470, %469 : vector<32x32xf32>
    %472 = arith.divf %470, %471 : vector<32x32xf32>
    %473 = arith.mulf %472, %455 : vector<32x32xf32>
    %474 = arith.truncf %473 : vector<32x32xf32> to vector<32x32xbf16>
    %cst_192 = arith.constant dense<0.000000e+00> : vector<16x32xf32>
    %475 = tpu.matmul %108, %474, %cst_192 {dimension_numbers = #tpu.dot_dimension_numbers<[1], [0], [0], [1], [0, 0, 1, 1], [], []>} : vector<16x32xbf16>, vector<32x32xbf16>, vector<16x32xf32> -> vector<16x32xf32>
    %476 = arith.truncf %472 : vector<32x32xf32> to vector<32x32xbf16>
    %cst_193 = arith.constant dense<0.000000e+00> : vector<16x32xf32>
    %477 = tpu.matmul %108, %476, %cst_193 {dimension_numbers = #tpu.dot_dimension_numbers<[1], [0], [0], [1], [0, 0, 1, 1], [], []>} : vector<16x32xbf16>, vector<32x32xbf16>, vector<16x32xf32> -> vector<16x32xf32>
    %cst_194 = arith.constant 9.99999997E-7 : f32
    %478 = vector.broadcast %cst_194 : f32 to vector<16x32xf32>
    %479 = arith.addf %477, %478 : vector<16x32xf32>
    %480 = tpu.reciprocal %479 {approx = true} : vector<16x32xf32> -> vector<16x32xf32>
    %481 = arith.mulf %475, %480 : vector<16x32xf32>
    %482 = vector.extract_strided_slice %451 {offsets = [0, 96], sizes = [16, 32], strides = [1, 1]} : vector<16x128xf32> to vector<16x32xf32>
    %483 = arith.addf %482, %481 : vector<16x32xf32>
    %c5_195 = arith.constant 5 : index
    %c0_196 = arith.constant 0 : index
    %c0_197 = arith.constant 0 : index
    %484 = vector.load %arg20[%c5_195, %c0_196, %c0_197] : memref<6x4x32xf32, #tpu.memory_space<vmem>>, vector<1x4x32xf32>
    %485 = vector.shape_cast %484 : vector<1x4x32xf32> to vector<4x32xf32>
    %486 = vector.extract_strided_slice %485 {offsets = [0, 0], sizes = [1, 32], strides = [1, 1]} : vector<4x32xf32> to vector<1x32xf32>
    %487 = vector.broadcast %486 : vector<1x32xf32> to vector<16x32xf32>
    %488 = arith.mulf %483, %487 : vector<16x32xf32>
    %489 = vector.extract_strided_slice %485 {offsets = [1, 0], sizes = [1, 32], strides = [1, 1]} : vector<4x32xf32> to vector<1x32xf32>
    %490 = vector.broadcast %489 : vector<1x32xf32> to vector<16x32xf32>
    %491 = arith.addf %488, %490 : vector<16x32xf32>
    %492 = arith.negf %491 : vector<16x32xf32>
    %493 = math.exp %492 : vector<16x32xf32>
    %cst_198 = arith.constant 1.000000e+00 : f32
    %494 = vector.broadcast %cst_198 : f32 to vector<16x32xf32>
    %495 = arith.addf %494, %493 : vector<16x32xf32>
    %496 = arith.divf %494, %495 : vector<16x32xf32>
    %497 = arith.mulf %491, %496 : vector<16x32xf32>
    %498 = arith.addf %429, %497 : vector<16x32xf32>
    %499 = arith.index_cast %arg0 : i32 to index
    %500 = memref.load %arg1[%499] : memref<8xf32, #tpu.memory_space<smem>>
    %501 = vector.broadcast %7 : vector<16x1xf32> to vector<16x32xf32>
    %502 = arith.mulf %498, %501 : vector<16x32xf32>
    %cst_199 = arith.constant dense<0.000000e+00> : vector<32xf32>
    %503 = vector.multi_reduction <add>, %502, %cst_199 [0] : vector<16x32xf32> to vector<32xf32>
    %504 = vector.shape_cast %503 : vector<32xf32> to vector<1x32xf32>
    %505 = vector.broadcast %500 : f32 to vector<1x32xf32>
    %506 = arith.mulf %504, %505 : vector<1x32xf32>
    %c0_200 = arith.constant 0 : index
    %c0_201 = arith.constant 0 : index
    %507 = vector.load %arg21[%c0_200, %c0_201] : memref<32x128xf32, #tpu.memory_space<vmem>>, vector<32x128xf32>
    %cst_202 = arith.constant dense<0.000000e+00> : vector<1x128xf32>
    %508 = tpu.matmul %506, %507, %cst_202 {dimension_numbers = #tpu.dot_dimension_numbers<[1], [0], [0], [1], [0, 0, 1, 1], [], []>} : vector<1x32xf32>, vector<32x128xf32>, vector<1x128xf32> -> vector<1x128xf32>
    %c0_203 = arith.constant 0 : index
    %c0_204 = arith.constant 0 : index
    %509 = vector.load %arg22[%c0_203, %c0_204] : memref<1x128xf32, #tpu.memory_space<vmem>>, vector<1x128xf32>
    %510 = arith.addf %508, %509 : vector<1x128xf32>
    %cst_205 = arith.constant dense<0xFF800000> : vector<1xf32>
    %511 = vector.multi_reduction <maximumf>, %510, %cst_205 [1] : vector<1x128xf32> to vector<1xf32>
    %512 = vector.shape_cast %511 : vector<1xf32> to vector<1x1xf32>
    %513 = vector.broadcast %512 : vector<1x1xf32> to vector<1x128xf32>
    %514 = arith.subf %510, %513 : vector<1x128xf32>
    %515 = math.exp %514 : vector<1x128xf32>
    %cst_206 = arith.constant dense<0.000000e+00> : vector<1xf32>
    %516 = vector.multi_reduction <add>, %515, %cst_206 [1] : vector<1x128xf32> to vector<1xf32>
    %517 = vector.shape_cast %516 : vector<1xf32> to vector<1x1xf32>
    %518 = math.log %517 : vector<1x1xf32>
    %519 = arith.addf %512, %518 : vector<1x1xf32>
    %520 = vector.broadcast %519 : vector<1x1xf32> to vector<1x128xf32>
    %521 = arith.subf %510, %520 : vector<1x128xf32>
    %c0_207 = arith.constant 0 : index
    %c0_208 = arith.constant 0 : index
    %c0_209 = arith.constant 0 : index
    %522 = vector.load %arg23[%c0_207, %c0_208, %c0_209] : memref<1x1x128xf32, #tpu.memory_space<vmem>>, vector<1x1x128xf32>
    %523 = vector.shape_cast %522 : vector<1x1x128xf32> to vector<1x128xf32>
    %524 = vector.shape_cast %521 : vector<1x128xf32> to vector<1x1x128xf32>
    tpu.vector_store %arg23[%c0_207, %c0_208, %c0_209], %524 {strides = array<i32>} : memref<1x1x128xf32, #tpu.memory_space<vmem>>, vector<1x1x128xf32>,
    return
  }
  func.func @transform_0(%arg0: i32) -> i32 {
    %c0_i32 = arith.constant 0 : i32
    %c0_i32_0 = arith.constant 0 : i32
    return %c0_i32 : i32
  }
  func.func @transform_1(%arg0: i32) -> (i32, i32, i32) {
    %c0_i32 = arith.constant 0 : i32
    %c0_i32_0 = arith.constant 0 : i32
    %c0_i32_1 = arith.constant 0 : i32
    return %arg0, %c0_i32, %c0_i32_0 : i32, i32, i32
  }
  func.func @transform_2(%arg0: i32) -> (i32, i32, i32) {
    %c0_i32 = arith.constant 0 : i32
    %c0_i32_0 = arith.constant 0 : i32
    %c0_i32_1 = arith.constant 0 : i32
    return %arg0, %c0_i32, %c0_i32_0 : i32, i32, i32
  }
  func.func @transform_3(%arg0: i32) -> (i32, i32, i32) {
    %c0_i32 = arith.constant 0 : i32
    %c0_i32_0 = arith.constant 0 : i32
    %c0_i32_1 = arith.constant 0 : i32
    return %arg0, %c0_i32, %c0_i32_0 : i32, i32, i32
  }
  func.func @transform_4(%arg0: i32) -> (i32, i32, i32) {
    %c0_i32 = arith.constant 0 : i32
    %c0_i32_0 = arith.constant 0 : i32
    %c0_i32_1 = arith.constant 0 : i32
    return %arg0, %c0_i32, %c0_i32_0 : i32, i32, i32
  }
  func.func @transform_5(%arg0: i32) -> (i32, i32) {
    %c0_i32 = arith.constant 0 : i32
    %c0_i32_0 = arith.constant 0 : i32
    %c0_i32_1 = arith.constant 0 : i32
    return %c0_i32, %c0_i32_0 : i32, i32
  }
  func.func @transform_6(%arg0: i32) -> (i32, i32) {
    %c0_i32 = arith.constant 0 : i32
    %c0_i32_0 = arith.constant 0 : i32
    %c0_i32_1 = arith.constant 0 : i32
    return %c0_i32, %c0_i32_0 : i32, i32
  }
  func.func @transform_7(%arg0: i32) -> (i32, i32) {
    %c0_i32 = arith.constant 0 : i32
    %c0_i32_0 = arith.constant 0 : i32
    %c0_i32_1 = arith.constant 0 : i32
    return %c0_i32, %c0_i32_0 : i32, i32
  }
  func.func @transform_8(%arg0: i32) -> (i32, i32) {
    %c0_i32 = arith.constant 0 : i32
    %c0_i32_0 = arith.constant 0 : i32
    %c0_i32_1 = arith.constant 0 : i32
    return %c0_i32, %c0_i32_0 : i32, i32
  }
  func.func @transform_9(%arg0: i32) -> (i32, i32) {
    %c0_i32 = arith.constant 0 : i32
    %c0_i32_0 = arith.constant 0 : i32
    %c0_i32_1 = arith.constant 0 : i32
    return %c0_i32, %c0_i32_0 : i32, i32
  }
  func.func @transform_10(%arg0: i32) -> (i32, i32) {
    %c0_i32 = arith.constant 0 : i32
    %c0_i32_0 = arith.constant 0 : i32
    %c0_i32_1 = arith.constant 0 : i32
    return %c0_i32, %c0_i32_0 : i32, i32
  }
  func.func @transform_11(%arg0: i32) -> (i32, i32, i32) {
    %c0_i32 = arith.constant 0 : i32
    %c0_i32_0 = arith.constant 0 : i32
    %c0_i32_1 = arith.constant 0 : i32
    %c0_i32_2 = arith.constant 0 : i32
    return %c0_i32, %c0_i32_0, %c0_i32_1 : i32, i32, i32
  }
  func.func @transform_12(%arg0: i32) -> (i32, i32, i32) {
    %c0_i32 = arith.constant 0 : i32
    %c0_i32_0 = arith.constant 0 : i32
    %c0_i32_1 = arith.constant 0 : i32
    %c0_i32_2 = arith.constant 0 : i32
    return %c0_i32, %c0_i32_0, %c0_i32_1 : i32, i32, i32
  }
  func.func @transform_13(%arg0: i32) -> (i32, i32, i32) {
    %c0_i32 = arith.constant 0 : i32
    %c0_i32_0 = arith.constant 0 : i32
    %c0_i32_1 = arith.constant 0 : i32
    %c0_i32_2 = arith.constant 0 : i32
    return %c0_i32, %c0_i32_0, %c0_i32_1 : i32, i32, i32
  }
  func.func @transform_14(%arg0: i32) -> (i32, i32, i32) {
    %c0_i32 = arith.constant 0 : i32
    %c0_i32_0 = arith.constant 0 : i32
    %c0_i32_1 = arith.constant 0 : i32
    %c0_i32_2 = arith.constant 0 : i32
    return %c0_i32, %c0_i32_0, %c0_i32_1 : i32, i32, i32
  }
  func.func @transform_15(%arg0: i32) -> (i32, i32, i32) {
    %c0_i32 = arith.constant 0 : i32
    %c0_i32_0 = arith.constant 0 : i32
    %c0_i32_1 = arith.constant 0 : i32
    %c0_i32_2 = arith.constant 0 : i32
    return %c0_i32, %c0_i32_0, %c0_i32_1 : i32, i32, i32
  }
  func.func @transform_16(%arg0: i32) -> (i32, i32, i32) {
    %c0_i32 = arith.constant 0 : i32
    %c0_i32_0 = arith.constant 0 : i32
    %c0_i32_1 = arith.constant 0 : i32
    %c0_i32_2 = arith.constant 0 : i32
    return %c0_i32, %c0_i32_0, %c0_i32_1 : i32, i32, i32
  }
  func.func @transform_17(%arg0: i32) -> (i32, i32, i32) {
    %c0_i32 = arith.constant 0 : i32
    %c0_i32_0 = arith.constant 0 : i32
    %c0_i32_1 = arith.constant 0 : i32
    %c0_i32_2 = arith.constant 0 : i32
    return %c0_i32, %c0_i32_0, %c0_i32_1 : i32, i32, i32
  }
  func.func @transform_18(%arg0: i32) -> (i32, i32, i32) {
    %c0_i32 = arith.constant 0 : i32
    %c0_i32_0 = arith.constant 0 : i32
    %c0_i32_1 = arith.constant 0 : i32
    %c0_i32_2 = arith.constant 0 : i32
    return %c0_i32, %c0_i32_0, %c0_i32_1 : i32, i32, i32
  }
  func.func @transform_19(%arg0: i32) -> (i32, i32, i32) {
    %c0_i32 = arith.constant 0 : i32
    %c0_i32_0 = arith.constant 0 : i32
    %c0_i32_1 = arith.constant 0 : i32
    %c0_i32_2 = arith.constant 0 : i32
    return %c0_i32, %c0_i32_0, %c0_i32_1 : i32, i32, i32
  }
  func.func @transform_20(%arg0: i32) -> (i32, i32) {
    %c0_i32 = arith.constant 0 : i32
    %c0_i32_0 = arith.constant 0 : i32
    %c0_i32_1 = arith.constant 0 : i32
    return %c0_i32, %c0_i32_0 : i32, i32
  }
  func.func @transform_21(%arg0: i32) -> (i32, i32) {
    %c0_i32 = arith.constant 0 : i32
    %c0_i32_0 = arith.constant 0 : i32
    %c0_i32_1 = arith.constant 0 : i32
    return %c0_i32, %c0_i32_0 : i32, i32
  }
  func.func @transform_22(%arg0: i32) -> (i32, i32, i32) {
    %c0_i32 = arith.constant 0 : i32
    %c0_i32_0 = arith.constant 0 : i32
    %c0_i32_1 = arith.constant 0 : i32
    return %arg0, %c0_i32, %c0_i32_0 : i32, i32, i32
  }
}

</mosaic_0001>

<llo_original>
// kernel: tpu_custom_call.1
$region0: #{tpu_custom_call.1}
  #allocation0 [shape = 'u32[]', space=smem, size = 0x4, offset = 0x4, fixed_abs, tag = 'smem constant byte address 0x4 - core index']
  #allocation1 [shape = 'u32[144,128]{1,0:T(1,128)}', space=vmem, size = 0x12000, scoped, tag = 'internal scratch']
  %s0 = inlined_call_operand.vmem [shape: f32[8], index: 0, kind: input, shape index: {}]
  %s1 = inlined_call_operand.vmem [shape: f32[8,16,16], index: 1, kind: input, shape index: {}]
  %s2 = inlined_call_operand.vmem [shape: f32[8,32,1], index: 2, kind: input, shape index: {}]
  %s3 = inlined_call_operand.vmem [shape: f32[8,48,1], index: 3, kind: input, shape index: {}]
  %s4 = inlined_call_operand.vmem [shape: f32[8,16,1], index: 4, kind: input, shape index: {}]
  %s5 = inlined_call_operand.vmem [shape: bf16[64,16], index: 5, kind: input, shape index: {}]
  %s6 = inlined_call_operand.vmem [shape: bf16[16,32], index: 6, kind: input, shape index: {}]
  %s7 = inlined_call_operand.vmem [shape: bf16[96,32], index: 7, kind: input, shape index: {}]
  %s8 = inlined_call_operand.vmem [shape: bf16[32,48], index: 8, kind: input, shape index: {}]
  %s9 = inlined_call_operand.vmem [shape: f32[16,32], index: 9, kind: input, shape index: {}]
  %s10 = inlined_call_operand.vmem [shape: f32[1,32], index: 10, kind: input, shape index: {}]
  %s11 = inlined_call_operand.vmem [shape: f32[2,16,32], index: 11, kind: input, shape index: {}]
  %s12 = inlined_call_operand.vmem [shape: f32[2,1,32], index: 12, kind: input, shape index: {}]
  %s13 = inlined_call_operand.vmem [shape: f32[2,32,32], index: 13, kind: input, shape index: {}]
  %s14 = inlined_call_operand.vmem [shape: f32[2,1,32], index: 14, kind: input, shape index: {}]
  %s15 = inlined_call_operand.vmem [shape: f32[6,32,128], index: 15, kind: input, shape index: {}]
  %s16 = inlined_call_operand.vmem [shape: f32[6,1,128], index: 16, kind: input, shape index: {}]
  %s17 = inlined_call_operand.vmem [shape: f32[6,32,32], index: 17, kind: input, shape index: {}]
  %s18 = inlined_call_operand.vmem [shape: f32[6,1,32], index: 18, kind: input, shape index: {}]
  %s19 = inlined_call_operand.vmem [shape: f32[6,4,32], index: 19, kind: input, shape index: {}]
  %s20 = inlined_call_operand.vmem [shape: f32[32,128], index: 20, kind: input, shape index: {}]
  %s21 = inlined_call_operand.vmem [shape: f32[1,128], index: 21, kind: input, shape index: {}]
  %s22 = inlined_call_operand.hbm [shape: f32[8,1,128], index: 22, kind: output, shape index: {}]
  %s23 = sld [smem:[#allocation0]]
  $region125: #{tpu_custom_call.1} parent=0
    _
  %s25 = ssub.s32 1, %s23
  %s26 = scalar_select 0, %s25, %s23
  $region1: #{tpu_custom_call.1} parent=0
    #allocation2 [shape = 'u8[512]{0}', space=smem, size = 0x200, scoped, tag = 'input window, operand 0, single buffered']
    #allocation3 [shape = 's32[2]{0}', space=sflag, size = 0x8, scoped, tag = 'scoped memory for tpu_custom_call.1']
    #allocation4 [shape = 's32[2]{0}', space=sflag, size = 0x8, scoped, tag = 'scoped memory for tpu_custom_call.1']
    #allocation5 [shape = 'u8[1024]{0}', space=vmem, size = 0x400, scoped, tag = 'output window, operand 0']
    %27 = vsyncpa [#allocation4], 0
    %28 = vsyncpa [#allocation3], 0
    %s29 = scalar_lea.sflag [#allocation3], 1
    %30 = vsyncpa %s29, 0
    loop: start=0, step=1, limit=10
    $region2: #{tpu_custom_call.1} parent=1 // loop_pre_header
      _
    $region3: #{tpu_custom_call.1} parent=1 // loop_header
      %s32 = sphi 0, %s36
      %p33 = scmp.ge.s32.totalorder %s32, 10
      %s40 = sphi 0, %s40
      %s42 = sphi 0, %s40
      %s43 = sphi 0, %s42
      %s57 = sphi 0, %s43
      %s63 = sphi 0, %s65
      %s66 = sphi 0, %s63
      %s67 = sphi 0, %s66
      %s83 = sphi 0, %s67
      %s89 = sphi 0, %s91
      %s92 = sphi 0, %s89
      %s93 = sphi 0, %s92
      %s109 = sphi 0, %s93
      %s115 = sphi 0, %s117
      %s118 = sphi 0, %s115
      %s119 = sphi 0, %s118
      %s135 = sphi 0, %s119
      %s141 = sphi 0, %s143
      %s144 = sphi 0, %s141
      %s145 = sphi 0, %s144
      %s161 = sphi 0, %s145
      %s165 = sphi 0, %s165
      %s167 = sphi 0, %s165
      %s168 = sphi 0, %s167
      %s182 = sphi 0, %s168
      %s186 = sphi 0, %s186
      %s188 = sphi 0, %s186
      %s189 = sphi 0, %s188
      %s203 = sphi 0, %s189
      %s207 = sphi 0, %s207
      %s209 = sphi 0, %s207
      %s210 = sphi 0, %s209
      %s224 = sphi 0, %s210
      %s228 = sphi 0, %s228
      %s230 = sphi 0, %s228
      %s231 = sphi 0, %s230
      %s245 = sphi 0, %s231
      %s249 = sphi 0, %s249
      %s251 = sphi 0, %s249
      %s252 = sphi 0, %s251
      %s266 = sphi 0, %s252
      %s270 = sphi 0, %s270
      %s272 = sphi 0, %s270
      %s273 = sphi 0, %s272
      %s287 = sphi 0, %s273
      %s291 = sphi 0, %s291
      %s293 = sphi 0, %s291
      %s294 = sphi 0, %s293
      %s308 = sphi 0, %s294
      %s312 = sphi 0, %s312
      %s314 = sphi 0, %s312
      %s315 = sphi 0, %s314
      %s329 = sphi 0, %s315
      %s333 = sphi 0, %s333
      %s335 = sphi 0, %s333
      %s336 = sphi 0, %s335
      %s350 = sphi 0, %s336
      %s354 = sphi 0, %s354
      %s356 = sphi 0, %s354
      %s357 = sphi 0, %s356
      %s371 = sphi 0, %s357
      %s375 = sphi 0, %s375
      %s377 = sphi 0, %s375
      %s378 = sphi 0, %s377
      %s392 = sphi 0, %s378
      %s396 = sphi 0, %s396
      %s398 = sphi 0, %s396
      %s399 = sphi 0, %s398
      %s413 = sphi 0, %s399
      %s417 = sphi 0, %s417
      %s419 = sphi 0, %s417
      %s420 = sphi 0, %s419
      %s434 = sphi 0, %s420
      %s438 = sphi 0, %s438
      %s440 = sphi 0, %s438
      %s441 = sphi 0, %s440
      %s455 = sphi 0, %s441
      %s459 = sphi 0, %s459
      %s461 = sphi 0, %s459
      %s462 = sphi 0, %s461
      %s476 = sphi 0, %s462
      %s480 = sphi 0, %s480
      %s482 = sphi 0, %s480
      %s483 = sphi 0, %s482
      %s497 = sphi 0, %s483
      %s501 = sphi 0, %s501
      %s503 = sphi 0, %s501
      %s504 = sphi 0, %s503
      %s518 = sphi 0, %s504
      %s524 = sphi 0, %s526
      %s527 = sphi 0, %s524
      %s528 = sphi 0, %s527
      %s544 = sphi 0, %s528
    $region4: #{tpu_custom_call.1} parent=1 // loop_header_branch
      %35 = sbr.rel (%p33) target = $region8
    $region5: #{tpu_custom_call.1} parent=1 // loop_body
      %s37 = ssub.s32 %s32, 1
      %s38 = ssub.s32 %s32, 2
      %s39 = sadd.s32 %s32, 1
      %s41 = sadd.s32 %s40, 1
      %p44 = scmp.eq.s32.totalorder %s32, 7
      %p45 = scmp.ne.s32.totalorder %s40, %s42
      %p46 = scmp.eq.s32.totalorder %s32, 0
      %p47 = por %p45, %p46
      %p48 = scmp.ne.s32.totalorder %s40, %s42
      %p49 = scmp.eq.s32.totalorder %s37, 7
      %p50 = por %p48, %p49
      %p51 = scmp.ne.s32.totalorder %s42, %s43
      %p52 = scmp.eq.s32.totalorder %s37, 0
      %p53 = por %p51, %p52
      %p54 = scmp.ne.s32.totalorder %s42, %s43
      %p55 = scmp.eq.s32.totalorder %s38, 7
      %p56 = por %p54, %p55
      %p58 = scmp.ne.s32.totalorder %s43, %s57
      %p59 = scmp.eq.s32.totalorder %s38, 0
      %p60 = por %p58, %p59
      %s61 = ssub.s32 %s32, %s39
      %p62 = scmp.eq.s32.totalorder %s61, 0
      %s64 = sadd.s32 %s63, 1
      %s65 = scalar_select %p62, %s63, %s64
      %p68 = pneg %p62
      %p69 = scmp.eq.s32.totalorder %s32, 7
      %p70 = por %p68, %p69
      %p71 = scmp.ne.s32.totalorder %s63, %s66
      %p72 = scmp.eq.s32.totalorder %s32, 0
      %p73 = por %p71, %p72
      %p74 = scmp.ne.s32.totalorder %s63, %s66
      %p75 = scmp.eq.s32.totalorder %s37, 7
      %p76 = por %p74, %p75
      %p77 = scmp.ne.s32.totalorder %s66, %s67
      %p78 = scmp.eq.s32.totalorder %s37, 0
      %p79 = por %p77, %p78
      %p80 = scmp.ne.s32.totalorder %s66, %s67
      %p81 = scmp.eq.s32.totalorder %s38, 7
      %p82 = por %p80, %p81
      %p84 = scmp.ne.s32.totalorder %s67, %s83
      %p85 = scmp.eq.s32.totalorder %s38, 0
      %p86 = por %p84, %p85
      %s87 = ssub.s32 %s32, %s39
      %p88 = scmp.eq.s32.totalorder %s87, 0
      %s90 = sadd.s32 %s89, 1
      %s91 = scalar_select %p88, %s89, %s90
      %p94 = pneg %p88
      %p95 = scmp.eq.s32.totalorder %s32, 7
      %p96 = por %p94, %p95
      %p97 = scmp.ne.s32.totalorder %s89, %s92
      %p98 = scmp.eq.s32.totalorder %s32, 0
      %p99 = por %p97, %p98
      %p100 = scmp.ne.s32.totalorder %s89, %s92
      %p101 = scmp.eq.s32.totalorder %s37, 7
      %p102 = por %p100, %p101
      %p103 = scmp.ne.s32.totalorder %s92, %s93
      %p104 = scmp.eq.s32.totalorder %s37, 0
      %p105 = por %p103, %p104
      %p106 = scmp.ne.s32.totalorder %s92, %s93
      %p107 = scmp.eq.s32.totalorder %s38, 7
      %p108 = por %p106, %p107
      %p110 = scmp.ne.s32.totalorder %s93, %s109
      %p111 = scmp.eq.s32.totalorder %s38, 0
      %p112 = por %p110, %p111
      %s113 = ssub.s32 %s32, %s39
      %p114 = scmp.eq.s32.totalorder %s113, 0
      %s116 = sadd.s32 %s115, 1
      %s117 = scalar_select %p114, %s115, %s116
      %p120 = pneg %p114
      %p121 = scmp.eq.s32.totalorder %s32, 7
      %p122 = por %p120, %p121
      %p123 = scmp.ne.s32.totalorder %s115, %s118
      %p124 = scmp.eq.s32.totalorder %s32, 0
      %p125 = por %p123, %p124
      %p126 = scmp.ne.s32.totalorder %s115, %s118
      %p127 = scmp.eq.s32.totalorder %s37, 7
      %p128 = por %p126, %p127
      %p129 = scmp.ne.s32.totalorder %s118, %s119
      %p130 = scmp.eq.s32.totalorder %s37, 0
      %p131 = por %p129, %p130
      %p132 = scmp.ne.s32.totalorder %s118, %s119
      %p133 = scmp.eq.s32.totalorder %s38, 7
      %p134 = por %p132, %p133
      %p136 = scmp.ne.s32.totalorder %s119, %s135
      %p137 = scmp.eq.s32.totalorder %s38, 0
      %p138 = por %p136, %p137
      %s139 = ssub.s32 %s32, %s39
      %p140 = scmp.eq.s32.totalorder %s139, 0
      %s142 = sadd.s32 %s141, 1
      %s143 = scalar_select %p140, %s141, %s142
      %p146 = pneg %p140
      %p147 = scmp.eq.s32.totalorder %s32, 7
      %p148 = por %p146, %p147
      %p149 = scmp.ne.s32.totalorder %s141, %s144
      %p150 = scmp.eq.s32.totalorder %s32, 0
      %p151 = por %p149, %p150
      %p152 = scmp.ne.s32.totalorder %s141, %s144
      %p153 = scmp.eq.s32.totalorder %s37, 7
      %p154 = por %p152, %p153
      %p155 = scmp.ne.s32.totalorder %s144, %s145
      %p156 = scmp.eq.s32.totalorder %s37, 0
      %p157 = por %p155, %p156
      %p158 = scmp.ne.s32.totalorder %s144, %s145
      %p159 = scmp.eq.s32.totalorder %s38, 7
      %p160 = por %p158, %p159
      %p162 = scmp.ne.s32.totalorder %s145, %s161
      %p163 = scmp.eq.s32.totalorder %s38, 0
      %p164 = por %p162, %p163
      %s166 = sadd.s32 %s165, 1
      %p169 = scmp.eq.s32.totalorder %s32, 7
      %p170 = scmp.ne.s32.totalorder %s165, %s167
      %p171 = scmp.eq.s32.totalorder %s32, 0
      %p172 = por %p170, %p171
      %p173 = scmp.ne.s32.totalorder %s165, %s167
      %p174 = scmp.eq.s32.totalorder %s37, 7
      %p175 = por %p173, %p174
      %p176 = scmp.ne.s32.totalorder %s167, %s168
      %p177 = scmp.eq.s32.totalorder %s37, 0
      %p178 = por %p176, %p177
      %p179 = scmp.ne.s32.totalorder %s167, %s168
      %p180 = scmp.eq.s32.totalorder %s38, 7
      %p181 = por %p179, %p180
      %p183 = scmp.ne.s32.totalorder %s168, %s182
      %p184 = scmp.eq.s32.totalorder %s38, 0
      %p185 = por %p183, %p184
      %s187 = sadd.s32 %s186, 1
      %p190 = scmp.eq.s32.totalorder %s32, 7
      %p191 = scmp.ne.s32.totalorder %s186, %s188
      %p192 = scmp.eq.s32.totalorder %s32, 0
      %p193 = por %p191, %p192
      %p194 = scmp.ne.s32.totalorder %s186, %s188
      %p195 = scmp.eq.s32.totalorder %s37, 7
      %p196 = por %p194, %p195
      %p197 = scmp.ne.s32.totalorder %s188, %s189
      %p198 = scmp.eq.s32.totalorder %s37, 0
      %p199 = por %p197, %p198
      %p200 = scmp.ne.s32.totalorder %s188, %s189
      %p201 = scmp.eq.s32.totalorder %s38, 7
      %p202 = por %p200, %p201
      %p204 = scmp.ne.s32.totalorder %s189, %s203
      %p205 = scmp.eq.s32.totalorder %s38, 0
      %p206 = por %p204, %p205
      %s208 = sadd.s32 %s207, 1
      %p211 = scmp.eq.s32.totalorder %s32, 7
      %p212 = scmp.ne.s32.totalorder %s207, %s209
      %p213 = scmp.eq.s32.totalorder %s32, 0
      %p214 = por %p212, %p213
      %p215 = scmp.ne.s32.totalorder %s207, %s209
      %p216 = scmp.eq.s32.totalorder %s37, 7
      %p217 = por %p215, %p216
      %p218 = scmp.ne.s32.totalorder %s209, %s210
      %p219 = scmp.eq.s32.totalorder %s37, 0
      %p220 = por %p218, %p219
      %p221 = scmp.ne.s32.totalorder %s209, %s210
      %p222 = scmp.eq.s32.totalorder %s38, 7
      %p223 = por %p221, %p222
      %p225 = scmp.ne.s32.totalorder %s210, %s224
      %p226 = scmp.eq.s32.totalorder %s38, 0
      %p227 = por %p225, %p226
      %s229 = sadd.s32 %s228, 1
      %p232 = scmp.eq.s32.totalorder %s32, 7
      %p233 = scmp.ne.s32.totalorder %s228, %s230
      %p234 = scmp.eq.s32.totalorder %s32, 0
      %p235 = por %p233, %p234
      %p236 = scmp.ne.s32.totalorder %s228, %s230
      %p237 = scmp.eq.s32.totalorder %s37, 7
      %p238 = por %p236, %p237
      %p239 = scmp.ne.s32.totalorder %s230, %s231
      %p240 = scmp.eq.s32.totalorder %s37, 0
      %p241 = por %p239, %p240
      %p242 = scmp.ne.s32.totalorder %s230, %s231
      %p243 = scmp.eq.s32.totalorder %s38, 7
      %p244 = por %p242, %p243
      %p246 = scmp.ne.s32.totalorder %s231, %s245
      %p247 = scmp.eq.s32.totalorder %s38, 0
      %p248 = por %p246, %p247
      %s250 = sadd.s32 %s249, 1
      %p253 = scmp.eq.s32.totalorder %s32, 7
      %p254 = scmp.ne.s32.totalorder %s249, %s251
      %p255 = scmp.eq.s32.totalorder %s32, 0
      %p256 = por %p254, %p255
      %p257 = scmp.ne.s32.totalorder %s249, %s251
      %p258 = scmp.eq.s32.totalorder %s37, 7
      %p259 = por %p257, %p258
      %p260 = scmp.ne.s32.totalorder %s251, %s252
      %p261 = scmp.eq.s32.totalorder %s37, 0
      %p262 = por %p260, %p261
      %p263 = scmp.ne.s32.totalorder %s251, %s252
      %p264 = scmp.eq.s32.totalorder %s38, 7
      %p265 = por %p263, %p264
      %p267 = scmp.ne.s32.totalorder %s252, %s266
      %p268 = scmp.eq.s32.totalorder %s38, 0
      %p269 = por %p267, %p268
      %s271 = sadd.s32 %s270, 1
      %p274 = scmp.eq.s32.totalorder %s32, 7
      %p275 = scmp.ne.s32.totalorder %s270, %s272
      %p276 = scmp.eq.s32.totalorder %s32, 0
      %p277 = por %p275, %p276
      %p278 = scmp.ne.s32.totalorder %s270, %s272
      %p279 = scmp.eq.s32.totalorder %s37, 7
      %p280 = por %p278, %p279
      %p281 = scmp.ne.s32.totalorder %s272, %s273
      %p282 = scmp.eq.s32.totalorder %s37, 0
      %p283 = por %p281, %p282
      %p284 = scmp.ne.s32.totalorder %s272, %s273
      %p285 = scmp.eq.s32.totalorder %s38, 7
      %p286 = por %p284, %p285
      %p288 = scmp.ne.s32.totalorder %s273, %s287
      %p289 = scmp.eq.s32.totalorder %s38, 0
      %p290 = por %p288, %p289
      %s292 = sadd.s32 %s291, 1
      %p295 = scmp.eq.s32.totalorder %s32, 7
      %p296 = scmp.ne.s32.totalorder %s291, %s293
      %p297 = scmp.eq.s32.totalorder %s32, 0
      %p298 = por %p296, %p297
      %p299 = scmp.ne.s32.totalorder %s291, %s293
      %p300 = scmp.eq.s32.totalorder %s37, 7
      %p301 = por %p299, %p300
      %p302 = scmp.ne.s32.totalorder %s293, %s294
      %p303 = scmp.eq.s32.totalorder %s37, 0
      %p304 = por %p302, %p303
      %p305 = scmp.ne.s32.totalorder %s293, %s294
      %p306 = scmp.eq.s32.totalorder %s38, 7
      %p307 = por %p305, %p306
      %p309 = scmp.ne.s32.totalorder %s294, %s308
      %p310 = scmp.eq.s32.totalorder %s38, 0
      %p311 = por %p309, %p310
      %s313 = sadd.s32 %s312, 1
      %p316 = scmp.eq.s32.totalorder %s32, 7
      %p317 = scmp.ne.s32.totalorder %s312, %s314
      %p318 = scmp.eq.s32.totalorder %s32, 0
      %p319 = por %p317, %p318
      %p320 = scmp.ne.s32.totalorder %s312, %s314
      %p321 = scmp.eq.s32.totalorder %s37, 7
      %p322 = por %p320, %p321
      %p323 = scmp.ne.s32.totalorder %s314, %s315
      %p324 = scmp.eq.s32.totalorder %s37, 0
      %p325 = por %p323, %p324
      %p326 = scmp.ne.s32.totalorder %s314, %s315
      %p327 = scmp.eq.s32.totalorder %s38, 7
      %p328 = por %p326, %p327
      %p330 = scmp.ne.s32.totalorder %s315, %s329
      %p331 = scmp.eq.s32.totalorder %s38, 0
      %p332 = por %p330, %p331
      %s334 = sadd.s32 %s333, 1
      %p337 = scmp.eq.s32.totalorder %s32, 7
      %p338 = scmp.ne.s32.totalorder %s333, %s335
      %p339 = scmp.eq.s32.totalorder %s32, 0
      %p340 = por %p338, %p339
      %p341 = scmp.ne.s32.totalorder %s333, %s335
      %p342 = scmp.eq.s32.totalorder %s37, 7
      %p343 = por %p341, %p342
      %p344 = scmp.ne.s32.totalorder %s335, %s336
      %p345 = scmp.eq.s32.totalorder %s37, 0
      %p346 = por %p344, %p345
      %p347 = scmp.ne.s32.totalorder %s335, %s336
      %p348 = scmp.eq.s32.totalorder %s38, 7
      %p349 = por %p347, %p348
      %p351 = scmp.ne.s32.totalorder %s336, %s350
      %p352 = scmp.eq.s32.totalorder %s38, 0
      %p353 = por %p351, %p352
      %s355 = sadd.s32 %s354, 1
      %p358 = scmp.eq.s32.totalorder %s32, 7
      %p359 = scmp.ne.s32.totalorder %s354, %s356
      %p360 = scmp.eq.s32.totalorder %s32, 0
      %p361 = por %p359, %p360
      %p362 = scmp.ne.s32.totalorder %s354, %s356
      %p363 = scmp.eq.s32.totalorder %s37, 7
      %p364 = por %p362, %p363
      %p365 = scmp.ne.s32.totalorder %s356, %s357
      %p366 = scmp.eq.s32.totalorder %s37, 0
      %p367 = por %p365, %p366
      %p368 = scmp.ne.s32.totalorder %s356, %s357
      %p369 = scmp.eq.s32.totalorder %s38, 7
      %p370 = por %p368, %p369
      %p372 = scmp.ne.s32.totalorder %s357, %s371
      %p373 = scmp.eq.s32.totalorder %s38, 0
      %p374 = por %p372, %p373
      %s376 = sadd.s32 %s375, 1
      %p379 = scmp.eq.s32.totalorder %s32, 7
      %p380 = scmp.ne.s32.totalorder %s375, %s377
      %p381 = scmp.eq.s32.totalorder %s32, 0
      %p382 = por %p380, %p381
      %p383 = scmp.ne.s32.totalorder %s375, %s377
      %p384 = scmp.eq.s32.totalorder %s37, 7
      %p385 = por %p383, %p384
      %p386 = scmp.ne.s32.totalorder %s377, %s378
      %p387 = scmp.eq.s32.totalorder %s37, 0
      %p388 = por %p386, %p387
      %p389 = scmp.ne.s32.totalorder %s377, %s378
      %p390 = scmp.eq.s32.totalorder %s38, 7
      %p391 = por %p389, %p390
      %p393 = scmp.ne.s32.totalorder %s378, %s392
      %p394 = scmp.eq.s32.totalorder %s38, 0
      %p395 = por %p393, %p394
      %s397 = sadd.s32 %s396, 1
      %p400 = scmp.eq.s32.totalorder %s32, 7
      %p401 = scmp.ne.s32.totalorder %s396, %s398
      %p402 = scmp.eq.s32.totalorder %s32, 0
      %p403 = por %p401, %p402
      %p404 = scmp.ne.s32.totalorder %s396, %s398
      %p405 = scmp.eq.s32.totalorder %s37, 7
      %p406 = por %p404, %p405
      %p407 = scmp.ne.s32.totalorder %s398, %s399
      %p408 = scmp.eq.s32.totalorder %s37, 0
      %p409 = por %p407, %p408
      %p410 = scmp.ne.s32.totalorder %s398, %s399
      %p411 = scmp.eq.s32.totalorder %s38, 7
      %p412 = por %p410, %p411
      %p414 = scmp.ne.s32.totalorder %s399, %s413
      %p415 = scmp.eq.s32.totalorder %s38, 0
      %p416 = por %p414, %p415
      %s418 = sadd.s32 %s417, 1
      %p421 = scmp.eq.s32.totalorder %s32, 7
      %p422 = scmp.ne.s32.totalorder %s417, %s419
      %p423 = scmp.eq.s32.totalorder %s32, 0
      %p424 = por %p422, %p423
      %p425 = scmp.ne.s32.totalorder %s417, %s419
      %p426 = scmp.eq.s32.totalorder %s37, 7
      %p427 = por %p425, %p426
      %p428 = scmp.ne.s32.totalorder %s419, %s420
      %p429 = scmp.eq.s32.totalorder %s37, 0
      %p430 = por %p428, %p429
      %p431 = scmp.ne.s32.totalorder %s419, %s420
      %p432 = scmp.eq.s32.totalorder %s38, 7
      %p433 = por %p431, %p432
      %p435 = scmp.ne.s32.totalorder %s420, %s434
      %p436 = scmp.eq.s32.totalorder %s38, 0
      %p437 = por %p435, %p436
      %s439 = sadd.s32 %s438, 1
      %p442 = scmp.eq.s32.totalorder %s32, 7
      %p443 = scmp.ne.s32.totalorder %s438, %s440
      %p444 = scmp.eq.s32.totalorder %s32, 0
      %p445 = por %p443, %p444
      %p446 = scmp.ne.s32.totalorder %s438, %s440
      %p447 = scmp.eq.s32.totalorder %s37, 7
      %p448 = por %p446, %p447
      %p449 = scmp.ne.s32.totalorder %s440, %s441
      %p450 = scmp.eq.s32.totalorder %s37, 0
      %p451 = por %p449, %p450
      %p452 = scmp.ne.s32.totalorder %s440, %s441
      %p453 = scmp.eq.s32.totalorder %s38, 7
      %p454 = por %p452, %p453
      %p456 = scmp.ne.s32.totalorder %s441, %s455
      %p457 = scmp.eq.s32.totalorder %s38, 0
      %p458 = por %p456, %p457
      %s460 = sadd.s32 %s459, 1
      %p463 = scmp.eq.s32.totalorder %s32, 7
      %p464 = scmp.ne.s32.totalorder %s459, %s461
      %p465 = scmp.eq.s32.totalorder %s32, 0
      %p466 = por %p464, %p465
      %p467 = scmp.ne.s32.totalorder %s459, %s461
      %p468 = scmp.eq.s32.totalorder %s37, 7
      %p469 = por %p467, %p468
      %p470 = scmp.ne.s32.totalorder %s461, %s462
      %p471 = scmp.eq.s32.totalorder %s37, 0
      %p472 = por %p470, %p471
      %p473 = scmp.ne.s32.totalorder %s461, %s462
      %p474 = scmp.eq.s32.totalorder %s38, 7
      %p475 = por %p473, %p474
      %p477 = scmp.ne.s32.totalorder %s462, %s476
      %p478 = scmp.eq.s32.totalorder %s38, 0
      %p479 = por %p477, %p478
      %s481 = sadd.s32 %s480, 1
      %p484 = scmp.eq.s32.totalorder %s32, 7
      %p485 = scmp.ne.s32.totalorder %s480, %s482
      %p486 = scmp.eq.s32.totalorder %s32, 0
      %p487 = por %p485, %p486
      %p488 = scmp.ne.s32.totalorder %s480, %s482
      %p489 = scmp.eq.s32.totalorder %s37, 7
      %p490 = por %p488, %p489
      %p491 = scmp.ne.s32.totalorder %s482, %s483
      %p492 = scmp.eq.s32.totalorder %s37, 0
      %p493 = por %p491, %p492
      %p494 = scmp.ne.s32.totalorder %s482, %s483
      %p495 = scmp.eq.s32.totalorder %s38, 7
      %p496 = por %p494, %p495
      %p498 = scmp.ne.s32.totalorder %s483, %s497
      %p499 = scmp.eq.s32.totalorder %s38, 0
      %p500 = por %p498, %p499
      %s502 = sadd.s32 %s501, 1
      %p505 = scmp.eq.s32.totalorder %s32, 7
      %p506 = scmp.ne.s32.totalorder %s501, %s503
      %p507 = scmp.eq.s32.totalorder %s32, 0
      %p508 = por %p506, %p507
      %p509 = scmp.ne.s32.totalorder %s501, %s503
      %p510 = scmp.eq.s32.totalorder %s37, 7
      %p511 = por %p509, %p510
      %p512 = scmp.ne.s32.totalorder %s503, %s504
      %p513 = scmp.eq.s32.totalorder %s37, 0
      %p514 = por %p512, %p513
      %p515 = scmp.ne.s32.totalorder %s503, %s504
      %p516 = scmp.eq.s32.totalorder %s38, 7
      %p517 = por %p515, %p516
      %p519 = scmp.ne.s32.totalorder %s504, %s518
      %p520 = scmp.eq.s32.totalorder %s38, 0
      %p521 = por %p519, %p520
      %s522 = ssub.s32 %s32, %s39
      %p523 = scmp.eq.s32.totalorder %s522, 0
      %s525 = sadd.s32 %s524, 1
      %s526 = scalar_select %p523, %s524, %s525
      %p529 = pneg %p523
      %p530 = scmp.eq.s32.totalorder %s32, 7
      %p531 = por %p529, %p530
      %p532 = scmp.ne.s32.totalorder %s524, %s527
      %p533 = scmp.eq.s32.totalorder %s32, 0
      %p534 = por %p532, %p533
      %p535 = scmp.ne.s32.totalorder %s524, %s527
      %p536 = scmp.eq.s32.totalorder %s37, 7
      %p537 = por %p535, %p536
      %p538 = scmp.ne.s32.totalorder %s527, %s528
      %p539 = scmp.eq.s32.totalorder %s37, 0
      %p540 = por %p538, %p539
      %p541 = scmp.ne.s32.totalorder %s527, %s528
      %p542 = scmp.eq.s32.totalorder %s38, 7
      %p543 = por %p541, %p542
      %p545 = scmp.ne.s32.totalorder %s528, %s544
      %p546 = scmp.eq.s32.totalorder %s38, 0
      %p547 = por %p545, %p546
      %p548 = scmp.le.s32.totalorder 1, %s32
      %p549 = scmp.lt.s32.totalorder %s32, 9
      %p550 = pnand %p548, %p549
      %p551 = pneg %p550
      // Predicated region
      $region9: #{tpu_custom_call.1} parent=5 // pred_check
        _
      $region10: #{tpu_custom_call.1} parent=5 // pred_check_branch
        %553 = sbr.rel (%p550) target = $region12
      $region11: #{tpu_custom_call.1} parent=5 // pred_region
        %s554 = ssub.s32 %s32, 1
        // Predicated region
        $region13: #{tpu_custom_call.1} parent=11 // pred_check
          %p555 = pneg %p53
        $region14: #{tpu_custom_call.1} parent=11 // pred_check_branch
          %557 = sbr.rel (%p555) target = $region16
        $region15: #{tpu_custom_call.1} parent=11 // pred_region
          %s559 = ssub.s32 16, 16
          %560 = vsyncadd [#allocation4], %s559
          %s562 = sshll.u32 %s0, 4
          %s563 = int_to_ptr.vmem [resolvable:$true] %s562
          %565 = dma.vmem_to_smem %s563, 16, [#allocation2], [#allocation4]
        $region16: #{tpu_custom_call.1} parent=11 // pred_fallthru
          _
        // Predicated region
        $region17: #{tpu_custom_call.1} parent=11 // pred_check
          %p566 = pneg %p178
        $region18: #{tpu_custom_call.1} parent=11 // pred_check_branch
          %568 = sbr.rel (%p566) target = $region20
        $region19: #{tpu_custom_call.1} parent=11 // pred_region
          _
        $region20: #{tpu_custom_call.1} parent=11 // pred_fallthru
          _
        // Predicated region
        $region21: #{tpu_custom_call.1} parent=11 // pred_check
          %p569 = pneg %p199
        $region22: #{tpu_custom_call.1} parent=11 // pred_check_branch
          %571 = sbr.rel (%p569) target = $region24
        $region23: #{tpu_custom_call.1} parent=11 // pred_region
          _
        $region24: #{tpu_custom_call.1} parent=11 // pred_fallthru
          _
        // Predicated region
        $region25: #{tpu_custom_call.1} parent=11 // pred_check
          %p572 = pneg %p220
        $region26: #{tpu_custom_call.1} parent=11 // pred_check_branch
          %574 = sbr.rel (%p572) target = $region28
        $region27: #{tpu_custom_call.1} parent=11 // pred_region
          _
        $region28: #{tpu_custom_call.1} parent=11 // pred_fallthru
          _
        // Predicated region
        $region29: #{tpu_custom_call.1} parent=11 // pred_check
          %p575 = pneg %p241
        $region30: #{tpu_custom_call.1} parent=11 // pred_check_branch
          %577 = sbr.rel (%p575) target = $region32
        $region31: #{tpu_custom_call.1} parent=11 // pred_region
          _
        $region32: #{tpu_custom_call.1} parent=11 // pred_fallthru
          _
        // Predicated region
        $region33: #{tpu_custom_call.1} parent=11 // pred_check
          %p578 = pneg %p262
        $region34: #{tpu_custom_call.1} parent=11 // pred_check_branch
          %580 = sbr.rel (%p578) target = $region36
        $region35: #{tpu_custom_call.1} parent=11 // pred_region
          _
        $region36: #{tpu_custom_call.1} parent=11 // pred_fallthru
          _
        // Predicated region
        $region37: #{tpu_custom_call.1} parent=11 // pred_check
          %p581 = pneg %p283
        $region38: #{tpu_custom_call.1} parent=11 // pred_check_branch
          %583 = sbr.rel (%p581) target = $region40
        $region39: #{tpu_custom_call.1} parent=11 // pred_region
          _
        $region40: #{tpu_custom_call.1} parent=11 // pred_fallthru
          _
        // Predicated region
        $region41: #{tpu_custom_call.1} parent=11 // pred_check
          %p584 = pneg %p304
        $region42: #{tpu_custom_call.1} parent=11 // pred_check_branch
          %586 = sbr.rel (%p584) target = $region44
        $region43: #{tpu_custom_call.1} parent=11 // pred_region
          _
        $region44: #{tpu_custom_call.1} parent=11 // pred_fallthru
          _
        // Predicated region
        $region45: #{tpu_custom_call.1} parent=11 // pred_check
          %p587 = pneg %p325
        $region46: #{tpu_custom_call.1} parent=11 // pred_check_branch
          %589 = sbr.rel (%p587) target = $region48
        $region47: #{tpu_custom_call.1} parent=11 // pred_region
          _
        $region48: #{tpu_custom_call.1} parent=11 // pred_fallthru
          _
        // Predicated region
        $region49: #{tpu_custom_call.1} parent=11 // pred_check
          %p590 = pneg %p346
        $region50: #{tpu_custom_call.1} parent=11 // pred_check_branch
          %592 = sbr.rel (%p590) target = $region52
        $region51: #{tpu_custom_call.1} parent=11 // pred_region
          _
        $region52: #{tpu_custom_call.1} parent=11 // pred_fallthru
          _
        // Predicated region
        $region53: #{tpu_custom_call.1} parent=11 // pred_check
          %p593 = pneg %p367
        $region54: #{tpu_custom_call.1} parent=11 // pred_check_branch
          %595 = sbr.rel (%p593) target = $region56
        $region55: #{tpu_custom_call.1} parent=11 // pred_region
          _
        $region56: #{tpu_custom_call.1} parent=11 // pred_fallthru
          _
        // Predicated region
        $region57: #{tpu_custom_call.1} parent=11 // pred_check
          %p596 = pneg %p388
        $region58: #{tpu_custom_call.1} parent=11 // pred_check_branch
          %598 = sbr.rel (%p596) target = $region60
        $region59: #{tpu_custom_call.1} parent=11 // pred_region
          _
        $region60: #{tpu_custom_call.1} parent=11 // pred_fallthru
          _
        // Predicated region
        $region61: #{tpu_custom_call.1} parent=11 // pred_check
          %p599 = pneg %p409
        $region62: #{tpu_custom_call.1} parent=11 // pred_check_branch
          %601 = sbr.rel (%p599) target = $region64
        $region63: #{tpu_custom_call.1} parent=11 // pred_region
          _
        $region64: #{tpu_custom_call.1} parent=11 // pred_fallthru
          _
        // Predicated region
        $region65: #{tpu_custom_call.1} parent=11 // pred_check
          %p602 = pneg %p430
        $region66: #{tpu_custom_call.1} parent=11 // pred_check_branch
          %604 = sbr.rel (%p602) target = $region68
        $region67: #{tpu_custom_call.1} parent=11 // pred_region
          _
        $region68: #{tpu_custom_call.1} parent=11 // pred_fallthru
          _
        // Predicated region
        $region69: #{tpu_custom_call.1} parent=11 // pred_check
          %p605 = pneg %p451
        $region70: #{tpu_custom_call.1} parent=11 // pred_check_branch
          %607 = sbr.rel (%p605) target = $region72
        $region71: #{tpu_custom_call.1} parent=11 // pred_region
          _
        $region72: #{tpu_custom_call.1} parent=11 // pred_fallthru
          _
        // Predicated region
        $region73: #{tpu_custom_call.1} parent=11 // pred_check
          %p608 = pneg %p472
        $region74: #{tpu_custom_call.1} parent=11 // pred_check_branch
          %610 = sbr.rel (%p608) target = $region76
        $region75: #{tpu_custom_call.1} parent=11 // pred_region
          _
        $region76: #{tpu_custom_call.1} parent=11 // pred_fallthru
          _
        // Predicated region
        $region77: #{tpu_custom_call.1} parent=11 // pred_check
          %p611 = pneg %p493
        $region78: #{tpu_custom_call.1} parent=11 // pred_check_branch
          %613 = sbr.rel (%p611) target = $region80
        $region79: #{tpu_custom_call.1} parent=11 // pred_region
          _
        $region80: #{tpu_custom_call.1} parent=11 // pred_fallthru
          _
        // Predicated region
        $region81: #{tpu_custom_call.1} parent=11 // pred_check
          %p614 = pneg %p514
        $region82: #{tpu_custom_call.1} parent=11 // pred_check_branch
          %616 = sbr.rel (%p614) target = $region84
        $region83: #{tpu_custom_call.1} parent=11 // pred_region
          _
        $region84: #{tpu_custom_call.1} parent=11 // pred_fallthru
          _
      $region12: #{tpu_custom_call.1} parent=5 // pred_fallthru
        _
      %p617 = scmp.lt.s32.totalorder %s32, 8
      // Predicated region
      $region85: #{tpu_custom_call.1} parent=5 // pred_check
        %p618 = pneg %p617
      $region86: #{tpu_custom_call.1} parent=5 // pred_check_branch
        %620 = sbr.rel (%p618) target = $region88
      $region87: #{tpu_custom_call.1} parent=5 // pred_region
        // Predicated region
        $region89: #{tpu_custom_call.1} parent=87 // pred_check
          %p621 = pneg %p73
        $region90: #{tpu_custom_call.1} parent=87 // pred_check_branch
          %623 = sbr.rel (%p621) target = $region92
        $region91: #{tpu_custom_call.1} parent=87 // pred_region
          %p624 = scmp.lt.s32.totalorder %s32, 7
          %s625 = scalar_select %p624, %s32, 7
          %s626 = smul.addr %s625, 2
          %s627 = smul.addr %s626, 8
          %s628 = scalar_lea.vmem %s1, %s627
        $region92: #{tpu_custom_call.1} parent=87 // pred_fallthru
          _
        // Predicated region
        $region93: #{tpu_custom_call.1} parent=87 // pred_check
          %p629 = pneg %p99
        $region94: #{tpu_custom_call.1} parent=87 // pred_check_branch
          %631 = sbr.rel (%p629) target = $region96
        $region95: #{tpu_custom_call.1} parent=87 // pred_region
          %p632 = scmp.lt.s32.totalorder %s32, 7
          %s633 = scalar_select %p632, %s32, 7
          %s634 = smul.addr %s633, 4
          %s635 = smul.addr %s634, 8
          %s636 = scalar_lea.vmem %s2, %s635
        $region96: #{tpu_custom_call.1} parent=87 // pred_fallthru
          _
        // Predicated region
        $region97: #{tpu_custom_call.1} parent=87 // pred_check
          %p637 = pneg %p125
        $region98: #{tpu_custom_call.1} parent=87 // pred_check_branch
          %639 = sbr.rel (%p637) target = $region100
        $region99: #{tpu_custom_call.1} parent=87 // pred_region
          %p640 = scmp.lt.s32.totalorder %s32, 7
          %s641 = scalar_select %p640, %s32, 7
          %s642 = smul.addr %s641, 6
          %s643 = smul.addr %s642, 8
          %s644 = scalar_lea.vmem %s3, %s643
        $region100: #{tpu_custom_call.1} parent=87 // pred_fallthru
          _
        // Predicated region
        $region101: #{tpu_custom_call.1} parent=87 // pred_check
          %p645 = pneg %p151
        $region102: #{tpu_custom_call.1} parent=87 // pred_check_branch
          %647 = sbr.rel (%p645) target = $region104
        $region103: #{tpu_custom_call.1} parent=87 // pred_region
          %p648 = scmp.lt.s32.totalorder %s32, 7
          %s649 = scalar_select %p648, %s32, 7
          %s650 = smul.addr %s649, 2
          %s651 = smul.addr %s650, 8
          %s652 = scalar_lea.vmem %s4, %s651
        $region104: #{tpu_custom_call.1} parent=87 // pred_fallthru
          _
      $region88: #{tpu_custom_call.1} parent=5 // pred_fallthru
        _
      %p653 = scmp.le.s32.totalorder 1, %s32
      %p654 = scmp.lt.s32.totalorder %s32, 9
      %p655 = pnand %p653, %p654
      %p656 = pneg %p655
      // Predicated region
      $region105: #{tpu_custom_call.1} parent=5 // pred_check
        _
      $region106: #{tpu_custom_call.1} parent=5 // pred_check_branch
        %658 = sbr.rel (%p655) target = $region108
      $region107: #{tpu_custom_call.1} parent=5 // pred_region
        %s659 = ssub.s32 %s32, 1
        // Predicated region
        $region109: #{tpu_custom_call.1} parent=107 // pred_check
          %p660 = pneg %p53
        $region110: #{tpu_custom_call.1} parent=107 // pred_check_branch
          %662 = sbr.rel (%p660) target = $region112
        $region111: #{tpu_custom_call.1} parent=107 // pred_region
          %663 = dma.done [#allocation4], 16
        $region112: #{tpu_custom_call.1} parent=107 // pred_fallthru
          _
        %664 = sfence
        %p665 = pneg %p53
        %p666 = pneg %p50
        %p667 = scmp.lt.s32.totalorder %s37, 7
        %s668 = scalar_select %p667, %s37, 7
        %s669 = smul.addr %s668, 2
        %s670 = smul.addr %s669, 8
        %s671 = scalar_lea.vmem %s1, %s670
        %p672 = pneg %p79
        %p673 = pneg %p76
        %p674 = scmp.lt.s32.totalorder %s37, 7
        %s675 = scalar_select %p674, %s37, 7
        %s676 = smul.addr %s675, 4
        %s677 = smul.addr %s676, 8
        %s678 = scalar_lea.vmem %s2, %s677
        %p679 = pneg %p105
        %p680 = pneg %p102
        %p681 = scmp.lt.s32.totalorder %s37, 7
        %s682 = scalar_select %p681, %s37, 7
        %s683 = smul.addr %s682, 6
        %s684 = smul.addr %s683, 8
        %s685 = scalar_lea.vmem %s3, %s684
        %p686 = pneg %p131
        %p687 = pneg %p128
        %p688 = scmp.lt.s32.totalorder %s37, 7
        %s689 = scalar_select %p688, %s37, 7
        %s690 = smul.addr %s689, 2
        %s691 = smul.addr %s690, 8
        %s692 = scalar_lea.vmem %s4, %s691
        %p693 = pneg %p157
        %p694 = pneg %p154
        %p695 = pneg %p178
        %p696 = pneg %p175
        %p697 = pneg %p199
        %p698 = pneg %p196
        %p699 = pneg %p220
        %p700 = pneg %p217
        %p701 = pneg %p241
        %p702 = pneg %p238
        %p703 = pneg %p262
        %p704 = pneg %p259
        %p705 = pneg %p283
        %p706 = pneg %p280
        %p707 = pneg %p304
        %p708 = pneg %p301
        %p709 = pneg %p325
        %p710 = pneg %p322
        %p711 = pneg %p346
        %p712 = pneg %p343
        %p713 = pneg %p367
        %p714 = pneg %p364
        %p715 = pneg %p388
        %p716 = pneg %p385
        %p717 = pneg %p409
        %p718 = pneg %p406
        %p719 = pneg %p430
        %p720 = pneg %p427
        %p721 = pneg %p451
        %p722 = pneg %p448
        %p723 = pneg %p472
        %p724 = pneg %p469
        %p725 = pneg %p493
        %p726 = pneg %p490
        %p727 = pneg %p514
        %p728 = pneg %p511
        %p729 = pneg %p540
        %p730 = pneg %p537
        %s731 = sand.u32 %s527, 1
        %s732 = scalar_lea.sflag [#allocation3], %s731
        %s733 = sand.u32 %s527, 1
        %s734 = scalar_lea.vmem [#allocation5], %s733
        %p735 = scmp.lt.s32.totalorder %s37, 7
        %s736 = scalar_select %p735, %s37, 7
        %s737 = smul.addr %s736, 2
        %s738 = smul.addr %s737, 8
        %s739 = scalar_lea.vmem %s1, %s738
        %p740 = scmp.lt.s32.totalorder %s37, 7
        %s741 = scalar_select %p740, %s37, 7
        %s742 = smul.addr %s741, 4
        %s743 = smul.addr %s742, 8
        %s744 = scalar_lea.vmem %s2, %s743
        %p745 = scmp.lt.s32.totalorder %s37, 7
        %s746 = scalar_select %p745, %s37, 7
        %s747 = smul.addr %s746, 6
        %s748 = smul.addr %s747, 8
        %s749 = scalar_lea.vmem %s3, %s748
        %p750 = scmp.lt.s32.totalorder %s37, 7
        %s751 = scalar_select %p750, %s37, 7
        %s752 = smul.addr %s751, 2
        %s753 = smul.addr %s752, 8
        %s754 = scalar_lea.vmem %s4, %s753
        %v756 = vld [vmem:[%s739] sm:$0xff]
        %v757 = vld [vmem:[%s739 + $0x8] sm:$0xff]
        %v758 = vld [vmem:[%s744] sm:$0xff]
        %v759 = vld [vmem:[%s744 + $0x8] sm:$0xff]
        %v760 = vld [vmem:[%s744 + $0x10] sm:$0xff]
        %v761 = vld [vmem:[%s744 + $0x18] sm:$0xff]
        %v762 = vld [vmem:[%s749] sm:$0xff]
        %v763 = vld [vmem:[%s749 + $0x8] sm:$0xff]
        %v764 = vld [vmem:[%s749 + $0x10] sm:$0xff]
        %v765 = vld [vmem:[%s749 + $0x18] sm:$0xff]
        %v766 = vld [vmem:[%s749 + $0x20] sm:$0xff]
        %v767 = vld [vmem:[%s749 + $0x28] sm:$0xff]
        %v768 = vld [vmem:[%s754] sm:$0xff]
        %v769 = vld [vmem:[%s754 + $0x8] sm:$0xff]
        %v770 = vld [vmem:[%s9] sm:$0xff]
        %v771 = vld [vmem:[%s9 + $0x8] sm:$0xff]
        %v772 = vpack.c.bf16 %v757, %v756
        %v773 = vpack.c.bf16 %v771, %v770
        %v774 = vld [vmem:[%s10] sm:$0x1]
        %v776 = vlaneseq
        %v777 = vshrl.u32 %v776, 7
        %v778 = vsub.s32 0, %v777
        %v779 = vrot.slane %v774, %v778
        %vm781 = vcmask 130048
        %v783 = vsel %vm781, %v772, 0
        %785 = vmatprep.subr.bf16.mxu0 0
        %786 = vmatpush1.bf16.msra.mxu0 %v773
        %787 = vmatprep.subr.bf16.mxu0 0
        %788 = vmatpush1.bf16.msra.mxu0 0
        %789 = vmatprep.subr.bf16.mxu0 0
        %790 = vmatpush1.bf16.msra.mxu0 0
        %791 = vmatprep.subr.bf16.mxu0 0
        %792 = vmatpush1.bf16.msra.mxu0 0
        %793 = vmatprep.subr.bf16.mxu0 0
        %794 = vmatpush1.bf16.msra.mxu0 0
        %795 = vmatprep.subr.bf16.mxu0 0
        %796 = vmatpush1.bf16.msra.mxu0 0
        %797 = vmatprep.subr.bf16.mxu0 0
        %798 = vmatpush1.bf16.msra.mxu0 0
        %799 = vmatprep.subr.bf16.mxu0 0
        %800 = vmatpush1.bf16.msra.mxu0 0
        %801 = vmatprep.subr.bf16.mxu0 0
        %802 = vmatpush1.bf16.msra.mxu0 0
        %803 = vmatprep.subr.bf16.mxu0 0
        %804 = vmatpush1.bf16.msra.mxu0 0
        %805 = vmatprep.subr.bf16.mxu0 0
        %806 = vmatpush1.bf16.msra.mxu0 0
        %807 = vmatprep.subr.bf16.mxu0 0
        %808 = vmatpush1.bf16.msra.mxu0 0
        %809 = vmatprep.subr.bf16.mxu0 0
        %810 = vmatpush1.bf16.msra.mxu0 0
        %811 = vmatprep.subr.bf16.mxu0 0
        %812 = vmatpush1.bf16.msra.mxu0 0
        %813 = vmatprep.subr.bf16.mxu0 0
        %814 = vmatpush1.bf16.msra.mxu0 0
        %815 = vmatprep.subr.bf16.mxu0 0
        %816 = vmatpush1.bf16.msra.mxu0 0
        %817 = vmatprep.mubr.bf16.mxu0 0
        %818 = vmatmul.mubr.bf16.gmra.mrb[0].mxu0 %v783
        %v819 = vpop.f32.mrb[0].mxu0
        %v820 = vadd.f32 %v779, %v819
        %v821 = vpop.f32.mrb[0].mxu0
        %v822 = vpop.f32.mrb[0].mxu0
        %v823 = vadd.f32 %v779, %v822
        %v824 = vpop.f32.mrb[0].mxu0
        %825 = vdwg.mxu0
        %v826 = vxor.u32 %v820, 2147483648
        %v827 = vxor.u32 %v823, 2147483648
        %v828 = vmul.f32 %v826, 1.442695
        %v829 = vpow.pop %v828
        %v830 = vmul.f32 %v827, 1.442695
        %v831 = vpow.pop %v830
        %v832 = vadd.f32 %v829, 1.0
        %v833 = vadd.f32 %v831, 1.0
        %v834 = vrcp.pop %v832
        %v835 = vmul.f32 1.0, %v834
        %v836 = vrcp.pop %v833
        %v837 = vmul.f32 1.0, %v836
        %v838 = vmul.f32 %v820, %v835
        %v839 = vmul.f32 %v823, %v837
        %v840 = vlaneseq
        %v841 = vand.u32 %v840, 127
        %v842 = vcvt.s32.f32 %v841
        %v843 = vmul.f32 %v842, 0.53333336
        %v844 = vadd.f32 %v843, 0.0
        %846 = vset.pattern.permute.xlu0 0
        %847 = vperm.xlu0 %846, %v758
        %v848 = vpop.permute.xlu0 %847
        %851 = vset.pattern.permute.xlu0 0
        %852 = vperm.xlu0 %851, %v759
        %v853 = vpop.permute.xlu0 %852
        %856 = vset.pattern.permute.xlu0 0
        %857 = vperm.xlu0 %856, %v760
        %v858 = vpop.permute.xlu0 %857
        %861 = vset.pattern.permute.xlu0 0
        %862 = vperm.xlu0 %861, %v761
        %v863 = vpop.permute.xlu0 %862
        %v865 = vsub.f32 %v848, %v844
        %v866 = vsub.f32 %v853, %v844
        %v867 = vsub.f32 %v858, %v844
        %v868 = vsub.f32 %v863, %v844
        %v869 = vmul.f32 %v865, %v865
        %v870 = vmul.f32 %v866, %v866
        %v871 = vmul.f32 %v867, %v867
        %v872 = vmul.f32 %v868, %v868
        %v873 = vmul.f32 %v869, -1.875
        %v874 = vmul.f32 %v870, -1.875
        %v875 = vmul.f32 %v871, -1.875
        %v876 = vmul.f32 %v872, -1.875
        %v877 = vmul.f32 %v873, 1.442695
        %v878 = vpow.pop %v877
        %v879 = vmul.f32 %v874, 1.442695
        %v880 = vpow.pop %v879
        %v881 = vmul.f32 %v875, 1.442695
        %v882 = vpow.pop %v881
        %v883 = vmul.f32 %v876, 1.442695
        %v884 = vpow.pop %v883
        %v885 = vld [vmem:[%s11] sm:$0xff]
        %v886 = vld [vmem:[%s11 + $0x8] sm:$0xff]
        %v887 = vpack.c.bf16 %v880, %v878
        %v888 = vpack.c.bf16 %v884, %v882
        %v889 = vpack.c.bf16 %v886, %v885
        %v890 = vld [vmem:[%s12] sm:$0x1]
        %v892 = vlaneseq
        %v893 = vshrl.u32 %v892, 7
        %v894 = vsub.s32 0, %v893
        %v895 = vrot.slane %v890, %v894
        %v898 = vsel %vm781, %v887, 0
        %v901 = vsel %vm781, %v888, 0
        %903 = vmatprep.subr.bf16.mxu0 0
        %904 = vmatpush1.bf16.msra.mxu0 %v889
        %905 = vmatprep.subr.bf16.mxu0 0
        %906 = vmatpush1.bf16.msra.mxu0 0
        %907 = vmatprep.subr.bf16.mxu0 0
        %908 = vmatpush1.bf16.msra.mxu0 0
        %909 = vmatprep.subr.bf16.mxu0 0
        %910 = vmatpush1.bf16.msra.mxu0 0
        %911 = vmatprep.subr.bf16.mxu0 0
        %912 = vmatpush1.bf16.msra.mxu0 0
        %913 = vmatprep.subr.bf16.mxu0 0
        %914 = vmatpush1.bf16.msra.mxu0 0
        %915 = vmatprep.subr.bf16.mxu0 0
        %916 = vmatpush1.bf16.msra.mxu0 0
        %917 = vmatprep.subr.bf16.mxu0 0
        %918 = vmatpush1.bf16.msra.mxu0 0
        %919 = vmatprep.subr.bf16.mxu0 0
        %920 = vmatpush1.bf16.msra.mxu0 0
        %921 = vmatprep.subr.bf16.mxu0 0
        %922 = vmatpush1.bf16.msra.mxu0 0
        %923 = vmatprep.subr.bf16.mxu0 0
        %924 = vmatpush1.bf16.msra.mxu0 0
        %925 = vmatprep.subr.bf16.mxu0 0
        %926 = vmatpush1.bf16.msra.mxu0 0
        %927 = vmatprep.subr.bf16.mxu0 0
        %928 = vmatpush1.bf16.msra.mxu0 0
        %929 = vmatprep.subr.bf16.mxu0 0
        %930 = vmatpush1.bf16.msra.mxu0 0
        %931 = vmatprep.subr.bf16.mxu0 0
        %932 = vmatpush1.bf16.msra.mxu0 0
        %933 = vmatprep.subr.bf16.mxu0 0
        %934 = vmatpush1.bf16.msra.mxu0 0
        %935 = vmatprep.mubr.bf16.mxu0 0
        %936 = vmatmul.mubr.bf16.gmra.mrb[0].mxu0 %v898
        %v937 = vpop.f32.mrb[0].mxu0
        %v938 = vadd.f32 %v895, %v937
        %v939 = vpop.f32.mrb[0].mxu0
        %v940 = vpop.f32.mrb[0].mxu0
        %v941 = vadd.f32 %v895, %v940
        %v942 = vpop.f32.mrb[0].mxu0
        %943 = vmatprep.mubr.bf16.mxu0 0
        %944 = vmatmul.mubr.bf16.gmra.mrb[0].mxu0 %v901
        %v945 = vpop.f32.mrb[0].mxu0
        %v946 = vadd.f32 %v895, %v945
        %v947 = vpop.f32.mrb[0].mxu0
        %v948 = vpop.f32.mrb[0].mxu0
        %v949 = vadd.f32 %v895, %v948
        %v950 = vpop.f32.mrb[0].mxu0
        %951 = vdwg.mxu0
        %v952 = vxor.u32 %v938, 2147483648
        %v953 = vxor.u32 %v941, 2147483648
        %v954 = vxor.u32 %v946, 2147483648
        %v955 = vxor.u32 %v949, 2147483648
        %v956 = vmul.f32 %v952, 1.442695
        %v957 = vpow.pop %v956
        %v958 = vmul.f32 %v953, 1.442695
        %v959 = vpow.pop %v958
        %v960 = vmul.f32 %v954, 1.442695
        %v961 = vpow.pop %v960
        %v962 = vmul.f32 %v955, 1.442695
        %v963 = vpow.pop %v962
        %v964 = vadd.f32 %v957, 1.0
        %v965 = vadd.f32 %v959, 1.0
        %v966 = vadd.f32 %v961, 1.0
        %v967 = vadd.f32 %v963, 1.0
        %v968 = vrcp.pop %v964
        %v969 = vmul.f32 1.0, %v968
        %v970 = vrcp.pop %v965
        %v971 = vmul.f32 1.0, %v970
        %v972 = vrcp.pop %v966
        %v973 = vmul.f32 1.0, %v972
        %v974 = vrcp.pop %v967
        %v975 = vmul.f32 1.0, %v974
        %v976 = vmul.f32 %v938, %v969
        %v977 = vmul.f32 %v941, %v971
        %v978 = vmul.f32 %v946, %v973
        %v979 = vmul.f32 %v949, %v975
        %v980 = vld [vmem:[%s13] sm:$0xff]
        %v981 = vld [vmem:[%s13 + $0x8] sm:$0xff]
        %v982 = vld [vmem:[%s13 + $0x10] sm:$0xff]
        %v983 = vld [vmem:[%s13 + $0x18] sm:$0xff]
        %v984 = vpack.c.bf16 %v977, %v976
        %v985 = vpack.c.bf16 %v979, %v978
        %v986 = vpack.c.bf16 %v981, %v980
        %v987 = vpack.c.bf16 %v983, %v982
        %v988 = vld [vmem:[%s14] sm:$0x1]
        %v990 = vlaneseq
        %v991 = vshrl.u32 %v990, 7
        %v992 = vsub.s32 0, %v991
        %v993 = vrot.slane %v988, %v992
        %vm995 = vcmask 261120
        %v997 = vsel %vm995, %v984, 0
        %v1000 = vsel %vm995, %v985, 0
        %1002 = vmatprep.subr.bf16.mxu0 0
        %1003 = vmatpush1.bf16.msra.mxu0 %v986
        %1004 = vmatprep.subr.bf16.mxu0 0
        %1005 = vmatpush1.bf16.msra.mxu0 %v987
        %1006 = vmatprep.subr.bf16.mxu0 0
        %1007 = vmatpush1.bf16.msra.mxu0 0
        %1008 = vmatprep.subr.bf16.mxu0 0
        %1009 = vmatpush1.bf16.msra.mxu0 0
        %1010 = vmatprep.subr.bf16.mxu0 0
        %1011 = vmatpush1.bf16.msra.mxu0 0
        %1012 = vmatprep.subr.bf16.mxu0 0
        %1013 = vmatpush1.bf16.msra.mxu0 0
        %1014 = vmatprep.subr.bf16.mxu0 0
        %1015 = vmatpush1.bf16.msra.mxu0 0
        %1016 = vmatprep.subr.bf16.mxu0 0
        %1017 = vmatpush1.bf16.msra.mxu0 0
        %1018 = vmatprep.subr.bf16.mxu0 0
        %1019 = vmatpush1.bf16.msra.mxu0 0
        %1020 = vmatprep.subr.bf16.mxu0 0
        %1021 = vmatpush1.bf16.msra.mxu0 0
        %1022 = vmatprep.subr.bf16.mxu0 0
        %1023 = vmatpush1.bf16.msra.mxu0 0
        %1024 = vmatprep.subr.bf16.mxu0 0
        %1025 = vmatpush1.bf16.msra.mxu0 0
        %1026 = vmatprep.subr.bf16.mxu0 0
        %1027 = vmatpush1.bf16.msra.mxu0 0
        %1028 = vmatprep.subr.bf16.mxu0 0
        %1029 = vmatpush1.bf16.msra.mxu0 0
        %1030 = vmatprep.subr.bf16.mxu0 0
        %1031 = vmatpush1.bf16.msra.mxu0 0
        %1032 = vmatprep.subr.bf16.mxu0 0
        %1033 = vmatpush1.bf16.msra.mxu0 0
        %1034 = vmatprep.mubr.bf16.mxu0 0
        %1035 = vmatmul.mubr.bf16.gmra.mrb[0].mxu0 %v997
        %v1036 = vpop.f32.mrb[0].mxu0
        %v1037 = vadd.f32 %v993, %v1036
        %v1038 = vpop.f32.mrb[0].mxu0
        %v1039 = vpop.f32.mrb[0].mxu0
        %v1040 = vadd.f32 %v993, %v1039
        %v1041 = vpop.f32.mrb[0].mxu0
        %1042 = vmatprep.mubr.bf16.mxu0 0
        %1043 = vmatmul.mubr.bf16.gmra.mrb[0].mxu0 %v1000
        %v1044 = vpop.f32.mrb[0].mxu0
        %v1045 = vadd.f32 %v993, %v1044
        %v1046 = vpop.f32.mrb[0].mxu0
        %v1047 = vpop.f32.mrb[0].mxu0
        %v1048 = vadd.f32 %v993, %v1047
        %v1049 = vpop.f32.mrb[0].mxu0
        %1050 = vdwg.mxu0
        %v1051 = vxor.u32 %v1037, 2147483648
        %v1052 = vxor.u32 %v1040, 2147483648
        %v1053 = vxor.u32 %v1045, 2147483648
        %v1054 = vxor.u32 %v1048, 2147483648
        %v1055 = vmul.f32 %v1051, 1.442695
        %v1056 = vpow.pop %v1055
        %v1057 = vmul.f32 %v1052, 1.442695
        %v1058 = vpow.pop %v1057
        %v1059 = vmul.f32 %v1053, 1.442695
        %v1060 = vpow.pop %v1059
        %v1061 = vmul.f32 %v1054, 1.442695
        %v1062 = vpow.pop %v1061
        %v1063 = vadd.f32 %v1056, 1.0
        %v1064 = vadd.f32 %v1058, 1.0
        %v1065 = vadd.f32 %v1060, 1.0
        %v1066 = vadd.f32 %v1062, 1.0
        %v1067 = vrcp.pop %v1063
        %v1068 = vmul.f32 1.0, %v1067
        %v1069 = vrcp.pop %v1064
        %v1070 = vmul.f32 1.0, %v1069
        %v1071 = vrcp.pop %v1065
        %v1072 = vmul.f32 1.0, %v1071
        %v1073 = vrcp.pop %v1066
        %v1074 = vmul.f32 1.0, %v1073
        %v1075 = vmul.f32 %v1037, %v1068
        %v1076 = vmul.f32 %v1040, %v1070
        %v1077 = vmul.f32 %v1045, %v1072
        %v1078 = vmul.f32 %v1048, %v1074
        %v1079 = vmul.f32 %v842, 0.13333334
        %v1080 = vadd.f32 %v1079, -1.0
        %1082 = vset.pattern.permute.xlu0 0
        %1083 = vperm.xlu0 %1082, %v762
        %v1084 = vpop.permute.xlu0 %1083
        %1087 = vset.pattern.permute.xlu0 0
        %1088 = vperm.xlu0 %1087, %v763
        %v1089 = vpop.permute.xlu0 %1088
        %1092 = vset.pattern.permute.xlu0 0
        %1093 = vperm.xlu0 %1092, %v764
        %v1094 = vpop.permute.xlu0 %1093
        %1097 = vset.pattern.permute.xlu0 0
        %1098 = vperm.xlu0 %1097, %v765
        %v1099 = vpop.permute.xlu0 %1098
        %1102 = vset.pattern.permute.xlu0 0
        %1103 = vperm.xlu0 %1102, %v766
        %v1104 = vpop.permute.xlu0 %1103
        %1107 = vset.pattern.permute.xlu0 0
        %1108 = vperm.xlu0 %1107, %v767
        %v1109 = vpop.permute.xlu0 %1108
        %v1111 = vsub.f32 %v1084, %v1080
        %v1112 = vsub.f32 %v1089, %v1080
        %v1113 = vsub.f32 %v1094, %v1080
        %v1114 = vsub.f32 %v1099, %v1080
        %v1115 = vsub.f32 %v1104, %v1080
        %v1116 = vsub.f32 %v1109, %v1080
        %v1117 = vmul.f32 %v1111, %v1111
        %v1118 = vmul.f32 %v1112, %v1112
        %v1119 = vmul.f32 %v1113, %v1113
        %v1120 = vmul.f32 %v1114, %v1114
        %v1121 = vmul.f32 %v1115, %v1115
        %v1122 = vmul.f32 %v1116, %v1116
        %v1123 = vmul.f32 %v1117, -7.5
        %v1124 = vmul.f32 %v1118, -7.5
        %v1125 = vmul.f32 %v1119, -7.5
        %v1126 = vmul.f32 %v1120, -7.5
        %v1127 = vmul.f32 %v1121, -7.5
        %v1128 = vmul.f32 %v1122, -7.5
        %v1129 = vmul.f32 %v1123, 1.442695
        %v1130 = vpow.pop %v1129
        %v1131 = vmul.f32 %v1124, 1.442695
        %v1132 = vpow.pop %v1131
        %v1133 = vmul.f32 %v1125, 1.442695
        %v1134 = vpow.pop %v1133
        %v1135 = vmul.f32 %v1126, 1.442695
        %v1136 = vpow.pop %v1135
        %v1137 = vmul.f32 %v1127, 1.442695
        %v1138 = vpow.pop %v1137
        %v1139 = vmul.f32 %v1128, 1.442695
        %v1140 = vpow.pop %v1139
        %s1141 = scalar_lea.vmem %s11, 16
        %v1142 = vld [vmem:[%s1141] sm:$0xff]
        %v1143 = vld [vmem:[%s1141 + $0x8] sm:$0xff]
        %v1144 = vpack.c.bf16 %v1132, %v1130
        %v1145 = vpack.c.bf16 %v1136, %v1134
        %v1146 = vpack.c.bf16 %v1140, %v1138
        %v1147 = vpack.c.bf16 %v1143, %v1142
        %s1148 = scalar_lea.vmem %s12, 1
        %v1149 = vld [vmem:[%s1148] sm:$0x1]
        %v1151 = vlaneseq
        %v1152 = vshrl.u32 %v1151, 7
        %v1153 = vsub.s32 0, %v1152
        %v1154 = vrot.slane %v1149, %v1153
        %v1157 = vsel %vm781, %v1144, 0
        %v1160 = vsel %vm781, %v1145, 0
        %v1163 = vsel %vm781, %v1146, 0
        %1165 = vmatprep.subr.bf16.mxu0 0
        %1166 = vmatpush1.bf16.msra.mxu0 %v1147
        %1167 = vmatprep.subr.bf16.mxu0 0
        %1168 = vmatpush1.bf16.msra.mxu0 0
        %1169 = vmatprep.subr.bf16.mxu0 0
        %1170 = vmatpush1.bf16.msra.mxu0 0
        %1171 = vmatprep.subr.bf16.mxu0 0
        %1172 = vmatpush1.bf16.msra.mxu0 0
        %1173 = vmatprep.subr.bf16.mxu0 0
        %1174 = vmatpush1.bf16.msra.mxu0 0
        %1175 = vmatprep.subr.bf16.mxu0 0
        %1176 = vmatpush1.bf16.msra.mxu0 0
        %1177 = vmatprep.subr.bf16.mxu0 0
        %1178 = vmatpush1.bf16.msra.mxu0 0
        %1179 = vmatprep.subr.bf16.mxu0 0
        %1180 = vmatpush1.bf16.msra.mxu0 0
        %1181 = vmatprep.subr.bf16.mxu0 0
        %1182 = vmatpush1.bf16.msra.mxu0 0
        %1183 = vmatprep.subr.bf16.mxu0 0
        %1184 = vmatpush1.bf16.msra.mxu0 0
        %1185 = vmatprep.subr.bf16.mxu0 0
        %1186 = vmatpush1.bf16.msra.mxu0 0
        %1187 = vmatprep.subr.bf16.mxu0 0
        %1188 = vmatpush1.bf16.msra.mxu0 0
        %1189 = vmatprep.subr.bf16.mxu0 0
        %1190 = vmatpush1.bf16.msra.mxu0 0
        %1191 = vmatprep.subr.bf16.mxu0 0
        %1192 = vmatpush1.bf16.msra.mxu0 0
        %1193 = vmatprep.subr.bf16.mxu0 0
        %1194 = vmatpush1.bf16.msra.mxu0 0
        %1195 = vmatprep.subr.bf16.mxu0 0
        %1196 = vmatpush1.bf16.msra.mxu0 0
        %1197 = vmatprep.mubr.bf16.mxu0 0
        %1198 = vmatmul.mubr.bf16.gmra.mrb[0].mxu0 %v1157
        %v1199 = vpop.f32.mrb[0].mxu0
        %v1200 = vadd.f32 %v1154, %v1199
        %v1201 = vpop.f32.mrb[0].mxu0
        %v1202 = vpop.f32.mrb[0].mxu0
        %v1203 = vadd.f32 %v1154, %v1202
        %v1204 = vpop.f32.mrb[0].mxu0
        %1205 = vmatprep.mubr.bf16.mxu0 0
        %1206 = vmatmul.mubr.bf16.gmra.mrb[0].mxu0 %v1160
        %v1207 = vpop.f32.mrb[0].mxu0
        %v1208 = vadd.f32 %v1154, %v1207
        %v1209 = vpop.f32.mrb[0].mxu0
        %v1210 = vpop.f32.mrb[0].mxu0
        %v1211 = vadd.f32 %v1154, %v1210
        %v1212 = vpop.f32.mrb[0].mxu0
        %1213 = vmatprep.mubr.bf16.mxu0 0
        %1214 = vmatmul.mubr.bf16.gmra.mrb[0].mxu0 %v1163
        %v1215 = vpop.f32.mrb[0].mxu0
        %v1216 = vadd.f32 %v1154, %v1215
        %v1217 = vpop.f32.mrb[0].mxu0
        %v1218 = vpop.f32.mrb[0].mxu0
        %v1219 = vadd.f32 %v1154, %v1218
        %v1220 = vpop.f32.mrb[0].mxu0
        %1221 = vdwg.mxu0
        %v1222 = vxor.u32 %v1200, 2147483648
        %v1223 = vxor.u32 %v1203, 2147483648
        %v1224 = vxor.u32 %v1208, 2147483648
        %v1225 = vxor.u32 %v1211, 2147483648
        %v1226 = vxor.u32 %v1216, 2147483648
        %v1227 = vxor.u32 %v1219, 2147483648
        %v1228 = vmul.f32 %v1222, 1.442695
        %v1229 = vpow.pop %v1228
        %v1230 = vmul.f32 %v1223, 1.442695
        %v1231 = vpow.pop %v1230
        %v1232 = vmul.f32 %v1224, 1.442695
        %v1233 = vpow.pop %v1232
        %v1234 = vmul.f32 %v1225, 1.442695
        %v1235 = vpow.pop %v1234
        %v1236 = vmul.f32 %v1226, 1.442695
        %v1237 = vpow.pop %v1236
        %v1238 = vmul.f32 %v1227, 1.442695
        %v1239 = vpow.pop %v1238
        %v1240 = vadd.f32 %v1229, 1.0
        %v1241 = vadd.f32 %v1231, 1.0
        %v1242 = vadd.f32 %v1233, 1.0
        %v1243 = vadd.f32 %v1235, 1.0
        %v1244 = vadd.f32 %v1237, 1.0
        %v1245 = vadd.f32 %v1239, 1.0
        %v1246 = vrcp.pop %v1240
        %v1247 = vmul.f32 1.0, %v1246
        %v1248 = vrcp.pop %v1241
        %v1249 = vmul.f32 1.0, %v1248
        %v1250 = vrcp.pop %v1242
        %v1251 = vmul.f32 1.0, %v1250
        %v1252 = vrcp.pop %v1243
        %v1253 = vmul.f32 1.0, %v1252
        %v1254 = vrcp.pop %v1244
        %v1255 = vmul.f32 1.0, %v1254
        %v1256 = vrcp.pop %v1245
        %v1257 = vmul.f32 1.0, %v1256
        %v1258 = vmul.f32 %v1200, %v1247
        %v1259 = vmul.f32 %v1203, %v1249
        %v1260 = vmul.f32 %v1208, %v1251
        %v1261 = vmul.f32 %v1211, %v1253
        %v1262 = vmul.f32 %v1216, %v1255
        %v1263 = vmul.f32 %v1219, %v1257
        %s1264 = scalar_lea.vmem %s13, 32
        %v1265 = vld [vmem:[%s1264] sm:$0xff]
        %v1266 = vld [vmem:[%s1264 + $0x8] sm:$0xff]
        %v1267 = vld [vmem:[%s1264 + $0x10] sm:$0xff]
        %v1268 = vld [vmem:[%s1264 + $0x18] sm:$0xff]
        %v1269 = vpack.c.bf16 %v1259, %v1258
        %v1270 = vpack.c.bf16 %v1261, %v1260
        %v1271 = vpack.c.bf16 %v1263, %v1262
        %v1272 = vpack.c.bf16 %v1266, %v1265
        %v1273 = vpack.c.bf16 %v1268, %v1267
        %s1274 = scalar_lea.vmem %s14, 1
        %v1275 = vld [vmem:[%s1274] sm:$0x1]
        %v1277 = vlaneseq
        %v1278 = vshrl.u32 %v1277, 7
        %v1279 = vsub.s32 0, %v1278
        %v1280 = vrot.slane %v1275, %v1279
        %v1283 = vsel %vm995, %v1269, 0
        %v1286 = vsel %vm995, %v1270, 0
        %v1289 = vsel %vm995, %v1271, 0
        %1291 = vmatprep.subr.bf16.mxu0 0
        %1292 = vmatpush1.bf16.msra.mxu0 %v1272
        %1293 = vmatprep.subr.bf16.mxu0 0
        %1294 = vmatpush1.bf16.msra.mxu0 %v1273
        %1295 = vmatprep.subr.bf16.mxu0 0
        %1296 = vmatpush1.bf16.msra.mxu0 0
        %1297 = vmatprep.subr.bf16.mxu0 0
        %1298 = vmatpush1.bf16.msra.mxu0 0
        %1299 = vmatprep.subr.bf16.mxu0 0
        %1300 = vmatpush1.bf16.msra.mxu0 0
        %1301 = vmatprep.subr.bf16.mxu0 0
        %1302 = vmatpush1.bf16.msra.mxu0 0
        %1303 = vmatprep.subr.bf16.mxu0 0
        %1304 = vmatpush1.bf16.msra.mxu0 0
        %1305 = vmatprep.subr.bf16.mxu0 0
        %1306 = vmatpush1.bf16.msra.mxu0 0
        %1307 = vmatprep.subr.bf16.mxu0 0
        %1308 = vmatpush1.bf16.msra.mxu0 0
        %1309 = vmatprep.subr.bf16.mxu0 0
        %1310 = vmatpush1.bf16.msra.mxu0 0
        %1311 = vmatprep.subr.bf16.mxu0 0
        %1312 = vmatpush1.bf16.msra.mxu0 0
        %1313 = vmatprep.subr.bf16.mxu0 0
        %1314 = vmatpush1.bf16.msra.mxu0 0
        %1315 = vmatprep.subr.bf16.mxu0 0
        %1316 = vmatpush1.bf16.msra.mxu0 0
        %1317 = vmatprep.subr.bf16.mxu0 0
        %1318 = vmatpush1.bf16.msra.mxu0 0
        %1319 = vmatprep.subr.bf16.mxu0 0
        %1320 = vmatpush1.bf16.msra.mxu0 0
        %1321 = vmatprep.subr.bf16.mxu0 0
        %1322 = vmatpush1.bf16.msra.mxu0 0
        %1323 = vmatprep.mubr.bf16.mxu0 0
        %1324 = vmatmul.mubr.bf16.gmra.mrb[0].mxu0 %v1283
        %v1325 = vpop.f32.mrb[0].mxu0
        %v1326 = vadd.f32 %v1280, %v1325
        %v1327 = vpop.f32.mrb[0].mxu0
        %v1328 = vpop.f32.mrb[0].mxu0
        %v1329 = vadd.f32 %v1280, %v1328
        %v1330 = vpop.f32.mrb[0].mxu0
        %1331 = vmatprep.mubr.bf16.mxu0 0
        %1332 = vmatmul.mubr.bf16.gmra.mrb[0].mxu0 %v1286
        %v1333 = vpop.f32.mrb[0].mxu0
        %v1334 = vadd.f32 %v1280, %v1333
        %v1335 = vpop.f32.mrb[0].mxu0
        %v1336 = vpop.f32.mrb[0].mxu0
        %v1337 = vadd.f32 %v1280, %v1336
        %v1338 = vpop.f32.mrb[0].mxu0
        %1339 = vmatprep.mubr.bf16.mxu0 0
        %1340 = vmatmul.mubr.bf16.gmra.mrb[0].mxu0 %v1289
        %v1341 = vpop.f32.mrb[0].mxu0
        %v1342 = vadd.f32 %v1280, %v1341
        %v1343 = vpop.f32.mrb[0].mxu0
        %v1344 = vpop.f32.mrb[0].mxu0
        %v1345 = vadd.f32 %v1280, %v1344
        %v1346 = vpop.f32.mrb[0].mxu0
        %1347 = vdwg.mxu0
        %v1348 = vxor.u32 %v1326, 2147483648
        %v1349 = vxor.u32 %v1329, 2147483648
        %v1350 = vxor.u32 %v1334, 2147483648
        %v1351 = vxor.u32 %v1337, 2147483648
        %v1352 = vxor.u32 %v1342, 2147483648
        %v1353 = vxor.u32 %v1345, 2147483648
        %v1354 = vmul.f32 %v1348, 1.442695
        %v1355 = vpow.pop %v1354
        %v1356 = vmul.f32 %v1349, 1.442695
        %v1357 = vpow.pop %v1356
        %v1358 = vmul.f32 %v1350, 1.442695
        %v1359 = vpow.pop %v1358
        %v1360 = vmul.f32 %v1351, 1.442695
        %v1361 = vpow.pop %v1360
        %v1362 = vmul.f32 %v1352, 1.442695
        %v1363 = vpow.pop %v1362
        %v1364 = vmul.f32 %v1353, 1.442695
        %v1365 = vpow.pop %v1364
        %v1366 = vadd.f32 %v1355, 1.0
        %v1367 = vadd.f32 %v1357, 1.0
        %v1368 = vadd.f32 %v1359, 1.0
        %v1369 = vadd.f32 %v1361, 1.0
        %v1370 = vadd.f32 %v1363, 1.0
        %v1371 = vadd.f32 %v1365, 1.0
        %v1372 = vrcp.pop %v1366
        %v1373 = vmul.f32 1.0, %v1372
        %v1374 = vrcp.pop %v1367
        %v1375 = vmul.f32 1.0, %v1374
        %v1376 = vrcp.pop %v1368
        %v1377 = vmul.f32 1.0, %v1376
        %v1378 = vrcp.pop %v1369
        %v1379 = vmul.f32 1.0, %v1378
        %v1380 = vrcp.pop %v1370
        %v1381 = vmul.f32 1.0, %v1380
        %v1382 = vrcp.pop %v1371
        %v1383 = vmul.f32 1.0, %v1382
        %v1384 = vmul.f32 %v1326, %v1373
        %v1385 = vmul.f32 %v1329, %v1375
        %v1386 = vmul.f32 %v1334, %v1377
        %v1387 = vmul.f32 %v1337, %v1379
        %v1388 = vmul.f32 %v1342, %v1381
        %v1389 = vmul.f32 %v1345, %v1383
        %v1390 = vld [vmem:[%s5] sm:$0xf]
        %v1391 = vld [vmem:[%s5 + $0x4] sm:$0xf]
        %v1392 = vld [vmem:[%s5 + $0x8] sm:$0xf]
        %v1393 = vld [vmem:[%s5 + $0xc] sm:$0xf]
        %v1394 = vld [vmem:[%s5 + $0x10] sm:$0xf]
        %v1395 = vld [vmem:[%s5 + $0x14] sm:$0xf]
        %v1396 = vld [vmem:[%s5 + $0x18] sm:$0xf]
        %v1397 = vld [vmem:[%s5 + $0x1c] sm:$0xf]
        %v1398 = vld [vmem:[%s6] sm:$0xf]
        %v1399 = vld [vmem:[%s6 + $0x4] sm:$0xf]
        %v1400 = vld [vmem:[%s7] sm:$0xf]
        %v1401 = vld [vmem:[%s7 + $0x4] sm:$0xf]
        %v1402 = vld [vmem:[%s7 + $0x8] sm:$0xf]
        %v1403 = vld [vmem:[%s7 + $0xc] sm:$0xf]
        %v1404 = vld [vmem:[%s7 + $0x10] sm:$0xf]
        %v1405 = vld [vmem:[%s7 + $0x14] sm:$0xf]
        %v1406 = vld [vmem:[%s7 + $0x18] sm:$0xf]
        %v1407 = vld [vmem:[%s7 + $0x1c] sm:$0xf]
        %v1408 = vld [vmem:[%s7 + $0x20] sm:$0xf]
        %v1409 = vld [vmem:[%s7 + $0x24] sm:$0xf]
        %v1410 = vld [vmem:[%s7 + $0x28] sm:$0xf]
        %v1411 = vld [vmem:[%s7 + $0x2c] sm:$0xf]
        %v1412 = vld [vmem:[%s8] sm:$0xf]
        %v1413 = vld [vmem:[%s8 + $0x4] sm:$0xf]
        %v1414 = vld [vmem:[%s8 + $0x8] sm:$0xf]
        %v1415 = vld [vmem:[%s8 + $0xc] sm:$0xf]
        %v1416 = vld [vmem:[%s15] sm:$0xff]
        %v1417 = vld [vmem:[%s15 + $0x8] sm:$0xff]
        %v1418 = vld [vmem:[%s15 + $0x10] sm:$0xff]
        %v1419 = vld [vmem:[%s15 + $0x18] sm:$0xff]
        %v1420 = vpack.c.bf16 %v839, %v838
        %v1421 = vpack.c.bf16 %v1417, %v1416
        %v1422 = vpack.c.bf16 %v1419, %v1418
        %v1423 = vld [vmem:[%s16] sm:$0x1]
        %v1425 = vlaneseq
        %v1426 = vshrl.u32 %v1425, 7
        %v1427 = vsub.s32 0, %v1426
        %v1428 = vrot.slane %v1423, %v1427
        %v1431 = vsel %vm995, %v1420, 0
        %1433 = vmatprep.subr.bf16.mxu0 0
        %1434 = vmatpush1.bf16.msra.mxu0 %v1421
        %1435 = vmatprep.subr.bf16.mxu0 0
        %1436 = vmatpush1.bf16.msra.mxu0 %v1422
        %1437 = vmatprep.subr.bf16.mxu0 0
        %1438 = vmatpush1.bf16.msra.mxu0 0
        %1439 = vmatprep.subr.bf16.mxu0 0
        %1440 = vmatpush1.bf16.msra.mxu0 0
        %1441 = vmatprep.subr.bf16.mxu0 0
        %1442 = vmatpush1.bf16.msra.mxu0 0
        %1443 = vmatprep.subr.bf16.mxu0 0
        %1444 = vmatpush1.bf16.msra.mxu0 0
        %1445 = vmatprep.subr.bf16.mxu0 0
        %1446 = vmatpush1.bf16.msra.mxu0 0
        %1447 = vmatprep.subr.bf16.mxu0 0
        %1448 = vmatpush1.bf16.msra.mxu0 0
        %1449 = vmatprep.subr.bf16.mxu0 0
        %1450 = vmatpush1.bf16.msra.mxu0 0
        %1451 = vmatprep.subr.bf16.mxu0 0
        %1452 = vmatpush1.bf16.msra.mxu0 0
        %1453 = vmatprep.subr.bf16.mxu0 0
        %1454 = vmatpush1.bf16.msra.mxu0 0
        %1455 = vmatprep.subr.bf16.mxu0 0
        %1456 = vmatpush1.bf16.msra.mxu0 0
        %1457 = vmatprep.subr.bf16.mxu0 0
        %1458 = vmatpush1.bf16.msra.mxu0 0
        %1459 = vmatprep.subr.bf16.mxu0 0
        %1460 = vmatpush1.bf16.msra.mxu0 0
        %1461 = vmatprep.subr.bf16.mxu0 0
        %1462 = vmatpush1.bf16.msra.mxu0 0
        %1463 = vmatprep.subr.bf16.mxu0 0
        %1464 = vmatpush1.bf16.msra.mxu0 0
        %1465 = vmatprep.mubr.bf16.mxu0 0
        %1466 = vmatmul.mubr.bf16.gmra.mrb[0].mxu0 %v1431
        %v1467 = vpop.f32.mrb[0].mxu0
        %v1468 = vadd.f32 %v1428, %v1467
        %v1469 = vpop.f32.mrb[0].mxu0
        %v1470 = vpop.f32.mrb[0].mxu0
        %v1471 = vadd.f32 %v1428, %v1470
        %v1472 = vpop.f32.mrb[0].mxu0
        %1473 = vdwg.mxu0
        %v1474 = vpack.c.bf16 %v1471, %v1468
        %v1483 = vunpack.c.l.b16 %v1390
        %v1484 = vunpack.c.l.b16 %v1391
        %v1485 = vunpack.c.l.b16 %v1392
        %v1486 = vunpack.c.l.b16 %v1393
        %v1487 = vunpack.c.l.b16 %v1394
        %v1488 = vunpack.c.l.b16 %v1395
        %v1489 = vunpack.c.l.b16 %v1396
        %v1490 = vunpack.c.l.b16 %v1397
        %v1491 = vpack.c.b16 %v1484, %v1483
        %v1492 = vpack.c.b16 %v1486, %v1485
        %v1493 = vpack.c.b16 %v1488, %v1487
        %v1494 = vpack.c.b16 %v1490, %v1489
        %v1496 = vsel %vm781, %v1491, 0
        %v1499 = vsel %vm781, %v1492, 0
        %v1502 = vsel %vm781, %v1493, 0
        %v1505 = vsel %vm781, %v1494, 0
        %1507 = vmatprep.subr.bf16.mxu0 0
        %1508 = vmatpush1.bf16.msra.mxu0 %v1474
        %1509 = vmatprep.subr.bf16.mxu0 0
        %1510 = vmatpush1.bf16.msra.mxu0 0
        %1511 = vmatprep.subr.bf16.mxu0 0
        %1512 = vmatpush1.bf16.msra.mxu0 0
        %1513 = vmatprep.subr.bf16.mxu0 0
        %1514 = vmatpush1.bf16.msra.mxu0 0
        %1515 = vmatprep.subr.bf16.mxu0 0
        %1516 = vmatpush1.bf16.msra.mxu0 0
        %1517 = vmatprep.subr.bf16.mxu0 0
        %1518 = vmatpush1.bf16.msra.mxu0 0
        %1519 = vmatprep.subr.bf16.mxu0 0
        %1520 = vmatpush1.bf16.msra.mxu0 0
        %1521 = vmatprep.subr.bf16.mxu0 0
        %1522 = vmatpush1.bf16.msra.mxu0 0
        %1523 = vmatprep.subr.bf16.mxu0 0
        %1524 = vmatpush1.bf16.msra.mxu0 0
        %1525 = vmatprep.subr.bf16.mxu0 0
        %1526 = vmatpush1.bf16.msra.mxu0 0
        %1527 = vmatprep.subr.bf16.mxu0 0
        %1528 = vmatpush1.bf16.msra.mxu0 0
        %1529 = vmatprep.subr.bf16.mxu0 0
        %1530 = vmatpush1.bf16.msra.mxu0 0
        %1531 = vmatprep.subr.bf16.mxu0 0
        %1532 = vmatpush1.bf16.msra.mxu0 0
        %1533 = vmatprep.subr.bf16.mxu0 0
        %1534 = vmatpush1.bf16.msra.mxu0 0
        %1535 = vmatprep.subr.bf16.mxu0 0
        %1536 = vmatpush1.bf16.msra.mxu0 0
        %1537 = vmatprep.subr.bf16.mxu0 0
        %1538 = vmatpush1.bf16.msra.mxu0 0
        %1539 = vmatprep.mubr.bf16.mxu0 0
        %1540 = vmatmul.mubr.bf16.gmra.mrb[0].mxu0 %v1496
        %v1541 = vpop.f32.mrb[0].mxu0
        %v1542 = vadd.f32 0.0, %v1541
        %v1543 = vpop.f32.mrb[0].mxu0
        %v1544 = vpop.f32.mrb[0].mxu0
        %v1545 = vadd.f32 0.0, %v1544
        %v1546 = vpop.f32.mrb[0].mxu0
        %1547 = vmatprep.mubr.bf16.mxu0 0
        %1548 = vmatmul.mubr.bf16.gmra.mrb[0].mxu0 %v1499
        %v1549 = vpop.f32.mrb[0].mxu0
        %v1550 = vadd.f32 0.0, %v1549
        %v1551 = vpop.f32.mrb[0].mxu0
        %v1552 = vpop.f32.mrb[0].mxu0
        %v1553 = vadd.f32 0.0, %v1552
        %v1554 = vpop.f32.mrb[0].mxu0
        %1555 = vmatprep.mubr.bf16.mxu0 0
        %1556 = vmatmul.mubr.bf16.gmra.mrb[0].mxu0 %v1502
        %v1557 = vpop.f32.mrb[0].mxu0
        %v1558 = vadd.f32 0.0, %v1557
        %v1559 = vpop.f32.mrb[0].mxu0
        %v1560 = vpop.f32.mrb[0].mxu0
        %v1561 = vadd.f32 0.0, %v1560
        %v1562 = vpop.f32.mrb[0].mxu0
        %1563 = vmatprep.mubr.bf16.mxu0 0
        %1564 = vmatmul.mubr.bf16.gmra.mrb[0].mxu0 %v1505
        %v1565 = vpop.f32.mrb[0].mxu0
        %v1566 = vadd.f32 0.0, %v1565
        %v1567 = vpop.f32.mrb[0].mxu0
        %v1568 = vpop.f32.mrb[0].mxu0
        %v1569 = vadd.f32 0.0, %v1568
        %v1570 = vpop.f32.mrb[0].mxu0
        %1571 = vdwg.mxu0
        %1576 = vrot.lane.b32.xlu0 %v1558, 64
        %v1577 = vpop.permute.xlu0 %1576
        %1578 = vrot.lane.b32.xlu0 %v1561, 64
        %v1579 = vpop.permute.xlu0 %1578
        %1580 = vrot.lane.b32.xlu0 %v1566, 64
        %v1581 = vpop.permute.xlu0 %1580
        %1582 = vrot.lane.b32.xlu0 %v1569, 64
        %v1583 = vpop.permute.xlu0 %1582
        %v1588 = vadd.f32 %v1542, %v1577
        %v1589 = vadd.f32 %v1545, %v1579
        %v1590 = vadd.f32 %v1550, %v1581
        %v1591 = vadd.f32 %v1553, %v1583
        %v1592 = vld [vmem:[%s17] sm:$0xff]
        %v1593 = vld [vmem:[%s17 + $0x8] sm:$0xff]
        %v1594 = vld [vmem:[%s17 + $0x10] sm:$0xff]
        %v1595 = vld [vmem:[%s17 + $0x18] sm:$0xff]
        %v1596 = vpack.c.bf16 %v1076, %v1075
        %v1597 = vpack.c.bf16 %v1078, %v1077
        %v1598 = vpack.c.bf16 %v1593, %v1592
        %v1599 = vpack.c.bf16 %v1595, %v1594
        %v1601 = vsel %vm995, %v1596, 0
        %v1604 = vsel %vm995, %v1597, 0
        %1606 = vmatprep.subr.bf16.mxu0 0
        %1607 = vmatpush1.bf16.msra.mxu0 %v1598
        %1608 = vmatprep.subr.bf16.mxu0 0
        %1609 = vmatpush1.bf16.msra.mxu0 %v1599
        %1610 = vmatprep.subr.bf16.mxu0 0
        %1611 = vmatpush1.bf16.msra.mxu0 0
        %1612 = vmatprep.subr.bf16.mxu0 0
        %1613 = vmatpush1.bf16.msra.mxu0 0
        %1614 = vmatprep.subr.bf16.mxu0 0
        %1615 = vmatpush1.bf16.msra.mxu0 0
        %1616 = vmatprep.subr.bf16.mxu0 0
        %1617 = vmatpush1.bf16.msra.mxu0 0
        %1618 = vmatprep.subr.bf16.mxu0 0
        %1619 = vmatpush1.bf16.msra.mxu0 0
        %1620 = vmatprep.subr.bf16.mxu0 0
        %1621 = vmatpush1.bf16.msra.mxu0 0
        %1622 = vmatprep.subr.bf16.mxu0 0
        %1623 = vmatpush1.bf16.msra.mxu0 0
        %1624 = vmatprep.subr.bf16.mxu0 0
        %1625 = vmatpush1.bf16.msra.mxu0 0
        %1626 = vmatprep.subr.bf16.mxu0 0
        %1627 = vmatpush1.bf16.msra.mxu0 0
        %1628 = vmatprep.subr.bf16.mxu0 0
        %1629 = vmatpush1.bf16.msra.mxu0 0
        %1630 = vmatprep.subr.bf16.mxu0 0
        %1631 = vmatpush1.bf16.msra.mxu0 0
        %1632 = vmatprep.subr.bf16.mxu0 0
        %1633 = vmatpush1.bf16.msra.mxu0 0
        %1634 = vmatprep.subr.bf16.mxu0 0
        %1635 = vmatpush1.bf16.msra.mxu0 0
        %1636 = vmatprep.subr.bf16.mxu0 0
        %1637 = vmatpush1.bf16.msra.mxu0 0
        %1638 = vmatprep.mubr.bf16.mxu0 0
        %1639 = vmatmul.mubr.bf16.gmra.mrb[0].mxu0 %v1601
        %v1640 = vpop.f32.mrb[0].mxu0
        %v1641 = vadd.f32 0.0, %v1640
        %v1642 = vpop.f32.mrb[0].mxu0
        %v1643 = vpop.f32.mrb[0].mxu0
        %v1644 = vadd.f32 0.0, %v1643
        %v1645 = vpop.f32.mrb[0].mxu0
        %1646 = vmatprep.mubr.bf16.mxu0 0
        %1647 = vmatmul.mubr.bf16.gmra.mrb[0].mxu0 %v1604
        %v1648 = vpop.f32.mrb[0].mxu0
        %v1649 = vadd.f32 0.0, %v1648
        %v1650 = vpop.f32.mrb[0].mxu0
        %v1651 = vpop.f32.mrb[0].mxu0
        %v1652 = vadd.f32 0.0, %v1651
        %v1653 = vpop.f32.mrb[0].mxu0
        %1654 = vdwg.mxu0
        %v1655 = vadd.f32 %v1588, %v1641
        %v1656 = vadd.f32 %v1589, %v1644
        %v1657 = vadd.f32 %v1590, %v1649
        %v1658 = vadd.f32 %v1591, %v1652
        %v1659 = vld [vmem:[%s18] sm:$0x1]
        %v1661 = vlaneseq
        %v1662 = vshrl.u32 %v1661, 7
        %v1663 = vsub.s32 0, %v1662
        %v1664 = vrot.slane %v1659, %v1663
        %v1666 = vadd.f32 %v1655, %v1664
        %v1667 = vadd.f32 %v1656, %v1664
        %v1668 = vadd.f32 %v1657, %v1664
        %v1669 = vadd.f32 %v1658, %v1664
        %v1670 = vxor.u32 %v1666, 2147483648
        %v1671 = vxor.u32 %v1667, 2147483648
        %v1672 = vxor.u32 %v1668, 2147483648
        %v1673 = vxor.u32 %v1669, 2147483648
        %v1674 = vmul.f32 %v1670, 1.442695
        %v1675 = vpow.pop %v1674
        %v1676 = vmul.f32 %v1671, 1.442695
        %v1677 = vpow.pop %v1676
        %v1678 = vmul.f32 %v1672, 1.442695
        %v1679 = vpow.pop %v1678
        %v1680 = vmul.f32 %v1673, 1.442695
        %v1681 = vpow.pop %v1680
        %v1682 = vadd.f32 %v1675, 1.0
        %v1683 = vadd.f32 %v1677, 1.0
        %v1684 = vadd.f32 %v1679, 1.0
        %v1685 = vadd.f32 %v1681, 1.0
        %v1686 = vrcp.pop %v1682
        %v1687 = vmul.f32 1.0, %v1686
        %v1688 = vrcp.pop %v1683
        %v1689 = vmul.f32 1.0, %v1688
        %v1690 = vrcp.pop %v1684
        %v1691 = vmul.f32 1.0, %v1690
        %v1692 = vrcp.pop %v1685
        %v1693 = vmul.f32 1.0, %v1692
        %1698 = vrot.lane.b32.xlu0 %v1542, 96
        %v1699 = vpop.permute.xlu0 %1698
        %1700 = vrot.lane.b32.xlu0 %v1545, 96
        %v1701 = vpop.permute.xlu0 %1700
        %1702 = vrot.lane.b32.xlu0 %v1550, 96
        %v1703 = vpop.permute.xlu0 %1702
        %1704 = vrot.lane.b32.xlu0 %v1553, 96
        %v1705 = vpop.permute.xlu0 %1704
        %v1710 = vmul.f32 %v1687, %v1699
        %v1711 = vmul.f32 %v1689, %v1701
        %v1712 = vmul.f32 %v1691, %v1703
        %v1713 = vmul.f32 %v1693, %v1705
        %v1714 = vpack.c.bf16 %v1711, %v1710
        %v1715 = vpack.c.bf16 %v1713, %v1712
        %v1718 = vunpack.c.l.b16 %v1398
        %v1719 = vunpack.c.l.b16 %v1399
        %v1720 = vpack.c.b16 %v1719, %v1718
        %v1722 = vsel %vm995, %v1720, 0
        %1724 = vmatprep.subr.bf16.mxu0 0
        %1725 = vmatpush1.bf16.msra.mxu0 %v1714
        %1726 = vmatprep.subr.bf16.mxu0 0
        %1727 = vmatpush1.bf16.msra.mxu0 %v1715
        %1728 = vmatprep.subr.bf16.mxu0 0
        %1729 = vmatpush1.bf16.msra.mxu0 0
        %1730 = vmatprep.subr.bf16.mxu0 0
        %1731 = vmatpush1.bf16.msra.mxu0 0
        %1732 = vmatprep.subr.bf16.mxu0 0
        %1733 = vmatpush1.bf16.msra.mxu0 0
        %1734 = vmatprep.subr.bf16.mxu0 0
        %1735 = vmatpush1.bf16.msra.mxu0 0
        %1736 = vmatprep.subr.bf16.mxu0 0
        %1737 = vmatpush1.bf16.msra.mxu0 0
        %1738 = vmatprep.subr.bf16.mxu0 0
        %1739 = vmatpush1.bf16.msra.mxu0 0
        %1740 = vmatprep.subr.bf16.mxu0 0
        %1741 = vmatpush1.bf16.msra.mxu0 0
        %1742 = vmatprep.subr.bf16.mxu0 0
        %1743 = vmatpush1.bf16.msra.mxu0 0
        %1744 = vmatprep.subr.bf16.mxu0 0
        %1745 = vmatpush1.bf16.msra.mxu0 0
        %1746 = vmatprep.subr.bf16.mxu0 0
        %1747 = vmatpush1.bf16.msra.mxu0 0
        %1748 = vmatprep.subr.bf16.mxu0 0
        %1749 = vmatpush1.bf16.msra.mxu0 0
        %1750 = vmatprep.subr.bf16.mxu0 0
        %1751 = vmatpush1.bf16.msra.mxu0 0
        %1752 = vmatprep.subr.bf16.mxu0 0
        %1753 = vmatpush1.bf16.msra.mxu0 0
        %1754 = vmatprep.subr.bf16.mxu0 0
        %1755 = vmatpush1.bf16.msra.mxu0 0
        %1756 = vmatprep.mubr.bf16.mxu0 0
        %1757 = vmatmul.mubr.bf16.gmra.mrb[0].mxu0 %v1722
        %v1758 = vpop.f32.mrb[0].mxu0
        %v1759 = vadd.f32 0.0, %v1758
        %v1760 = vpop.f32.mrb[0].mxu0
        %v1761 = vpop.f32.mrb[0].mxu0
        %v1762 = vadd.f32 0.0, %v1761
        %v1763 = vpop.f32.mrb[0].mxu0
        %1764 = vdwg.mxu0
        %v1765 = vpack.c.bf16 %v1689, %v1687
        %v1766 = vpack.c.bf16 %v1693, %v1691
        %1767 = vmatprep.subr.bf16.mxu0 0
        %1768 = vmatpush1.bf16.msra.mxu0 %v1765
        %1769 = vmatprep.subr.bf16.mxu0 0
        %1770 = vmatpush1.bf16.msra.mxu0 %v1766
        %1771 = vmatprep.subr.bf16.mxu0 0
        %1772 = vmatpush1.bf16.msra.mxu0 0
        %1773 = vmatprep.subr.bf16.mxu0 0
        %1774 = vmatpush1.bf16.msra.mxu0 0
        %1775 = vmatprep.subr.bf16.mxu0 0
        %1776 = vmatpush1.bf16.msra.mxu0 0
        %1777 = vmatprep.subr.bf16.mxu0 0
        %1778 = vmatpush1.bf16.msra.mxu0 0
        %1779 = vmatprep.subr.bf16.mxu0 0
        %1780 = vmatpush1.bf16.msra.mxu0 0
        %1781 = vmatprep.subr.bf16.mxu0 0
        %1782 = vmatpush1.bf16.msra.mxu0 0
        %1783 = vmatprep.subr.bf16.mxu0 0
        %1784 = vmatpush1.bf16.msra.mxu0 0
        %1785 = vmatprep.subr.bf16.mxu0 0
        %1786 = vmatpush1.bf16.msra.mxu0 0
        %1787 = vmatprep.subr.bf16.mxu0 0
        %1788 = vmatpush1.bf16.msra.mxu0 0
        %1789 = vmatprep.subr.bf16.mxu0 0
        %1790 = vmatpush1.bf16.msra.mxu0 0
        %1791 = vmatprep.subr.bf16.mxu0 0
        %1792 = vmatpush1.bf16.msra.mxu0 0
        %1793 = vmatprep.subr.bf16.mxu0 0
        %1794 = vmatpush1.bf16.msra.mxu0 0
        %1795 = vmatprep.subr.bf16.mxu0 0
        %1796 = vmatpush1.bf16.msra.mxu0 0
        %1797 = vmatprep.subr.bf16.mxu0 0
        %1798 = vmatpush1.bf16.msra.mxu0 0
        %1799 = vmatprep.mubr.bf16.mxu0 0
        %1800 = vmatmul.mubr.bf16.gmra.mrb[0].mxu0 %v1722
        %v1801 = vpop.f32.mrb[0].mxu0
        %v1802 = vadd.f32 1e-06, %v1801
        %v1803 = vpop.f32.mrb[0].mxu0
        %v1804 = vpop.f32.mrb[0].mxu0
        %v1805 = vadd.f32 1e-06, %v1804
        %v1806 = vpop.f32.mrb[0].mxu0
        %1807 = vdwg.mxu0
        %v1808 = vrcp.pop %v1802
        %v1809 = vrcp.pop %v1805
        %v1810 = vmul.f32 %v1759, %v1808
        %v1811 = vmul.f32 %v1762, %v1809
        %1814 = vrot.lane.b32.xlu0 %v1810, 96
        %v1815 = vpop.permute.xlu0 %1814
        %1816 = vrot.lane.b32.xlu0 %v1811, 96
        %v1817 = vpop.permute.xlu0 %1816
        %v1820 = vadd.f32 %v1468, %v1815
        %v1821 = vadd.f32 %v1471, %v1817
        %v1822 = vld [vmem:[%s19] sm:$0xf]
        %v1823 = vlaneseq
        %v1824 = vshrl.u32 %v1823, 7
        %v1825 = vsub.s32 0, %v1824
        %v1826 = vrot.slane %v1822, %v1825
        %1828 = vrot.lane.b32.xlu0 %v1826, 96
        %v1829 = vpop.permute.xlu0 %1828
        %v1831 = vmul.f32 %v1820, %v1829
        %v1832 = vmul.f32 %v1821, %v1829
        %v1833 = vlaneseq
        %v1834 = vshrl.u32 %v1833, 7
        %v1835 = vsub.s32 1, %v1834
        %v1836 = vrot.slane %v1822, %v1835
        %1838 = vrot.lane.b32.xlu0 %v1836, 96
        %v1839 = vpop.permute.xlu0 %1838
        %v1841 = vadd.f32 %v1831, %v1839
        %v1842 = vadd.f32 %v1832, %v1839
        %v1843 = vxor.u32 %v1841, 2147483648
        %v1844 = vxor.u32 %v1842, 2147483648
        %v1845 = vmul.f32 %v1843, 1.442695
        %v1846 = vpow.pop %v1845
        %v1847 = vmul.f32 %v1844, 1.442695
        %v1848 = vpow.pop %v1847
        %v1849 = vadd.f32 %v1846, 1.0
        %v1850 = vadd.f32 %v1848, 1.0
        %v1851 = vrcp.pop %v1849
        %v1852 = vmul.f32 1.0, %v1851
        %v1853 = vrcp.pop %v1850
        %v1854 = vmul.f32 1.0, %v1853
        %v1855 = vmul.f32 %v1841, %v1852
        %v1856 = vmul.f32 %v1842, %v1854
        %1859 = vrot.lane.b32.xlu0 %v1855, 32
        %v1860 = vpop.permute.xlu0 %1859
        %1861 = vrot.lane.b32.xlu0 %v1856, 32
        %v1862 = vpop.permute.xlu0 %1861
        %v1865 = vadd.f32 %v838, %v1860
        %v1866 = vadd.f32 %v839, %v1862
        %v1867 = vlaneseq
        %v1868 = vshrl.u32 %v1867, 7
        %v1869 = vsub.s32 2, %v1868
        %v1870 = vrot.slane %v1822, %v1869
        %v1871 = vmul.f32 %v1666, %v1870
        %v1872 = vmul.f32 %v1667, %v1870
        %v1873 = vmul.f32 %v1668, %v1870
        %v1874 = vmul.f32 %v1669, %v1870
        %v1875 = vlaneseq
        %v1876 = vshrl.u32 %v1875, 7
        %v1877 = vsub.s32 3, %v1876
        %v1878 = vrot.slane %v1822, %v1877
        %v1879 = vadd.f32 %v1871, %v1878
        %v1880 = vadd.f32 %v1872, %v1878
        %v1881 = vadd.f32 %v1873, %v1878
        %v1882 = vadd.f32 %v1874, %v1878
        %v1883 = vxor.u32 %v1879, 2147483648
        %v1884 = vxor.u32 %v1880, 2147483648
        %v1885 = vxor.u32 %v1881, 2147483648
        %v1886 = vxor.u32 %v1882, 2147483648
        %v1887 = vmul.f32 %v1883, 1.442695
        %v1888 = vpow.pop %v1887
        %v1889 = vmul.f32 %v1884, 1.442695
        %v1890 = vpow.pop %v1889
        %v1891 = vmul.f32 %v1885, 1.442695
        %v1892 = vpow.pop %v1891
        %v1893 = vmul.f32 %v1886, 1.442695
        %v1894 = vpow.pop %v1893
        %v1895 = vadd.f32 %v1888, 1.0
        %v1896 = vadd.f32 %v1890, 1.0
        %v1897 = vadd.f32 %v1892, 1.0
        %v1898 = vadd.f32 %v1894, 1.0
        %v1899 = vrcp.pop %v1895
        %v1900 = vmul.f32 1.0, %v1899
        %v1901 = vrcp.pop %v1896
        %v1902 = vmul.f32 1.0, %v1901
        %v1903 = vrcp.pop %v1897
        %v1904 = vmul.f32 1.0, %v1903
        %v1905 = vrcp.pop %v1898
        %v1906 = vmul.f32 1.0, %v1905
        %v1907 = vmul.f32 %v1879, %v1900
        %v1908 = vmul.f32 %v1880, %v1902
        %v1909 = vmul.f32 %v1881, %v1904
        %v1910 = vmul.f32 %v1882, %v1906
        %v1911 = vadd.f32 %v1075, %v1907
        %v1912 = vadd.f32 %v1076, %v1908
        %v1913 = vadd.f32 %v1077, %v1909
        %v1914 = vadd.f32 %v1078, %v1910
        %s1915 = scalar_lea.vmem %s15, 32
        %v1916 = vld [vmem:[%s1915] sm:$0xff]
        %v1917 = vld [vmem:[%s1915 + $0x8] sm:$0xff]
        %v1918 = vld [vmem:[%s1915 + $0x10] sm:$0xff]
        %v1919 = vld [vmem:[%s1915 + $0x18] sm:$0xff]
        %v1920 = vpack.c.bf16 %v1912, %v1911
        %v1921 = vpack.c.bf16 %v1914, %v1913
        %v1922 = vpack.c.bf16 %v1917, %v1916
        %v1923 = vpack.c.bf16 %v1919, %v1918
        %s1924 = scalar_lea.vmem %s16, 1
        %v1925 = vld [vmem:[%s1924] sm:$0x1]
        %v1927 = vlaneseq
        %v1928 = vshrl.u32 %v1927, 7
        %v1929 = vsub.s32 0, %v1928
        %v1930 = vrot.slane %v1925, %v1929
        %v1933 = vsel %vm995, %v1920, 0
        %v1936 = vsel %vm995, %v1921, 0
        %1938 = vmatprep.subr.bf16.mxu0 0
        %1939 = vmatpush1.bf16.msra.mxu0 %v1922
        %1940 = vmatprep.subr.bf16.mxu0 0
        %1941 = vmatpush1.bf16.msra.mxu0 %v1923
        %1942 = vmatprep.subr.bf16.mxu0 0
        %1943 = vmatpush1.bf16.msra.mxu0 0
        %1944 = vmatprep.subr.bf16.mxu0 0
        %1945 = vmatpush1.bf16.msra.mxu0 0
        %1946 = vmatprep.subr.bf16.mxu0 0
        %1947 = vmatpush1.bf16.msra.mxu0 0
        %1948 = vmatprep.subr.bf16.mxu0 0
        %1949 = vmatpush1.bf16.msra.mxu0 0
        %1950 = vmatprep.subr.bf16.mxu0 0
        %1951 = vmatpush1.bf16.msra.mxu0 0
        %1952 = vmatprep.subr.bf16.mxu0 0
        %1953 = vmatpush1.bf16.msra.mxu0 0
        %1954 = vmatprep.subr.bf16.mxu0 0
        %1955 = vmatpush1.bf16.msra.mxu0 0
        %1956 = vmatprep.subr.bf16.mxu0 0
        %1957 = vmatpush1.bf16.msra.mxu0 0
        %1958 = vmatprep.subr.bf16.mxu0 0
        %1959 = vmatpush1.bf16.msra.mxu0 0
        %1960 = vmatprep.subr.bf16.mxu0 0
        %1961 = vmatpush1.bf16.msra.mxu0 0
        %1962 = vmatprep.subr.bf16.mxu0 0
        %1963 = vmatpush1.bf16.msra.mxu0 0
        %1964 = vmatprep.subr.bf16.mxu0 0
        %1965 = vmatpush1.bf16.msra.mxu0 0
        %1966 = vmatprep.subr.bf16.mxu0 0
        %1967 = vmatpush1.bf16.msra.mxu0 0
        %1968 = vmatprep.subr.bf16.mxu0 0
        %1969 = vmatpush1.bf16.msra.mxu0 0
        %1970 = vmatprep.mubr.bf16.mxu0 0
        %1971 = vmatmul.mubr.bf16.gmra.mrb[0].mxu0 %v1933
        %v1972 = vpop.f32.mrb[0].mxu0
        %v1973 = vadd.f32 %v1930, %v1972
        %v1974 = vpop.f32.mrb[0].mxu0
        %v1975 = vpop.f32.mrb[0].mxu0
        %v1976 = vadd.f32 %v1930, %v1975
        %v1977 = vpop.f32.mrb[0].mxu0
        %1978 = vmatprep.mubr.bf16.mxu0 0
        %1979 = vmatmul.mubr.bf16.gmra.mrb[0].mxu0 %v1936
        %v1980 = vpop.f32.mrb[0].mxu0
        %v1981 = vadd.f32 %v1930, %v1980
        %v1982 = vpop.f32.mrb[0].mxu0
        %v1983 = vpop.f32.mrb[0].mxu0
        %v1984 = vadd.f32 %v1930, %v1983
        %v1985 = vpop.f32.mrb[0].mxu0
        %1986 = vdwg.mxu0
        %v1987 = vpack.c.bf16 %v1976, %v1973
        %v1988 = vpack.c.bf16 %v1984, %v1981
        %v2001 = vunpack.c.l.b16 %v1400
        %v2002 = vunpack.c.l.b16 %v1401
        %v2003 = vunpack.c.l.b16 %v1402
        %v2004 = vunpack.c.l.b16 %v1403
        %v2005 = vunpack.c.l.b16 %v1404
        %v2006 = vunpack.c.l.b16 %v1405
        %v2007 = vunpack.c.l.b16 %v1406
        %v2008 = vunpack.c.l.b16 %v1407
        %v2009 = vunpack.c.l.b16 %v1408
        %v2010 = vunpack.c.l.b16 %v1409
        %v2011 = vunpack.c.l.b16 %v1410
        %v2012 = vunpack.c.l.b16 %v1411
        %v2013 = vpack.c.b16 %v2002, %v2001
        %v2014 = vpack.c.b16 %v2004, %v2003
        %v2015 = vpack.c.b16 %v2006, %v2005
        %v2016 = vpack.c.b16 %v2008, %v2007
        %v2017 = vpack.c.b16 %v2010, %v2009
        %v2018 = vpack.c.b16 %v2012, %v2011
        %v2020 = vsel %vm995, %v2013, 0
        %v2023 = vsel %vm995, %v2014, 0
        %v2026 = vsel %vm995, %v2015, 0
        %v2029 = vsel %vm995, %v2016, 0
        %v2032 = vsel %vm995, %v2017, 0
        %v2035 = vsel %vm995, %v2018, 0
        %2037 = vmatprep.subr.bf16.mxu0 0
        %2038 = vmatpush1.bf16.msra.mxu0 %v1987
        %2039 = vmatprep.subr.bf16.mxu0 0
        %2040 = vmatpush1.bf16.msra.mxu0 %v1988
        %2041 = vmatprep.subr.bf16.mxu0 0
        %2042 = vmatpush1.bf16.msra.mxu0 0
        %2043 = vmatprep.subr.bf16.mxu0 0
        %2044 = vmatpush1.bf16.msra.mxu0 0
        %2045 = vmatprep.subr.bf16.mxu0 0
        %2046 = vmatpush1.bf16.msra.mxu0 0
        %2047 = vmatprep.subr.bf16.mxu0 0
        %2048 = vmatpush1.bf16.msra.mxu0 0
        %2049 = vmatprep.subr.bf16.mxu0 0
        %2050 = vmatpush1.bf16.msra.mxu0 0
        %2051 = vmatprep.subr.bf16.mxu0 0
        %2052 = vmatpush1.bf16.msra.mxu0 0
        %2053 = vmatprep.subr.bf16.mxu0 0
        %2054 = vmatpush1.bf16.msra.mxu0 0
        %2055 = vmatprep.subr.bf16.mxu0 0
        %2056 = vmatpush1.bf16.msra.mxu0 0
        %2057 = vmatprep.subr.bf16.mxu0 0
        %2058 = vmatpush1.bf16.msra.mxu0 0
        %2059 = vmatprep.subr.bf16.mxu0 0
        %2060 = vmatpush1.bf16.msra.mxu0 0
        %2061 = vmatprep.subr.bf16.mxu0 0
        %2062 = vmatpush1.bf16.msra.mxu0 0
        %2063 = vmatprep.subr.bf16.mxu0 0
        %2064 = vmatpush1.bf16.msra.mxu0 0
        %2065 = vmatprep.subr.bf16.mxu0 0
        %2066 = vmatpush1.bf16.msra.mxu0 0
        %2067 = vmatprep.subr.bf16.mxu0 0
        %2068 = vmatpush1.bf16.msra.mxu0 0
        %2069 = vmatprep.mubr.bf16.mxu0 0
        %2070 = vmatmul.mubr.bf16.gmra.mrb[0].mxu0 %v2020
        %v2071 = vpop.f32.mrb[0].mxu0
        %v2072 = vadd.f32 0.0, %v2071
        %v2073 = vpop.f32.mrb[0].mxu0
        %v2074 = vpop.f32.mrb[0].mxu0
        %v2075 = vadd.f32 0.0, %v2074
        %v2076 = vpop.f32.mrb[0].mxu0
        %2077 = vmatprep.mubr.bf16.mxu0 0
        %2078 = vmatmul.mubr.bf16.gmra.mrb[0].mxu0 %v2023
        %v2079 = vpop.f32.mrb[0].mxu0
        %v2080 = vadd.f32 0.0, %v2079
        %v2081 = vpop.f32.mrb[0].mxu0
        %v2082 = vpop.f32.mrb[0].mxu0
        %v2083 = vadd.f32 0.0, %v2082
        %v2084 = vpop.f32.mrb[0].mxu0
        %2085 = vmatprep.mubr.bf16.mxu0 0
        %2086 = vmatmul.mubr.bf16.gmra.mrb[0].mxu0 %v2026
        %v2087 = vpop.f32.mrb[0].mxu0
        %v2088 = vadd.f32 0.0, %v2087
        %v2089 = vpop.f32.mrb[0].mxu0
        %v2090 = vpop.f32.mrb[0].mxu0
        %v2091 = vadd.f32 0.0, %v2090
        %v2092 = vpop.f32.mrb[0].mxu0
        %2093 = vmatprep.mubr.bf16.mxu0 0
        %2094 = vmatmul.mubr.bf16.gmra.mrb[0].mxu0 %v2029
        %v2095 = vpop.f32.mrb[0].mxu0
        %v2096 = vadd.f32 0.0, %v2095
        %v2097 = vpop.f32.mrb[0].mxu0
        %v2098 = vpop.f32.mrb[0].mxu0
        %v2099 = vadd.f32 0.0, %v2098
        %v2100 = vpop.f32.mrb[0].mxu0
        %2101 = vmatprep.mubr.bf16.mxu0 0
        %2102 = vmatmul.mubr.bf16.gmra.mrb[0].mxu0 %v2032
        %v2103 = vpop.f32.mrb[0].mxu0
        %v2104 = vadd.f32 0.0, %v2103
        %v2105 = vpop.f32.mrb[0].mxu0
        %v2106 = vpop.f32.mrb[0].mxu0
        %v2107 = vadd.f32 0.0, %v2106
        %v2108 = vpop.f32.mrb[0].mxu0
        %2109 = vmatprep.mubr.bf16.mxu0 0
        %2110 = vmatmul.mubr.bf16.gmra.mrb[0].mxu0 %v2035
        %v2111 = vpop.f32.mrb[0].mxu0
        %v2112 = vadd.f32 0.0, %v2111
        %v2113 = vpop.f32.mrb[0].mxu0
        %v2114 = vpop.f32.mrb[0].mxu0
        %v2115 = vadd.f32 0.0, %v2114
        %v2116 = vpop.f32.mrb[0].mxu0
        %2117 = vdwg.mxu0
        %2124 = vrot.lane.b32.xlu0 %v2096, 64
        %v2125 = vpop.permute.xlu0 %2124
        %2126 = vrot.lane.b32.xlu0 %v2099, 64
        %v2127 = vpop.permute.xlu0 %2126
        %2128 = vrot.lane.b32.xlu0 %v2104, 64
        %v2129 = vpop.permute.xlu0 %2128
        %2130 = vrot.lane.b32.xlu0 %v2107, 64
        %v2131 = vpop.permute.xlu0 %2130
        %2132 = vrot.lane.b32.xlu0 %v2112, 64
        %v2133 = vpop.permute.xlu0 %2132
        %2134 = vrot.lane.b32.xlu0 %v2115, 64
        %v2135 = vpop.permute.xlu0 %2134
        %v2142 = vadd.f32 %v2072, %v2125
        %v2143 = vadd.f32 %v2075, %v2127
        %v2144 = vadd.f32 %v2080, %v2129
        %v2145 = vadd.f32 %v2083, %v2131
        %v2146 = vadd.f32 %v2088, %v2133
        %v2147 = vadd.f32 %v2091, %v2135
        %s2148 = scalar_lea.vmem %s17, 32
        %v2149 = vld [vmem:[%s2148] sm:$0xff]
        %v2150 = vld [vmem:[%s2148 + $0x8] sm:$0xff]
        %v2151 = vld [vmem:[%s2148 + $0x10] sm:$0xff]
        %v2152 = vld [vmem:[%s2148 + $0x18] sm:$0xff]
        %v2153 = vpack.c.bf16 %v1385, %v1384
        %v2154 = vpack.c.bf16 %v1387, %v1386
        %v2155 = vpack.c.bf16 %v1389, %v1388
        %v2156 = vpack.c.bf16 %v2150, %v2149
        %v2157 = vpack.c.bf16 %v2152, %v2151
        %v2159 = vsel %vm995, %v2153, 0
        %v2162 = vsel %vm995, %v2154, 0
        %v2165 = vsel %vm995, %v2155, 0
        %2167 = vmatprep.subr.bf16.mxu0 0
        %2168 = vmatpush1.bf16.msra.mxu0 %v2156
        %2169 = vmatprep.subr.bf16.mxu0 0
        %2170 = vmatpush1.bf16.msra.mxu0 %v2157
        %2171 = vmatprep.subr.bf16.mxu0 0
        %2172 = vmatpush1.bf16.msra.mxu0 0
        %2173 = vmatprep.subr.bf16.mxu0 0
        %2174 = vmatpush1.bf16.msra.mxu0 0
        %2175 = vmatprep.subr.bf16.mxu0 0
        %2176 = vmatpush1.bf16.msra.mxu0 0
        %2177 = vmatprep.subr.bf16.mxu0 0
        %2178 = vmatpush1.bf16.msra.mxu0 0
        %2179 = vmatprep.subr.bf16.mxu0 0
        %2180 = vmatpush1.bf16.msra.mxu0 0
        %2181 = vmatprep.subr.bf16.mxu0 0
        %2182 = vmatpush1.bf16.msra.mxu0 0
        %2183 = vmatprep.subr.bf16.mxu0 0
        %2184 = vmatpush1.bf16.msra.mxu0 0
        %2185 = vmatprep.subr.bf16.mxu0 0
        %2186 = vmatpush1.bf16.msra.mxu0 0
        %2187 = vmatprep.subr.bf16.mxu0 0
        %2188 = vmatpush1.bf16.msra.mxu0 0
        %2189 = vmatprep.subr.bf16.mxu0 0
        %2190 = vmatpush1.bf16.msra.mxu0 0
        %2191 = vmatprep.subr.bf16.mxu0 0
        %2192 = vmatpush1.bf16.msra.mxu0 0
        %2193 = vmatprep.subr.bf16.mxu0 0
        %2194 = vmatpush1.bf16.msra.mxu0 0
        %2195 = vmatprep.subr.bf16.mxu0 0
        %2196 = vmatpush1.bf16.msra.mxu0 0
        %2197 = vmatprep.subr.bf16.mxu0 0
        %2198 = vmatpush1.bf16.msra.mxu0 0
        %2199 = vmatprep.mubr.bf16.mxu0 0
        %2200 = vmatmul.mubr.bf16.gmra.mrb[0].mxu0 %v2159
        %v2201 = vpop.f32.mrb[0].mxu0
        %v2202 = vadd.f32 0.0, %v2201
        %v2203 = vpop.f32.mrb[0].mxu0
        %v2204 = vpop.f32.mrb[0].mxu0
        %v2205 = vadd.f32 0.0, %v2204
        %v2206 = vpop.f32.mrb[0].mxu0
        %2207 = vmatprep.mubr.bf16.mxu0 0
        %2208 = vmatmul.mubr.bf16.gmra.mrb[0].mxu0 %v2162
        %v2209 = vpop.f32.mrb[0].mxu0
        %v2210 = vadd.f32 0.0, %v2209
        %v2211 = vpop.f32.mrb[0].mxu0
        %v2212 = vpop.f32.mrb[0].mxu0
        %v2213 = vadd.f32 0.0, %v2212
        %v2214 = vpop.f32.mrb[0].mxu0
        %2215 = vmatprep.mubr.bf16.mxu0 0
        %2216 = vmatmul.mubr.bf16.gmra.mrb[0].mxu0 %v2165
        %v2217 = vpop.f32.mrb[0].mxu0
        %v2218 = vadd.f32 0.0, %v2217
        %v2219 = vpop.f32.mrb[0].mxu0
        %v2220 = vpop.f32.mrb[0].mxu0
        %v2221 = vadd.f32 0.0, %v2220
        %v2222 = vpop.f32.mrb[0].mxu0
        %2223 = vdwg.mxu0
        %v2224 = vadd.f32 %v2142, %v2202
        %v2225 = vadd.f32 %v2143, %v2205
        %v2226 = vadd.f32 %v2144, %v2210
        %v2227 = vadd.f32 %v2145, %v2213
        %v2228 = vadd.f32 %v2146, %v2218
        %v2229 = vadd.f32 %v2147, %v2221
        %s2230 = scalar_lea.vmem %s18, 1
        %v2231 = vld [vmem:[%s2230] sm:$0x1]
        %v2233 = vlaneseq
        %v2234 = vshrl.u32 %v2233, 7
        %v2235 = vsub.s32 0, %v2234
        %v2236 = vrot.slane %v2231, %v2235
        %v2238 = vadd.f32 %v2224, %v2236
        %v2239 = vadd.f32 %v2225, %v2236
        %v2240 = vadd.f32 %v2226, %v2236
        %v2241 = vadd.f32 %v2227, %v2236
        %v2242 = vadd.f32 %v2228, %v2236
        %v2243 = vadd.f32 %v2229, %v2236
        %v2244 = vxor.u32 %v2238, 2147483648
        %v2245 = vxor.u32 %v2239, 2147483648
        %v2246 = vxor.u32 %v2240, 2147483648
        %v2247 = vxor.u32 %v2241, 2147483648
        %v2248 = vxor.u32 %v2242, 2147483648
        %v2249 = vxor.u32 %v2243, 2147483648
        %v2250 = vmul.f32 %v2244, 1.442695
        %v2251 = vpow.pop %v2250
        %v2252 = vmul.f32 %v2245, 1.442695
        %v2253 = vpow.pop %v2252
        %v2254 = vmul.f32 %v2246, 1.442695
        %v2255 = vpow.pop %v2254
        %v2256 = vmul.f32 %v2247, 1.442695
        %v2257 = vpow.pop %v2256
        %v2258 = vmul.f32 %v2248, 1.442695
        %v2259 = vpow.pop %v2258
        %v2260 = vmul.f32 %v2249, 1.442695
        %v2261 = vpow.pop %v2260
        %v2262 = vadd.f32 %v2251, 1.0
        %v2263 = vadd.f32 %v2253, 1.0
        %v2264 = vadd.f32 %v2255, 1.0
        %v2265 = vadd.f32 %v2257, 1.0
        %v2266 = vadd.f32 %v2259, 1.0
        %v2267 = vadd.f32 %v2261, 1.0
        %v2268 = vrcp.pop %v2262
        %v2269 = vmul.f32 1.0, %v2268
        %v2270 = vrcp.pop %v2263
        %v2271 = vmul.f32 1.0, %v2270
        %v2272 = vrcp.pop %v2264
        %v2273 = vmul.f32 1.0, %v2272
        %v2274 = vrcp.pop %v2265
        %v2275 = vmul.f32 1.0, %v2274
        %v2276 = vrcp.pop %v2266
        %v2277 = vmul.f32 1.0, %v2276
        %v2278 = vrcp.pop %v2267
        %v2279 = vmul.f32 1.0, %v2278
        %2286 = vrot.lane.b32.xlu0 %v2072, 96
        %v2287 = vpop.permute.xlu0 %2286
        %2288 = vrot.lane.b32.xlu0 %v2075, 96
        %v2289 = vpop.permute.xlu0 %2288
        %2290 = vrot.lane.b32.xlu0 %v2080, 96
        %v2291 = vpop.permute.xlu0 %2290
        %2292 = vrot.lane.b32.xlu0 %v2083, 96
        %v2293 = vpop.permute.xlu0 %2292
        %2294 = vrot.lane.b32.xlu0 %v2088, 96
        %v2295 = vpop.permute.xlu0 %2294
        %2296 = vrot.lane.b32.xlu0 %v2091, 96
        %v2297 = vpop.permute.xlu0 %2296
        %v2304 = vmul.f32 %v2269, %v2287
        %v2305 = vmul.f32 %v2271, %v2289
        %v2306 = vmul.f32 %v2273, %v2291
        %v2307 = vmul.f32 %v2275, %v2293
        %v2308 = vmul.f32 %v2277, %v2295
        %v2309 = vmul.f32 %v2279, %v2297
        %v2310 = vpack.c.bf16 %v2305, %v2304
        %v2311 = vpack.c.bf16 %v2307, %v2306
        %v2312 = vpack.c.bf16 %v2309, %v2308
        %v2317 = vunpack.c.l.b16 %v1412
        %v2318 = vunpack.c.l.b16 %v1413
        %v2319 = vunpack.c.l.b16 %v1414
        %v2320 = vunpack.c.l.b16 %v1415
        %v2321 = vpack.c.b16 %v2318, %v2317
        %v2322 = vpack.c.b16 %v2320, %v2319
        %vm2323 = vcmask 392192
        %v2325 = vsel %vm2323, %v2321, 0
        %v2328 = vsel %vm2323, %v2322, 0
        %2330 = vmatprep.subr.bf16.mxu0 0
        %2331 = vmatpush1.bf16.msra.mxu0 %v2310
        %2332 = vmatprep.subr.bf16.mxu0 0
        %2333 = vmatpush1.bf16.msra.mxu0 %v2311
        %2334 = vmatprep.subr.bf16.mxu0 0
        %2335 = vmatpush1.bf16.msra.mxu0 %v2312
        %2336 = vmatprep.subr.bf16.mxu0 0
        %2337 = vmatpush1.bf16.msra.mxu0 0
        %2338 = vmatprep.subr.bf16.mxu0 0
        %2339 = vmatpush1.bf16.msra.mxu0 0
        %2340 = vmatprep.subr.bf16.mxu0 0
        %2341 = vmatpush1.bf16.msra.mxu0 0
        %2342 = vmatprep.subr.bf16.mxu0 0
        %2343 = vmatpush1.bf16.msra.mxu0 0
        %2344 = vmatprep.subr.bf16.mxu0 0
        %2345 = vmatpush1.bf16.msra.mxu0 0
        %2346 = vmatprep.subr.bf16.mxu0 0
        %2347 = vmatpush1.bf16.msra.mxu0 0
        %2348 = vmatprep.subr.bf16.mxu0 0
        %2349 = vmatpush1.bf16.msra.mxu0 0
        %2350 = vmatprep.subr.bf16.mxu0 0
        %2351 = vmatpush1.bf16.msra.mxu0 0
        %2352 = vmatprep.subr.bf16.mxu0 0
        %2353 = vmatpush1.bf16.msra.mxu0 0
        %2354 = vmatprep.subr.bf16.mxu0 0
        %2355 = vmatpush1.bf16.msra.mxu0 0
        %2356 = vmatprep.subr.bf16.mxu0 0
        %2357 = vmatpush1.bf16.msra.mxu0 0
        %2358 = vmatprep.subr.bf16.mxu0 0
        %2359 = vmatpush1.bf16.msra.mxu0 0
        %2360 = vmatprep.subr.bf16.mxu0 0
        %2361 = vmatpush1.bf16.msra.mxu0 0
        %2362 = vmatprep.mubr.bf16.mxu0 0
        %2363 = vmatmul.mubr.bf16.gmra.mrb[0].mxu0 %v2325
        %v2364 = vpop.f32.mrb[0].mxu0
        %v2365 = vadd.f32 0.0, %v2364
        %v2366 = vpop.f32.mrb[0].mxu0
        %v2367 = vpop.f32.mrb[0].mxu0
        %v2368 = vadd.f32 0.0, %v2367
        %v2369 = vpop.f32.mrb[0].mxu0
        %2370 = vmatprep.mubr.bf16.mxu0 0
        %2371 = vmatmul.mubr.bf16.gmra.mrb[0].mxu0 %v2328
        %v2372 = vpop.f32.mrb[0].mxu0
        %v2373 = vadd.f32 0.0, %v2372
        %v2374 = vpop.f32.mrb[0].mxu0
        %v2375 = vpop.f32.mrb[0].mxu0
        %v2376 = vadd.f32 0.0, %v2375
        %v2377 = vpop.f32.mrb[0].mxu0
        %2378 = vdwg.mxu0
        %v2379 = vpack.c.bf16 %v2271, %v2269
        %v2380 = vpack.c.bf16 %v2275, %v2273
        %v2381 = vpack.c.bf16 %v2279, %v2277
        %2382 = vmatprep.subr.bf16.mxu0 0
        %2383 = vmatpush1.bf16.msra.mxu0 %v2379
        %2384 = vmatprep.subr.bf16.mxu0 0
        %2385 = vmatpush1.bf16.msra.mxu0 %v2380
        %2386 = vmatprep.subr.bf16.mxu0 0
        %2387 = vmatpush1.bf16.msra.mxu0 %v2381
        %2388 = vmatprep.subr.bf16.mxu0 0
        %2389 = vmatpush1.bf16.msra.mxu0 0
        %2390 = vmatprep.subr.bf16.mxu0 0
        %2391 = vmatpush1.bf16.msra.mxu0 0
        %2392 = vmatprep.subr.bf16.mxu0 0
        %2393 = vmatpush1.bf16.msra.mxu0 0
        %2394 = vmatprep.subr.bf16.mxu0 0
        %2395 = vmatpush1.bf16.msra.mxu0 0
        %2396 = vmatprep.subr.bf16.mxu0 0
        %2397 = vmatpush1.bf16.msra.mxu0 0
        %2398 = vmatprep.subr.bf16.mxu0 0
        %2399 = vmatpush1.bf16.msra.mxu0 0
        %2400 = vmatprep.subr.bf16.mxu0 0
        %2401 = vmatpush1.bf16.msra.mxu0 0
        %2402 = vmatprep.subr.bf16.mxu0 0
        %2403 = vmatpush1.bf16.msra.mxu0 0
        %2404 = vmatprep.subr.bf16.mxu0 0
        %2405 = vmatpush1.bf16.msra.mxu0 0
        %2406 = vmatprep.subr.bf16.mxu0 0
        %2407 = vmatpush1.bf16.msra.mxu0 0
        %2408 = vmatprep.subr.bf16.mxu0 0
        %2409 = vmatpush1.bf16.msra.mxu0 0
        %2410 = vmatprep.subr.bf16.mxu0 0
        %2411 = vmatpush1.bf16.msra.mxu0 0
        %2412 = vmatprep.subr.bf16.mxu0 0
        %2413 = vmatpush1.bf16.msra.mxu0 0
        %2414 = vmatprep.mubr.bf16.mxu0 0
        %2415 = vmatmul.mubr.bf16.gmra.mrb[0].mxu0 %v2325
        %v2416 = vpop.f32.mrb[0].mxu0
        %v2417 = vadd.f32 1e-06, %v2416
        %v2418 = vpop.f32.mrb[0].mxu0
        %v2419 = vpop.f32.mrb[0].mxu0
        %v2420 = vadd.f32 1e-06, %v2419
        %v2421 = vpop.f32.mrb[0].mxu0
        %2422 = vmatprep.mubr.bf16.mxu0 0
        %2423 = vmatmul.mubr.bf16.gmra.mrb[0].mxu0 %v2328
        %v2424 = vpop.f32.mrb[0].mxu0
        %v2425 = vadd.f32 1e-06, %v2424
        %v2426 = vpop.f32.mrb[0].mxu0
        %v2427 = vpop.f32.mrb[0].mxu0
        %v2428 = vadd.f32 1e-06, %v2427
        %v2429 = vpop.f32.mrb[0].mxu0
        %2430 = vdwg.mxu0
        %v2431 = vrcp.pop %v2417
        %v2432 = vrcp.pop %v2420
        %v2433 = vrcp.pop %v2425
        %v2434 = vrcp.pop %v2428
        %v2435 = vmul.f32 %v2365, %v2431
        %v2436 = vmul.f32 %v2368, %v2432
        %v2437 = vmul.f32 %v2373, %v2433
        %v2438 = vmul.f32 %v2376, %v2434
        %2443 = vrot.lane.b32.xlu0 %v2435, 96
        %v2444 = vpop.permute.xlu0 %2443
        %2445 = vrot.lane.b32.xlu0 %v2436, 96
        %v2446 = vpop.permute.xlu0 %2445
        %2447 = vrot.lane.b32.xlu0 %v2437, 96
        %v2448 = vpop.permute.xlu0 %2447
        %2449 = vrot.lane.b32.xlu0 %v2438, 96
        %v2450 = vpop.permute.xlu0 %2449
        %v2455 = vadd.f32 %v1973, %v2444
        %v2456 = vadd.f32 %v1976, %v2446
        %v2457 = vadd.f32 %v1981, %v2448
        %v2458 = vadd.f32 %v1984, %v2450
        %s2459 = scalar_lea.vmem %s19, 4
        %v2460 = vld [vmem:[%s2459] sm:$0xf]
        %v2461 = vlaneseq
        %v2462 = vshrl.u32 %v2461, 7
        %v2463 = vsub.s32 0, %v2462
        %v2464 = vrot.slane %v2460, %v2463
        %2466 = vrot.lane.b32.xlu0 %v2464, 96
        %v2467 = vpop.permute.xlu0 %2466
        %v2469 = vmul.f32 %v2455, %v2467
        %v2470 = vmul.f32 %v2456, %v2467
        %v2471 = vmul.f32 %v2457, %v2467
        %v2472 = vmul.f32 %v2458, %v2467
        %v2473 = vlaneseq
        %v2474 = vshrl.u32 %v2473, 7
        %v2475 = vsub.s32 1, %v2474
        %v2476 = vrot.slane %v2460, %v2475
        %2478 = vrot.lane.b32.xlu0 %v2476, 96
        %v2479 = vpop.permute.xlu0 %2478
        %v2481 = vadd.f32 %v2469, %v2479
        %v2482 = vadd.f32 %v2470, %v2479
        %v2483 = vadd.f32 %v2471, %v2479
        %v2484 = vadd.f32 %v2472, %v2479
        %v2485 = vxor.u32 %v2481, 2147483648
        %v2486 = vxor.u32 %v2482, 2147483648
        %v2487 = vxor.u32 %v2483, 2147483648
        %v2488 = vxor.u32 %v2484, 2147483648
        %v2489 = vmul.f32 %v2485, 1.442695
        %v2490 = vpow.pop %v2489
        %v2491 = vmul.f32 %v2486, 1.442695
        %v2492 = vpow.pop %v2491
        %v2493 = vmul.f32 %v2487, 1.442695
        %v2494 = vpow.pop %v2493
        %v2495 = vmul.f32 %v2488, 1.442695
        %v2496 = vpow.pop %v2495
        %v2497 = vadd.f32 %v2490, 1.0
        %v2498 = vadd.f32 %v2492, 1.0
        %v2499 = vadd.f32 %v2494, 1.0
        %v2500 = vadd.f32 %v2496, 1.0
        %v2501 = vrcp.pop %v2497
        %v2502 = vmul.f32 1.0, %v2501
        %v2503 = vrcp.pop %v2498
        %v2504 = vmul.f32 1.0, %v2503
        %v2505 = vrcp.pop %v2499
        %v2506 = vmul.f32 1.0, %v2505
        %v2507 = vrcp.pop %v2500
        %v2508 = vmul.f32 1.0, %v2507
        %v2509 = vmul.f32 %v2481, %v2502
        %v2510 = vmul.f32 %v2482, %v2504
        %v2511 = vmul.f32 %v2483, %v2506
        %v2512 = vmul.f32 %v2484, %v2508
        %2517 = vrot.lane.b32.xlu0 %v2509, 32
        %v2518 = vpop.permute.xlu0 %2517
        %2519 = vrot.lane.b32.xlu0 %v2510, 32
        %v2520 = vpop.permute.xlu0 %2519
        %2521 = vrot.lane.b32.xlu0 %v2511, 32
        %v2522 = vpop.permute.xlu0 %2521
        %2523 = vrot.lane.b32.xlu0 %v2512, 32
        %v2524 = vpop.permute.xlu0 %2523
        %v2529 = vadd.f32 %v1911, %v2518
        %v2530 = vadd.f32 %v1912, %v2520
        %v2531 = vadd.f32 %v1913, %v2522
        %v2532 = vadd.f32 %v1914, %v2524
        %v2533 = vlaneseq
        %v2534 = vshrl.u32 %v2533, 7
        %v2535 = vsub.s32 2, %v2534
        %v2536 = vrot.slane %v2460, %v2535
        %v2537 = vmul.f32 %v2238, %v2536
        %v2538 = vmul.f32 %v2239, %v2536
        %v2539 = vmul.f32 %v2240, %v2536
        %v2540 = vmul.f32 %v2241, %v2536
        %v2541 = vmul.f32 %v2242, %v2536
        %v2542 = vmul.f32 %v2243, %v2536
        %v2543 = vlaneseq
        %v2544 = vshrl.u32 %v2543, 7
        %v2545 = vsub.s32 3, %v2544
        %v2546 = vrot.slane %v2460, %v2545
        %v2547 = vadd.f32 %v2537, %v2546
        %v2548 = vadd.f32 %v2538, %v2546
        %v2549 = vadd.f32 %v2539, %v2546
        %v2550 = vadd.f32 %v2540, %v2546
        %v2551 = vadd.f32 %v2541, %v2546
        %v2552 = vadd.f32 %v2542, %v2546
        %v2553 = vxor.u32 %v2547, 2147483648
        %v2554 = vxor.u32 %v2548, 2147483648
        %v2555 = vxor.u32 %v2549, 2147483648
        %v2556 = vxor.u32 %v2550, 2147483648
        %v2557 = vxor.u32 %v2551, 2147483648
        %v2558 = vxor.u32 %v2552, 2147483648
        %v2559 = vmul.f32 %v2553, 1.442695
        %v2560 = vpow.pop %v2559
        %v2561 = vmul.f32 %v2554, 1.442695
        %v2562 = vpow.pop %v2561
        %v2563 = vmul.f32 %v2555, 1.442695
        %v2564 = vpow.pop %v2563
        %v2565 = vmul.f32 %v2556, 1.442695
        %v2566 = vpow.pop %v2565
        %v2567 = vmul.f32 %v2557, 1.442695
        %v2568 = vpow.pop %v2567
        %v2569 = vmul.f32 %v2558, 1.442695
        %v2570 = vpow.pop %v2569
        %v2571 = vadd.f32 %v2560, 1.0
        %v2572 = vadd.f32 %v2562, 1.0
        %v2573 = vadd.f32 %v2564, 1.0
        %v2574 = vadd.f32 %v2566, 1.0
        %v2575 = vadd.f32 %v2568, 1.0
        %v2576 = vadd.f32 %v2570, 1.0
        %v2577 = vrcp.pop %v2571
        %v2578 = vmul.f32 1.0, %v2577
        %v2579 = vrcp.pop %v2572
        %v2580 = vmul.f32 1.0, %v2579
        %v2581 = vrcp.pop %v2573
        %v2582 = vmul.f32 1.0, %v2581
        %v2583 = vrcp.pop %v2574
        %v2584 = vmul.f32 1.0, %v2583
        %v2585 = vrcp.pop %v2575
        %v2586 = vmul.f32 1.0, %v2585
        %v2587 = vrcp.pop %v2576
        %v2588 = vmul.f32 1.0, %v2587
        %v2589 = vmul.f32 %v2547, %v2578
        %v2590 = vmul.f32 %v2548, %v2580
        %v2591 = vmul.f32 %v2549, %v2582
        %v2592 = vmul.f32 %v2550, %v2584
        %v2593 = vmul.f32 %v2551, %v2586
        %v2594 = vmul.f32 %v2552, %v2588
        %v2595 = vadd.f32 %v1384, %v2589
        %v2596 = vadd.f32 %v1385, %v2590
        %v2597 = vadd.f32 %v1386, %v2591
        %v2598 = vadd.f32 %v1387, %v2592
        %v2599 = vadd.f32 %v1388, %v2593
        %v2600 = vadd.f32 %v1389, %v2594
        %s2601 = scalar_lea.vmem %s15, 64
        %v2602 = vld [vmem:[%s2601] sm:$0xff]
        %v2603 = vld [vmem:[%s2601 + $0x8] sm:$0xff]
        %v2604 = vld [vmem:[%s2601 + $0x10] sm:$0xff]
        %v2605 = vld [vmem:[%s2601 + $0x18] sm:$0xff]
        %v2606 = vpack.c.bf16 %v1866, %v1865
        %v2607 = vpack.c.bf16 %v2603, %v2602
        %v2608 = vpack.c.bf16 %v2605, %v2604
        %s2609 = scalar_lea.vmem %s16, 2
        %v2610 = vld [vmem:[%s2609] sm:$0x1]
        %v2612 = vlaneseq
        %v2613 = vshrl.u32 %v2612, 7
        %v2614 = vsub.s32 0, %v2613
        %v2615 = vrot.slane %v2610, %v2614
        %v2618 = vsel %vm995, %v2606, 0
        %2620 = vmatprep.subr.bf16.mxu0 0
        %2621 = vmatpush1.bf16.msra.mxu0 %v2607
        %2622 = vmatprep.subr.bf16.mxu0 0
        %2623 = vmatpush1.bf16.msra.mxu0 %v2608
        %2624 = vmatprep.subr.bf16.mxu0 0
        %2625 = vmatpush1.bf16.msra.mxu0 0
        %2626 = vmatprep.subr.bf16.mxu0 0
        %2627 = vmatpush1.bf16.msra.mxu0 0
        %2628 = vmatprep.subr.bf16.mxu0 0
        %2629 = vmatpush1.bf16.msra.mxu0 0
        %2630 = vmatprep.subr.bf16.mxu0 0
        %2631 = vmatpush1.bf16.msra.mxu0 0
        %2632 = vmatprep.subr.bf16.mxu0 0
        %2633 = vmatpush1.bf16.msra.mxu0 0
        %2634 = vmatprep.subr.bf16.mxu0 0
        %2635 = vmatpush1.bf16.msra.mxu0 0
        %2636 = vmatprep.subr.bf16.mxu0 0
        %2637 = vmatpush1.bf16.msra.mxu0 0
        %2638 = vmatprep.subr.bf16.mxu0 0
        %2639 = vmatpush1.bf16.msra.mxu0 0
        %2640 = vmatprep.subr.bf16.mxu0 0
        %2641 = vmatpush1.bf16.msra.mxu0 0
        %2642 = vmatprep.subr.bf16.mxu0 0
        %2643 = vmatpush1.bf16.msra.mxu0 0
        %2644 = vmatprep.subr.bf16.mxu0 0
        %2645 = vmatpush1.bf16.msra.mxu0 0
        %2646 = vmatprep.subr.bf16.mxu0 0
        %2647 = vmatpush1.bf16.msra.mxu0 0
        %2648 = vmatprep.subr.bf16.mxu0 0
        %2649 = vmatpush1.bf16.msra.mxu0 0
        %2650 = vmatprep.subr.bf16.mxu0 0
        %2651 = vmatpush1.bf16.msra.mxu0 0
        %2652 = vmatprep.mubr.bf16.mxu0 0
        %2653 = vmatmul.mubr.bf16.gmra.mrb[0].mxu0 %v2618
        %v2654 = vpop.f32.mrb[0].mxu0
        %v2655 = vadd.f32 %v2615, %v2654
        %v2656 = vpop.f32.mrb[0].mxu0
        %v2657 = vpop.f32.mrb[0].mxu0
        %v2658 = vadd.f32 %v2615, %v2657
        %v2659 = vpop.f32.mrb[0].mxu0
        %2660 = vdwg.mxu0
        %v2661 = vpack.c.bf16 %v2658, %v2655
        %2662 = vmatprep.subr.bf16.mxu0 0
        %2663 = vmatpush1.bf16.msra.mxu0 %v2661
        %2664 = vmatprep.subr.bf16.mxu0 0
        %2665 = vmatpush1.bf16.msra.mxu0 0
        %2666 = vmatprep.subr.bf16.mxu0 0
        %2667 = vmatpush1.bf16.msra.mxu0 0
        %2668 = vmatprep.subr.bf16.mxu0 0
        %2669 = vmatpush1.bf16.msra.mxu0 0
        %2670 = vmatprep.subr.bf16.mxu0 0
        %2671 = vmatpush1.bf16.msra.mxu0 0
        %2672 = vmatprep.subr.bf16.mxu0 0
        %2673 = vmatpush1.bf16.msra.mxu0 0
        %2674 = vmatprep.subr.bf16.mxu0 0
        %2675 = vmatpush1.bf16.msra.mxu0 0
        %2676 = vmatprep.subr.bf16.mxu0 0
        %2677 = vmatpush1.bf16.msra.mxu0 0
        %2678 = vmatprep.subr.bf16.mxu0 0
        %2679 = vmatpush1.bf16.msra.mxu0 0
        %2680 = vmatprep.subr.bf16.mxu0 0
        %2681 = vmatpush1.bf16.msra.mxu0 0
        %2682 = vmatprep.subr.bf16.mxu0 0
        %2683 = vmatpush1.bf16.msra.mxu0 0
        %2684 = vmatprep.subr.bf16.mxu0 0
        %2685 = vmatpush1.bf16.msra.mxu0 0
        %2686 = vmatprep.subr.bf16.mxu0 0
        %2687 = vmatpush1.bf16.msra.mxu0 0
        %2688 = vmatprep.subr.bf16.mxu0 0
        %2689 = vmatpush1.bf16.msra.mxu0 0
        %2690 = vmatprep.subr.bf16.mxu0 0
        %2691 = vmatpush1.bf16.msra.mxu0 0
        %2692 = vmatprep.subr.bf16.mxu0 0
        %2693 = vmatpush1.bf16.msra.mxu0 0
        %2694 = vmatprep.mubr.bf16.mxu0 0
        %2695 = vmatmul.mubr.bf16.gmra.mrb[0].mxu0 %v1496
        %v2696 = vpop.f32.mrb[0].mxu0
        %v2697 = vadd.f32 0.0, %v2696
        %v2698 = vpop.f32.mrb[0].mxu0
        %v2699 = vpop.f32.mrb[0].mxu0
        %v2700 = vadd.f32 0.0, %v2699
        %v2701 = vpop.f32.mrb[0].mxu0
        %2702 = vmatprep.mubr.bf16.mxu0 0
        %2703 = vmatmul.mubr.bf16.gmra.mrb[0].mxu0 %v1499
        %v2704 = vpop.f32.mrb[0].mxu0
        %v2705 = vadd.f32 0.0, %v2704
        %v2706 = vpop.f32.mrb[0].mxu0
        %v2707 = vpop.f32.mrb[0].mxu0
        %v2708 = vadd.f32 0.0, %v2707
        %v2709 = vpop.f32.mrb[0].mxu0
        %2710 = vmatprep.mubr.bf16.mxu0 0
        %2711 = vmatmul.mubr.bf16.gmra.mrb[0].mxu0 %v1502
        %v2712 = vpop.f32.mrb[0].mxu0
        %v2713 = vadd.f32 0.0, %v2712
        %v2714 = vpop.f32.mrb[0].mxu0
        %v2715 = vpop.f32.mrb[0].mxu0
        %v2716 = vadd.f32 0.0, %v2715
        %v2717 = vpop.f32.mrb[0].mxu0
        %2718 = vmatprep.mubr.bf16.mxu0 0
        %2719 = vmatmul.mubr.bf16.gmra.mrb[0].mxu0 %v1505
        %v2720 = vpop.f32.mrb[0].mxu0
        %v2721 = vadd.f32 0.0, %v2720
        %v2722 = vpop.f32.mrb[0].mxu0
        %v2723 = vpop.f32.mrb[0].mxu0
        %v2724 = vadd.f32 0.0, %v2723
        %v2725 = vpop.f32.mrb[0].mxu0
        %2726 = vdwg.mxu0
        %2731 = vrot.lane.b32.xlu0 %v2713, 64
        %v2732 = vpop.permute.xlu0 %2731
        %2733 = vrot.lane.b32.xlu0 %v2716, 64
        %v2734 = vpop.permute.xlu0 %2733
        %2735 = vrot.lane.b32.xlu0 %v2721, 64
        %v2736 = vpop.permute.xlu0 %2735
        %2737 = vrot.lane.b32.xlu0 %v2724, 64
        %v2738 = vpop.permute.xlu0 %2737
        %v2743 = vadd.f32 %v2697, %v2732
        %v2744 = vadd.f32 %v2700, %v2734
        %v2745 = vadd.f32 %v2705, %v2736
        %v2746 = vadd.f32 %v2708, %v2738
        %s2747 = scalar_lea.vmem %s17, 64
        %v2748 = vld [vmem:[%s2747] sm:$0xff]
        %v2749 = vld [vmem:[%s2747 + $0x8] sm:$0xff]
        %v2750 = vld [vmem:[%s2747 + $0x10] sm:$0xff]
        %v2751 = vld [vmem:[%s2747 + $0x18] sm:$0xff]
        %v2752 = vpack.c.bf16 %v2530, %v2529
        %v2753 = vpack.c.bf16 %v2532, %v2531
        %v2754 = vpack.c.bf16 %v2749, %v2748
        %v2755 = vpack.c.bf16 %v2751, %v2750
        %v2757 = vsel %vm995, %v2752, 0
        %v2760 = vsel %vm995, %v2753, 0
        %2762 = vmatprep.subr.bf16.mxu0 0
        %2763 = vmatpush1.bf16.msra.mxu0 %v2754
        %2764 = vmatprep.subr.bf16.mxu0 0
        %2765 = vmatpush1.bf16.msra.mxu0 %v2755
        %2766 = vmatprep.subr.bf16.mxu0 0
        %2767 = vmatpush1.bf16.msra.mxu0 0
        %2768 = vmatprep.subr.bf16.mxu0 0
        %2769 = vmatpush1.bf16.msra.mxu0 0
        %2770 = vmatprep.subr.bf16.mxu0 0
        %2771 = vmatpush1.bf16.msra.mxu0 0
        %2772 = vmatprep.subr.bf16.mxu0 0
        %2773 = vmatpush1.bf16.msra.mxu0 0
        %2774 = vmatprep.subr.bf16.mxu0 0
        %2775 = vmatpush1.bf16.msra.mxu0 0
        %2776 = vmatprep.subr.bf16.mxu0 0
        %2777 = vmatpush1.bf16.msra.mxu0 0
        %2778 = vmatprep.subr.bf16.mxu0 0
        %2779 = vmatpush1.bf16.msra.mxu0 0
        %2780 = vmatprep.subr.bf16.mxu0 0
        %2781 = vmatpush1.bf16.msra.mxu0 0
        %2782 = vmatprep.subr.bf16.mxu0 0
        %2783 = vmatpush1.bf16.msra.mxu0 0
        %2784 = vmatprep.subr.bf16.mxu0 0
        %2785 = vmatpush1.bf16.msra.mxu0 0
        %2786 = vmatprep.subr.bf16.mxu0 0
        %2787 = vmatpush1.bf16.msra.mxu0 0
        %2788 = vmatprep.subr.bf16.mxu0 0
        %2789 = vmatpush1.bf16.msra.mxu0 0
        %2790 = vmatprep.subr.bf16.mxu0 0
        %2791 = vmatpush1.bf16.msra.mxu0 0
        %2792 = vmatprep.subr.bf16.mxu0 0
        %2793 = vmatpush1.bf16.msra.mxu0 0
        %2794 = vmatprep.mubr.bf16.mxu0 0
        %2795 = vmatmul.mubr.bf16.gmra.mrb[0].mxu0 %v2757
        %v2796 = vpop.f32.mrb[0].mxu0
        %v2797 = vadd.f32 0.0, %v2796
        %v2798 = vpop.f32.mrb[0].mxu0
        %v2799 = vpop.f32.mrb[0].mxu0
        %v2800 = vadd.f32 0.0, %v2799
        %v2801 = vpop.f32.mrb[0].mxu0
        %2802 = vmatprep.mubr.bf16.mxu0 0
        %2803 = vmatmul.mubr.bf16.gmra.mrb[0].mxu0 %v2760
        %v2804 = vpop.f32.mrb[0].mxu0
        %v2805 = vadd.f32 0.0, %v2804
        %v2806 = vpop.f32.mrb[0].mxu0
        %v2807 = vpop.f32.mrb[0].mxu0
        %v2808 = vadd.f32 0.0, %v2807
        %v2809 = vpop.f32.mrb[0].mxu0
        %2810 = vdwg.mxu0
        %v2811 = vadd.f32 %v2743, %v2797
        %v2812 = vadd.f32 %v2744, %v2800
        %v2813 = vadd.f32 %v2745, %v2805
        %v2814 = vadd.f32 %v2746, %v2808
        %s2815 = scalar_lea.vmem %s18, 2
        %v2816 = vld [vmem:[%s2815] sm:$0x1]
        %v2818 = vlaneseq
        %v2819 = vshrl.u32 %v2818, 7
        %v2820 = vsub.s32 0, %v2819
        %v2821 = vrot.slane %v2816, %v2820
        %v2823 = vadd.f32 %v2811, %v2821
        %v2824 = vadd.f32 %v2812, %v2821
        %v2825 = vadd.f32 %v2813, %v2821
        %v2826 = vadd.f32 %v2814, %v2821
        %v2827 = vxor.u32 %v2823, 2147483648
        %v2828 = vxor.u32 %v2824, 2147483648
        %v2829 = vxor.u32 %v2825, 2147483648
        %v2830 = vxor.u32 %v2826, 2147483648
        %v2831 = vmul.f32 %v2827, 1.442695
        %v2832 = vpow.pop %v2831
        %v2833 = vmul.f32 %v2828, 1.442695
        %v2834 = vpow.pop %v2833
        %v2835 = vmul.f32 %v2829, 1.442695
        %v2836 = vpow.pop %v2835
        %v2837 = vmul.f32 %v2830, 1.442695
        %v2838 = vpow.pop %v2837
        %v2839 = vadd.f32 %v2832, 1.0
        %v2840 = vadd.f32 %v2834, 1.0
        %v2841 = vadd.f32 %v2836, 1.0
        %v2842 = vadd.f32 %v2838, 1.0
        %v2843 = vrcp.pop %v2839
        %v2844 = vmul.f32 1.0, %v2843
        %v2845 = vrcp.pop %v2840
        %v2846 = vmul.f32 1.0, %v2845
        %v2847 = vrcp.pop %v2841
        %v2848 = vmul.f32 1.0, %v2847
        %v2849 = vrcp.pop %v2842
        %v2850 = vmul.f32 1.0, %v2849
        %2855 = vrot.lane.b32.xlu0 %v2697, 96
        %v2856 = vpop.permute.xlu0 %2855
        %2857 = vrot.lane.b32.xlu0 %v2700, 96
        %v2858 = vpop.permute.xlu0 %2857
        %2859 = vrot.lane.b32.xlu0 %v2705, 96
        %v2860 = vpop.permute.xlu0 %2859
        %2861 = vrot.lane.b32.xlu0 %v2708, 96
        %v2862 = vpop.permute.xlu0 %2861
        %v2867 = vmul.f32 %v2844, %v2856
        %v2868 = vmul.f32 %v2846, %v2858
        %v2869 = vmul.f32 %v2848, %v2860
        %v2870 = vmul.f32 %v2850, %v2862
        %v2871 = vpack.c.bf16 %v2868, %v2867
        %v2872 = vpack.c.bf16 %v2870, %v2869
        %2873 = vmatprep.subr.bf16.mxu0 0
        %2874 = vmatpush1.bf16.msra.mxu0 %v2871
        %2875 = vmatprep.subr.bf16.mxu0 0
        %2876 = vmatpush1.bf16.msra.mxu0 %v2872
        %2877 = vmatprep.subr.bf16.mxu0 0
        %2878 = vmatpush1.bf16.msra.mxu0 0
        %2879 = vmatprep.subr.bf16.mxu0 0
        %2880 = vmatpush1.bf16.msra.mxu0 0
        %2881 = vmatprep.subr.bf16.mxu0 0
        %2882 = vmatpush1.bf16.msra.mxu0 0
        %2883 = vmatprep.subr.bf16.mxu0 0
        %2884 = vmatpush1.bf16.msra.mxu0 0
        %2885 = vmatprep.subr.bf16.mxu0 0
        %2886 = vmatpush1.bf16.msra.mxu0 0
        %2887 = vmatprep.subr.bf16.mxu0 0
        %2888 = vmatpush1.bf16.msra.mxu0 0
        %2889 = vmatprep.subr.bf16.mxu0 0
        %2890 = vmatpush1.bf16.msra.mxu0 0
        %2891 = vmatprep.subr.bf16.mxu0 0
        %2892 = vmatpush1.bf16.msra.mxu0 0
        %2893 = vmatprep.subr.bf16.mxu0 0
        %2894 = vmatpush1.bf16.msra.mxu0 0
        %2895 = vmatprep.subr.bf16.mxu0 0
        %2896 = vmatpush1.bf16.msra.mxu0 0
        %2897 = vmatprep.subr.bf16.mxu0 0
        %2898 = vmatpush1.bf16.msra.mxu0 0
        %2899 = vmatprep.subr.bf16.mxu0 0
        %2900 = vmatpush1.bf16.msra.mxu0 0
        %2901 = vmatprep.subr.bf16.mxu0 0
        %2902 = vmatpush1.bf16.msra.mxu0 0
        %2903 = vmatprep.subr.bf16.mxu0 0
        %2904 = vmatpush1.bf16.msra.mxu0 0
        %2905 = vmatprep.mubr.bf16.mxu0 0
        %2906 = vmatmul.mubr.bf16.gmra.mrb[0].mxu0 %v1722
        %v2907 = vpop.f32.mrb[0].mxu0
        %v2908 = vadd.f32 0.0, %v2907
        %v2909 = vpop.f32.mrb[0].mxu0
        %v2910 = vpop.f32.mrb[0].mxu0
        %v2911 = vadd.f32 0.0, %v2910
        %v2912 = vpop.f32.mrb[0].mxu0
        %2913 = vdwg.mxu0
        %v2914 = vpack.c.bf16 %v2846, %v2844
        %v2915 = vpack.c.bf16 %v2850, %v2848
        %2916 = vmatprep.subr.bf16.mxu0 0
        %2917 = vmatpush1.bf16.msra.mxu0 %v2914
        %2918 = vmatprep.subr.bf16.mxu0 0
        %2919 = vmatpush1.bf16.msra.mxu0 %v2915
        %2920 = vmatprep.subr.bf16.mxu0 0
        %2921 = vmatpush1.bf16.msra.mxu0 0
        %2922 = vmatprep.subr.bf16.mxu0 0
        %2923 = vmatpush1.bf16.msra.mxu0 0
        %2924 = vmatprep.subr.bf16.mxu0 0
        %2925 = vmatpush1.bf16.msra.mxu0 0
        %2926 = vmatprep.subr.bf16.mxu0 0
        %2927 = vmatpush1.bf16.msra.mxu0 0
        %2928 = vmatprep.subr.bf16.mxu0 0
        %2929 = vmatpush1.bf16.msra.mxu0 0
        %2930 = vmatprep.subr.bf16.mxu0 0
        %2931 = vmatpush1.bf16.msra.mxu0 0
        %2932 = vmatprep.subr.bf16.mxu0 0
        %2933 = vmatpush1.bf16.msra.mxu0 0
        %2934 = vmatprep.subr.bf16.mxu0 0
        %2935 = vmatpush1.bf16.msra.mxu0 0
        %2936 = vmatprep.subr.bf16.mxu0 0
        %2937 = vmatpush1.bf16.msra.mxu0 0
        %2938 = vmatprep.subr.bf16.mxu0 0
        %2939 = vmatpush1.bf16.msra.mxu0 0
        %2940 = vmatprep.subr.bf16.mxu0 0
        %2941 = vmatpush1.bf16.msra.mxu0 0
        %2942 = vmatprep.subr.bf16.mxu0 0
        %2943 = vmatpush1.bf16.msra.mxu0 0
        %2944 = vmatprep.subr.bf16.mxu0 0
        %2945 = vmatpush1.bf16.msra.mxu0 0
        %2946 = vmatprep.subr.bf16.mxu0 0
        %2947 = vmatpush1.bf16.msra.mxu0 0
        %2948 = vmatprep.mubr.bf16.mxu0 0
        %2949 = vmatmul.mubr.bf16.gmra.mrb[0].mxu0 %v1722
        %v2950 = vpop.f32.mrb[0].mxu0
        %v2951 = vadd.f32 1e-06, %v2950
        %v2952 = vpop.f32.mrb[0].mxu0
        %v2953 = vpop.f32.mrb[0].mxu0
        %v2954 = vadd.f32 1e-06, %v2953
        %v2955 = vpop.f32.mrb[0].mxu0
        %2956 = vdwg.mxu0
        %v2957 = vrcp.pop %v2951
        %v2958 = vrcp.pop %v2954
        %v2959 = vmul.f32 %v2908, %v2957
        %v2960 = vmul.f32 %v2911, %v2958
        %2963 = vrot.lane.b32.xlu0 %v2959, 96
        %v2964 = vpop.permute.xlu0 %2963
        %2965 = vrot.lane.b32.xlu0 %v2960, 96
        %v2966 = vpop.permute.xlu0 %2965
        %v2969 = vadd.f32 %v2655, %v2964
        %v2970 = vadd.f32 %v2658, %v2966
        %s2971 = scalar_lea.vmem %s19, 8
        %v2972 = vld [vmem:[%s2971] sm:$0xf]
        %v2973 = vlaneseq
        %v2974 = vshrl.u32 %v2973, 7
        %v2975 = vsub.s32 0, %v2974
        %v2976 = vrot.slane %v2972, %v2975
        %2978 = vrot.lane.b32.xlu0 %v2976, 96
        %v2979 = vpop.permute.xlu0 %2978
        %v2981 = vmul.f32 %v2969, %v2979
        %v2982 = vmul.f32 %v2970, %v2979
        %v2983 = vlaneseq
        %v2984 = vshrl.u32 %v2983, 7
        %v2985 = vsub.s32 1, %v2984
        %v2986 = vrot.slane %v2972, %v2985
        %2988 = vrot.lane.b32.xlu0 %v2986, 96
        %v2989 = vpop.permute.xlu0 %2988
        %v2991 = vadd.f32 %v2981, %v2989
        %v2992 = vadd.f32 %v2982, %v2989
        %v2993 = vxor.u32 %v2991, 2147483648
        %v2994 = vxor.u32 %v2992, 2147483648
        %v2995 = vmul.f32 %v2993, 1.442695
        %v2996 = vpow.pop %v2995
        %v2997 = vmul.f32 %v2994, 1.442695
        %v2998 = vpow.pop %v2997
        %v2999 = vadd.f32 %v2996, 1.0
        %v3000 = vadd.f32 %v2998, 1.0
        %v3001 = vrcp.pop %v2999
        %v3002 = vmul.f32 1.0, %v3001
        %v3003 = vrcp.pop %v3000
        %v3004 = vmul.f32 1.0, %v3003
        %v3005 = vmul.f32 %v2991, %v3002
        %v3006 = vmul.f32 %v2992, %v3004
        %3009 = vrot.lane.b32.xlu0 %v3005, 32
        %v3010 = vpop.permute.xlu0 %3009
        %3011 = vrot.lane.b32.xlu0 %v3006, 32
        %v3012 = vpop.permute.xlu0 %3011
        %v3015 = vadd.f32 %v1865, %v3010
        %v3016 = vadd.f32 %v1866, %v3012
        %v3017 = vlaneseq
        %v3018 = vshrl.u32 %v3017, 7
        %v3019 = vsub.s32 2, %v3018
        %v3020 = vrot.slane %v2972, %v3019
        %v3021 = vmul.f32 %v2823, %v3020
        %v3022 = vmul.f32 %v2824, %v3020
        %v3023 = vmul.f32 %v2825, %v3020
        %v3024 = vmul.f32 %v2826, %v3020
        %v3025 = vlaneseq
        %v3026 = vshrl.u32 %v3025, 7
        %v3027 = vsub.s32 3, %v3026
        %v3028 = vrot.slane %v2972, %v3027
        %v3029 = vadd.f32 %v3021, %v3028
        %v3030 = vadd.f32 %v3022, %v3028
        %v3031 = vadd.f32 %v3023, %v3028
        %v3032 = vadd.f32 %v3024, %v3028
        %v3033 = vxor.u32 %v3029, 2147483648
        %v3034 = vxor.u32 %v3030, 2147483648
        %v3035 = vxor.u32 %v3031, 2147483648
        %v3036 = vxor.u32 %v3032, 2147483648
        %v3037 = vmul.f32 %v3033, 1.442695
        %v3038 = vpow.pop %v3037
        %v3039 = vmul.f32 %v3034, 1.442695
        %v3040 = vpow.pop %v3039
        %v3041 = vmul.f32 %v3035, 1.442695
        %v3042 = vpow.pop %v3041
        %v3043 = vmul.f32 %v3036, 1.442695
        %v3044 = vpow.pop %v3043
        %v3045 = vadd.f32 %v3038, 1.0
        %v3046 = vadd.f32 %v3040, 1.0
        %v3047 = vadd.f32 %v3042, 1.0
        %v3048 = vadd.f32 %v3044, 1.0
        %v3049 = vrcp.pop %v3045
        %v3050 = vmul.f32 1.0, %v3049
        %v3051 = vrcp.pop %v3046
        %v3052 = vmul.f32 1.0, %v3051
        %v3053 = vrcp.pop %v3047
        %v3054 = vmul.f32 1.0, %v3053
        %v3055 = vrcp.pop %v3048
        %v3056 = vmul.f32 1.0, %v3055
        %v3057 = vmul.f32 %v3029, %v3050
        %v3058 = vmul.f32 %v3030, %v3052
        %v3059 = vmul.f32 %v3031, %v3054
        %v3060 = vmul.f32 %v3032, %v3056
        %v3061 = vadd.f32 %v2529, %v3057
        %v3062 = vadd.f32 %v2530, %v3058
        %v3063 = vadd.f32 %v2531, %v3059
        %v3064 = vadd.f32 %v2532, %v3060
        %s3065 = scalar_lea.vmem %s15, 96
        %v3066 = vld [vmem:[%s3065] sm:$0xff]
        %v3067 = vld [vmem:[%s3065 + $0x8] sm:$0xff]
        %v3068 = vld [vmem:[%s3065 + $0x10] sm:$0xff]
        %v3069 = vld [vmem:[%s3065 + $0x18] sm:$0xff]
        %v3070 = vpack.c.bf16 %v3062, %v3061
        %v3071 = vpack.c.bf16 %v3064, %v3063
        %v3072 = vpack.c.bf16 %v3067, %v3066
        %v3073 = vpack.c.bf16 %v3069, %v3068
        %s3074 = scalar_lea.vmem %s16, 3
        %v3075 = vld [vmem:[%s3074] sm:$0x1]
        %v3077 = vlaneseq
        %v3078 = vshrl.u32 %v3077, 7
        %v3079 = vsub.s32 0, %v3078
        %v3080 = vrot.slane %v3075, %v3079
        %v3083 = vsel %vm995, %v3070, 0
        %v3086 = vsel %vm995, %v3071, 0
        %3088 = vmatprep.subr.bf16.mxu0 0
        %3089 = vmatpush1.bf16.msra.mxu0 %v3072
        %3090 = vmatprep.subr.bf16.mxu0 0
        %3091 = vmatpush1.bf16.msra.mxu0 %v3073
        %3092 = vmatprep.subr.bf16.mxu0 0
        %3093 = vmatpush1.bf16.msra.mxu0 0
        %3094 = vmatprep.subr.bf16.mxu0 0
        %3095 = vmatpush1.bf16.msra.mxu0 0
        %3096 = vmatprep.subr.bf16.mxu0 0
        %3097 = vmatpush1.bf16.msra.mxu0 0
        %3098 = vmatprep.subr.bf16.mxu0 0
        %3099 = vmatpush1.bf16.msra.mxu0 0
        %3100 = vmatprep.subr.bf16.mxu0 0
        %3101 = vmatpush1.bf16.msra.mxu0 0
        %3102 = vmatprep.subr.bf16.mxu0 0
        %3103 = vmatpush1.bf16.msra.mxu0 0
        %3104 = vmatprep.subr.bf16.mxu0 0
        %3105 = vmatpush1.bf16.msra.mxu0 0
        %3106 = vmatprep.subr.bf16.mxu0 0
        %3107 = vmatpush1.bf16.msra.mxu0 0
        %3108 = vmatprep.subr.bf16.mxu0 0
        %3109 = vmatpush1.bf16.msra.mxu0 0
        %3110 = vmatprep.subr.bf16.mxu0 0
        %3111 = vmatpush1.bf16.msra.mxu0 0
        %3112 = vmatprep.subr.bf16.mxu0 0
        %3113 = vmatpush1.bf16.msra.mxu0 0
        %3114 = vmatprep.subr.bf16.mxu0 0
        %3115 = vmatpush1.bf16.msra.mxu0 0
        %3116 = vmatprep.subr.bf16.mxu0 0
        %3117 = vmatpush1.bf16.msra.mxu0 0
        %3118 = vmatprep.subr.bf16.mxu0 0
        %3119 = vmatpush1.bf16.msra.mxu0 0
        %3120 = vmatprep.mubr.bf16.mxu0 0
        %3121 = vmatmul.mubr.bf16.gmra.mrb[0].mxu0 %v3083
        %v3122 = vpop.f32.mrb[0].mxu0
        %v3123 = vadd.f32 %v3080, %v3122
        %v3124 = vpop.f32.mrb[0].mxu0
        %v3125 = vpop.f32.mrb[0].mxu0
        %v3126 = vadd.f32 %v3080, %v3125
        %v3127 = vpop.f32.mrb[0].mxu0
        %3128 = vmatprep.mubr.bf16.mxu0 0
        %3129 = vmatmul.mubr.bf16.gmra.mrb[0].mxu0 %v3086
        %v3130 = vpop.f32.mrb[0].mxu0
        %v3131 = vadd.f32 %v3080, %v3130
        %v3132 = vpop.f32.mrb[0].mxu0
        %v3133 = vpop.f32.mrb[0].mxu0
        %v3134 = vadd.f32 %v3080, %v3133
        %v3135 = vpop.f32.mrb[0].mxu0
        %3136 = vdwg.mxu0
        %v3137 = vpack.c.bf16 %v3126, %v3123
        %v3138 = vpack.c.bf16 %v3134, %v3131
        %3139 = vmatprep.subr.bf16.mxu0 0
        %3140 = vmatpush1.bf16.msra.mxu0 %v3137
        %3141 = vmatprep.subr.bf16.mxu0 0
        %3142 = vmatpush1.bf16.msra.mxu0 %v3138
        %3143 = vmatprep.subr.bf16.mxu0 0
        %3144 = vmatpush1.bf16.msra.mxu0 0
        %3145 = vmatprep.subr.bf16.mxu0 0
        %3146 = vmatpush1.bf16.msra.mxu0 0
        %3147 = vmatprep.subr.bf16.mxu0 0
        %3148 = vmatpush1.bf16.msra.mxu0 0
        %3149 = vmatprep.subr.bf16.mxu0 0
        %3150 = vmatpush1.bf16.msra.mxu0 0
        %3151 = vmatprep.subr.bf16.mxu0 0
        %3152 = vmatpush1.bf16.msra.mxu0 0
        %3153 = vmatprep.subr.bf16.mxu0 0
        %3154 = vmatpush1.bf16.msra.mxu0 0
        %3155 = vmatprep.subr.bf16.mxu0 0
        %3156 = vmatpush1.bf16.msra.mxu0 0
        %3157 = vmatprep.subr.bf16.mxu0 0
        %3158 = vmatpush1.bf16.msra.mxu0 0
        %3159 = vmatprep.subr.bf16.mxu0 0
        %3160 = vmatpush1.bf16.msra.mxu0 0
        %3161 = vmatprep.subr.bf16.mxu0 0
        %3162 = vmatpush1.bf16.msra.mxu0 0
        %3163 = vmatprep.subr.bf16.mxu0 0
        %3164 = vmatpush1.bf16.msra.mxu0 0
        %3165 = vmatprep.subr.bf16.mxu0 0
        %3166 = vmatpush1.bf16.msra.mxu0 0
        %3167 = vmatprep.subr.bf16.mxu0 0
        %3168 = vmatpush1.bf16.msra.mxu0 0
        %3169 = vmatprep.subr.bf16.mxu0 0
        %3170 = vmatpush1.bf16.msra.mxu0 0
        %3171 = vmatprep.mubr.bf16.mxu0 0
        %3172 = vmatmul.mubr.bf16.gmra.mrb[0].mxu0 %v2020
        %v3173 = vpop.f32.mrb[0].mxu0
        %v3174 = vadd.f32 0.0, %v3173
        %v3175 = vpop.f32.mrb[0].mxu0
        %v3176 = vpop.f32.mrb[0].mxu0
        %v3177 = vadd.f32 0.0, %v3176
        %v3178 = vpop.f32.mrb[0].mxu0
        %3179 = vmatprep.mubr.bf16.mxu0 0
        %3180 = vmatmul.mubr.bf16.gmra.mrb[0].mxu0 %v2023
        %v3181 = vpop.f32.mrb[0].mxu0
        %v3182 = vadd.f32 0.0, %v3181
        %v3183 = vpop.f32.mrb[0].mxu0
        %v3184 = vpop.f32.mrb[0].mxu0
        %v3185 = vadd.f32 0.0, %v3184
        %v3186 = vpop.f32.mrb[0].mxu0
        %3187 = vmatprep.mubr.bf16.mxu0 0
        %3188 = vmatmul.mubr.bf16.gmra.mrb[0].mxu0 %v2026
        %v3189 = vpop.f32.mrb[0].mxu0
        %v3190 = vadd.f32 0.0, %v3189
        %v3191 = vpop.f32.mrb[0].mxu0
        %v3192 = vpop.f32.mrb[0].mxu0
        %v3193 = vadd.f32 0.0, %v3192
        %v3194 = vpop.f32.mrb[0].mxu0
        %3195 = vmatprep.mubr.bf16.mxu0 0
        %3196 = vmatmul.mubr.bf16.gmra.mrb[0].mxu0 %v2029
        %v3197 = vpop.f32.mrb[0].mxu0
        %v3198 = vadd.f32 0.0, %v3197
        %v3199 = vpop.f32.mrb[0].mxu0
        %v3200 = vpop.f32.mrb[0].mxu0
        %v3201 = vadd.f32 0.0, %v3200
        %v3202 = vpop.f32.mrb[0].mxu0
        %3203 = vmatprep.mubr.bf16.mxu0 0
        %3204 = vmatmul.mubr.bf16.gmra.mrb[0].mxu0 %v2032
        %v3205 = vpop.f32.mrb[0].mxu0
        %v3206 = vadd.f32 0.0, %v3205
        %v3207 = vpop.f32.mrb[0].mxu0
        %v3208 = vpop.f32.mrb[0].mxu0
        %v3209 = vadd.f32 0.0, %v3208
        %v3210 = vpop.f32.mrb[0].mxu0
        %3211 = vmatprep.mubr.bf16.mxu0 0
        %3212 = vmatmul.mubr.bf16.gmra.mrb[0].mxu0 %v2035
        %v3213 = vpop.f32.mrb[0].mxu0
        %v3214 = vadd.f32 0.0, %v3213
        %v3215 = vpop.f32.mrb[0].mxu0
        %v3216 = vpop.f32.mrb[0].mxu0
        %v3217 = vadd.f32 0.0, %v3216
        %v3218 = vpop.f32.mrb[0].mxu0
        %3219 = vdwg.mxu0
        %3226 = vrot.lane.b32.xlu0 %v3198, 64
        %v3227 = vpop.permute.xlu0 %3226
        %3228 = vrot.lane.b32.xlu0 %v3201, 64
        %v3229 = vpop.permute.xlu0 %3228
        %3230 = vrot.lane.b32.xlu0 %v3206, 64
        %v3231 = vpop.permute.xlu0 %3230
        %3232 = vrot.lane.b32.xlu0 %v3209, 64
        %v3233 = vpop.permute.xlu0 %3232
        %3234 = vrot.lane.b32.xlu0 %v3214, 64
        %v3235 = vpop.permute.xlu0 %3234
        %3236 = vrot.lane.b32.xlu0 %v3217, 64
        %v3237 = vpop.permute.xlu0 %3236
        %v3244 = vadd.f32 %v3174, %v3227
        %v3245 = vadd.f32 %v3177, %v3229
        %v3246 = vadd.f32 %v3182, %v3231
        %v3247 = vadd.f32 %v3185, %v3233
        %v3248 = vadd.f32 %v3190, %v3235
        %v3249 = vadd.f32 %v3193, %v3237
        %s3250 = scalar_lea.vmem %s17, 96
        %v3251 = vld [vmem:[%s3250] sm:$0xff]
        %v3252 = vld [vmem:[%s3250 + $0x8] sm:$0xff]
        %v3253 = vld [vmem:[%s3250 + $0x10] sm:$0xff]
        %v3254 = vld [vmem:[%s3250 + $0x18] sm:$0xff]
        %v3255 = vpack.c.bf16 %v2596, %v2595
        %v3256 = vpack.c.bf16 %v2598, %v2597
        %v3257 = vpack.c.bf16 %v2600, %v2599
        %v3258 = vpack.c.bf16 %v3252, %v3251
        %v3259 = vpack.c.bf16 %v3254, %v3253
        %v3261 = vsel %vm995, %v3255, 0
        %v3264 = vsel %vm995, %v3256, 0
        %v3267 = vsel %vm995, %v3257, 0
        %3269 = vmatprep.subr.bf16.mxu0 0
        %3270 = vmatpush1.bf16.msra.mxu0 %v3258
        %3271 = vmatprep.subr.bf16.mxu0 0
        %3272 = vmatpush1.bf16.msra.mxu0 %v3259
        %3273 = vmatprep.subr.bf16.mxu0 0
        %3274 = vmatpush1.bf16.msra.mxu0 0
        %3275 = vmatprep.subr.bf16.mxu0 0
        %3276 = vmatpush1.bf16.msra.mxu0 0
        %3277 = vmatprep.subr.bf16.mxu0 0
        %3278 = vmatpush1.bf16.msra.mxu0 0
        %3279 = vmatprep.subr.bf16.mxu0 0
        %3280 = vmatpush1.bf16.msra.mxu0 0
        %3281 = vmatprep.subr.bf16.mxu0 0
        %3282 = vmatpush1.bf16.msra.mxu0 0
        %3283 = vmatprep.subr.bf16.mxu0 0
        %3284 = vmatpush1.bf16.msra.mxu0 0
        %3285 = vmatprep.subr.bf16.mxu0 0
        %3286 = vmatpush1.bf16.msra.mxu0 0
        %3287 = vmatprep.subr.bf16.mxu0 0
        %3288 = vmatpush1.bf16.msra.mxu0 0
        %3289 = vmatprep.subr.bf16.mxu0 0
        %3290 = vmatpush1.bf16.msra.mxu0 0
        %3291 = vmatprep.subr.bf16.mxu0 0
        %3292 = vmatpush1.bf16.msra.mxu0 0
        %3293 = vmatprep.subr.bf16.mxu0 0
        %3294 = vmatpush1.bf16.msra.mxu0 0
        %3295 = vmatprep.subr.bf16.mxu0 0
        %3296 = vmatpush1.bf16.msra.mxu0 0
        %3297 = vmatprep.subr.bf16.mxu0 0
        %3298 = vmatpush1.bf16.msra.mxu0 0
        %3299 = vmatprep.subr.bf16.mxu0 0
        %3300 = vmatpush1.bf16.msra.mxu0 0
        %3301 = vmatprep.mubr.bf16.mxu0 0
        %3302 = vmatmul.mubr.bf16.gmra.mrb[0].mxu0 %v3261
        %v3303 = vpop.f32.mrb[0].mxu0
        %v3304 = vadd.f32 0.0, %v3303
        %v3305 = vpop.f32.mrb[0].mxu0
        %v3306 = vpop.f32.mrb[0].mxu0
        %v3307 = vadd.f32 0.0, %v3306
        %v3308 = vpop.f32.mrb[0].mxu0
        %3309 = vmatprep.mubr.bf16.mxu0 0
        %3310 = vmatmul.mubr.bf16.gmra.mrb[0].mxu0 %v3264
        %v3311 = vpop.f32.mrb[0].mxu0
        %v3312 = vadd.f32 0.0, %v3311
        %v3313 = vpop.f32.mrb[0].mxu0
        %v3314 = vpop.f32.mrb[0].mxu0
        %v3315 = vadd.f32 0.0, %v3314
        %v3316 = vpop.f32.mrb[0].mxu0
        %3317 = vmatprep.mubr.bf16.mxu0 0
        %3318 = vmatmul.mubr.bf16.gmra.mrb[0].mxu0 %v3267
        %v3319 = vpop.f32.mrb[0].mxu0
        %v3320 = vadd.f32 0.0, %v3319
        %v3321 = vpop.f32.mrb[0].mxu0
        %v3322 = vpop.f32.mrb[0].mxu0
        %v3323 = vadd.f32 0.0, %v3322
        %v3324 = vpop.f32.mrb[0].mxu0
        %3325 = vdwg.mxu0
        %v3326 = vadd.f32 %v3244, %v3304
        %v3327 = vadd.f32 %v3245, %v3307
        %v3328 = vadd.f32 %v3246, %v3312
        %v3329 = vadd.f32 %v3247, %v3315
        %v3330 = vadd.f32 %v3248, %v3320
        %v3331 = vadd.f32 %v3249, %v3323
        %s3332 = scalar_lea.vmem %s18, 3
        %v3333 = vld [vmem:[%s3332] sm:$0x1]
        %v3335 = vlaneseq
        %v3336 = vshrl.u32 %v3335, 7
        %v3337 = vsub.s32 0, %v3336
        %v3338 = vrot.slane %v3333, %v3337
        %v3340 = vadd.f32 %v3326, %v3338
        %v3341 = vadd.f32 %v3327, %v3338
        %v3342 = vadd.f32 %v3328, %v3338
        %v3343 = vadd.f32 %v3329, %v3338
        %v3344 = vadd.f32 %v3330, %v3338
        %v3345 = vadd.f32 %v3331, %v3338
        %v3346 = vxor.u32 %v3340, 2147483648
        %v3347 = vxor.u32 %v3341, 2147483648
        %v3348 = vxor.u32 %v3342, 2147483648
        %v3349 = vxor.u32 %v3343, 2147483648
        %v3350 = vxor.u32 %v3344, 2147483648
        %v3351 = vxor.u32 %v3345, 2147483648
        %v3352 = vmul.f32 %v3346, 1.442695
        %v3353 = vpow.pop %v3352
        %v3354 = vmul.f32 %v3347, 1.442695
        %v3355 = vpow.pop %v3354
        %v3356 = vmul.f32 %v3348, 1.442695
        %v3357 = vpow.pop %v3356
        %v3358 = vmul.f32 %v3349, 1.442695
        %v3359 = vpow.pop %v3358
        %v3360 = vmul.f32 %v3350, 1.442695
        %v3361 = vpow.pop %v3360
        %v3362 = vmul.f32 %v3351, 1.442695
        %v3363 = vpow.pop %v3362
        %v3364 = vadd.f32 %v3353, 1.0
        %v3365 = vadd.f32 %v3355, 1.0
        %v3366 = vadd.f32 %v3357, 1.0
        %v3367 = vadd.f32 %v3359, 1.0
        %v3368 = vadd.f32 %v3361, 1.0
        %v3369 = vadd.f32 %v3363, 1.0
        %v3370 = vrcp.pop %v3364
        %v3371 = vmul.f32 1.0, %v3370
        %v3372 = vrcp.pop %v3365
        %v3373 = vmul.f32 1.0, %v3372
        %v3374 = vrcp.pop %v3366
        %v3375 = vmul.f32 1.0, %v3374
        %v3376 = vrcp.pop %v3367
        %v3377 = vmul.f32 1.0, %v3376
        %v3378 = vrcp.pop %v3368
        %v3379 = vmul.f32 1.0, %v3378
        %v3380 = vrcp.pop %v3369
        %v3381 = vmul.f32 1.0, %v3380
        %3388 = vrot.lane.b32.xlu0 %v3174, 96
        %v3389 = vpop.permute.xlu0 %3388
        %3390 = vrot.lane.b32.xlu0 %v3177, 96
        %v3391 = vpop.permute.xlu0 %3390
        %3392 = vrot.lane.b32.xlu0 %v3182, 96
        %v3393 = vpop.permute.xlu0 %3392
        %3394 = vrot.lane.b32.xlu0 %v3185, 96
        %v3395 = vpop.permute.xlu0 %3394
        %3396 = vrot.lane.b32.xlu0 %v3190, 96
        %v3397 = vpop.permute.xlu0 %3396
        %3398 = vrot.lane.b32.xlu0 %v3193, 96
        %v3399 = vpop.permute.xlu0 %3398
        %v3406 = vmul.f32 %v3371, %v3389
        %v3407 = vmul.f32 %v3373, %v3391
        %v3408 = vmul.f32 %v3375, %v3393
        %v3409 = vmul.f32 %v3377, %v3395
        %v3410 = vmul.f32 %v3379, %v3397
        %v3411 = vmul.f32 %v3381, %v3399
        %v3412 = vpack.c.bf16 %v3407, %v3406
        %v3413 = vpack.c.bf16 %v3409, %v3408
        %v3414 = vpack.c.bf16 %v3411, %v3410
        %3415 = vmatprep.subr.bf16.mxu0 0
        %3416 = vmatpush1.bf16.msra.mxu0 %v3412
        %3417 = vmatprep.subr.bf16.mxu0 0
        %3418 = vmatpush1.bf16.msra.mxu0 %v3413
        %3419 = vmatprep.subr.bf16.mxu0 0
        %3420 = vmatpush1.bf16.msra.mxu0 %v3414
        %3421 = vmatprep.subr.bf16.mxu0 0
        %3422 = vmatpush1.bf16.msra.mxu0 0
        %3423 = vmatprep.subr.bf16.mxu0 0
        %3424 = vmatpush1.bf16.msra.mxu0 0
        %3425 = vmatprep.subr.bf16.mxu0 0
        %3426 = vmatpush1.bf16.msra.mxu0 0
        %3427 = vmatprep.subr.bf16.mxu0 0
        %3428 = vmatpush1.bf16.msra.mxu0 0
        %3429 = vmatprep.subr.bf16.mxu0 0
        %3430 = vmatpush1.bf16.msra.mxu0 0
        %3431 = vmatprep.subr.bf16.mxu0 0
        %3432 = vmatpush1.bf16.msra.mxu0 0
        %3433 = vmatprep.subr.bf16.mxu0 0
        %3434 = vmatpush1.bf16.msra.mxu0 0
        %3435 = vmatprep.subr.bf16.mxu0 0
        %3436 = vmatpush1.bf16.msra.mxu0 0
        %3437 = vmatprep.subr.bf16.mxu0 0
        %3438 = vmatpush1.bf16.msra.mxu0 0
        %3439 = vmatprep.subr.bf16.mxu0 0
        %3440 = vmatpush1.bf16.msra.mxu0 0
        %3441 = vmatprep.subr.bf16.mxu0 0
        %3442 = vmatpush1.bf16.msra.mxu0 0
        %3443 = vmatprep.subr.bf16.mxu0 0
        %3444 = vmatpush1.bf16.msra.mxu0 0
        %3445 = vmatprep.subr.bf16.mxu0 0
        %3446 = vmatpush1.bf16.msra.mxu0 0
        %3447 = vmatprep.mubr.bf16.mxu0 0
        %3448 = vmatmul.mubr.bf16.gmra.mrb[0].mxu0 %v2325
        %v3449 = vpop.f32.mrb[0].mxu0
        %v3450 = vadd.f32 0.0, %v3449
        %v3451 = vpop.f32.mrb[0].mxu0
        %v3452 = vpop.f32.mrb[0].mxu0
        %v3453 = vadd.f32 0.0, %v3452
        %v3454 = vpop.f32.mrb[0].mxu0
        %3455 = vmatprep.mubr.bf16.mxu0 0
        %3456 = vmatmul.mubr.bf16.gmra.mrb[0].mxu0 %v2328
        %v3457 = vpop.f32.mrb[0].mxu0
        %v3458 = vadd.f32 0.0, %v3457
        %v3459 = vpop.f32.mrb[0].mxu0
        %v3460 = vpop.f32.mrb[0].mxu0
        %v3461 = vadd.f32 0.0, %v3460
        %v3462 = vpop.f32.mrb[0].mxu0
        %3463 = vdwg.mxu0
        %v3464 = vpack.c.bf16 %v3373, %v3371
        %v3465 = vpack.c.bf16 %v3377, %v3375
        %v3466 = vpack.c.bf16 %v3381, %v3379
        %3467 = vmatprep.subr.bf16.mxu0 0
        %3468 = vmatpush1.bf16.msra.mxu0 %v3464
        %3469 = vmatprep.subr.bf16.mxu0 0
        %3470 = vmatpush1.bf16.msra.mxu0 %v3465
        %3471 = vmatprep.subr.bf16.mxu0 0
        %3472 = vmatpush1.bf16.msra.mxu0 %v3466
        %3473 = vmatprep.subr.bf16.mxu0 0
        %3474 = vmatpush1.bf16.msra.mxu0 0
        %3475 = vmatprep.subr.bf16.mxu0 0
        %3476 = vmatpush1.bf16.msra.mxu0 0
        %3477 = vmatprep.subr.bf16.mxu0 0
        %3478 = vmatpush1.bf16.msra.mxu0 0
        %3479 = vmatprep.subr.bf16.mxu0 0
        %3480 = vmatpush1.bf16.msra.mxu0 0
        %3481 = vmatprep.subr.bf16.mxu0 0
        %3482 = vmatpush1.bf16.msra.mxu0 0
        %3483 = vmatprep.subr.bf16.mxu0 0
        %3484 = vmatpush1.bf16.msra.mxu0 0
        %3485 = vmatprep.subr.bf16.mxu0 0
        %3486 = vmatpush1.bf16.msra.mxu0 0
        %3487 = vmatprep.subr.bf16.mxu0 0
        %3488 = vmatpush1.bf16.msra.mxu0 0
        %3489 = vmatprep.subr.bf16.mxu0 0
        %3490 = vmatpush1.bf16.msra.mxu0 0
        %3491 = vmatprep.subr.bf16.mxu0 0
        %3492 = vmatpush1.bf16.msra.mxu0 0
        %3493 = vmatprep.subr.bf16.mxu0 0
        %3494 = vmatpush1.bf16.msra.mxu0 0
        %3495 = vmatprep.subr.bf16.mxu0 0
        %3496 = vmatpush1.bf16.msra.mxu0 0
        %3497 = vmatprep.subr.bf16.mxu0 0
        %3498 = vmatpush1.bf16.msra.mxu0 0
        %3499 = vmatprep.mubr.bf16.mxu0 0
        %3500 = vmatmul.mubr.bf16.gmra.mrb[0].mxu0 %v2325
        %v3501 = vpop.f32.mrb[0].mxu0
        %v3502 = vadd.f32 1e-06, %v3501
        %v3503 = vpop.f32.mrb[0].mxu0
        %v3504 = vpop.f32.mrb[0].mxu0
        %v3505 = vadd.f32 1e-06, %v3504
        %v3506 = vpop.f32.mrb[0].mxu0
        %3507 = vmatprep.mubr.bf16.mxu0 0
        %3508 = vmatmul.mubr.bf16.gmra.mrb[0].mxu0 %v2328
        %v3509 = vpop.f32.mrb[0].mxu0
        %v3510 = vadd.f32 1e-06, %v3509
        %v3511 = vpop.f32.mrb[0].mxu0
        %v3512 = vpop.f32.mrb[0].mxu0
        %v3513 = vadd.f32 1e-06, %v3512
        %v3514 = vpop.f32.mrb[0].mxu0
        %3515 = vdwg.mxu0
        %v3516 = vrcp.pop %v3502
        %v3517 = vrcp.pop %v3505
        %v3518 = vrcp.pop %v3510
        %v3519 = vrcp.pop %v3513
        %v3520 = vmul.f32 %v3450, %v3516
        %v3521 = vmul.f32 %v3453, %v3517
        %v3522 = vmul.f32 %v3458, %v3518
        %v3523 = vmul.f32 %v3461, %v3519
        %3528 = vrot.lane.b32.xlu0 %v3520, 96
        %v3529 = vpop.permute.xlu0 %3528
        %3530 = vrot.lane.b32.xlu0 %v3521, 96
        %v3531 = vpop.permute.xlu0 %3530
        %3532 = vrot.lane.b32.xlu0 %v3522, 96
        %v3533 = vpop.permute.xlu0 %3532
        %3534 = vrot.lane.b32.xlu0 %v3523, 96
        %v3535 = vpop.permute.xlu0 %3534
        %v3540 = vadd.f32 %v3123, %v3529
        %v3541 = vadd.f32 %v3126, %v3531
        %v3542 = vadd.f32 %v3131, %v3533
        %v3543 = vadd.f32 %v3134, %v3535
        %s3544 = scalar_lea.vmem %s19, 12
        %v3545 = vld [vmem:[%s3544] sm:$0xf]
        %v3546 = vlaneseq
        %v3547 = vshrl.u32 %v3546, 7
        %v3548 = vsub.s32 0, %v3547
        %v3549 = vrot.slane %v3545, %v3548
        %3551 = vrot.lane.b32.xlu0 %v3549, 96
        %v3552 = vpop.permute.xlu0 %3551
        %v3554 = vmul.f32 %v3540, %v3552
        %v3555 = vmul.f32 %v3541, %v3552
        %v3556 = vmul.f32 %v3542, %v3552
        %v3557 = vmul.f32 %v3543, %v3552
        %v3558 = vlaneseq
        %v3559 = vshrl.u32 %v3558, 7
        %v3560 = vsub.s32 1, %v3559
        %v3561 = vrot.slane %v3545, %v3560
        %3563 = vrot.lane.b32.xlu0 %v3561, 96
        %v3564 = vpop.permute.xlu0 %3563
        %v3566 = vadd.f32 %v3554, %v3564
        %v3567 = vadd.f32 %v3555, %v3564
        %v3568 = vadd.f32 %v3556, %v3564
        %v3569 = vadd.f32 %v3557, %v3564
        %v3570 = vxor.u32 %v3566, 2147483648
        %v3571 = vxor.u32 %v3567, 2147483648
        %v3572 = vxor.u32 %v3568, 2147483648
        %v3573 = vxor.u32 %v3569, 2147483648
        %v3574 = vmul.f32 %v3570, 1.442695
        %v3575 = vpow.pop %v3574
        %v3576 = vmul.f32 %v3571, 1.442695
        %v3577 = vpow.pop %v3576
        %v3578 = vmul.f32 %v3572, 1.442695
        %v3579 = vpow.pop %v3578
        %v3580 = vmul.f32 %v3573, 1.442695
        %v3581 = vpow.pop %v3580
        %v3582 = vadd.f32 %v3575, 1.0
        %v3583 = vadd.f32 %v3577, 1.0
        %v3584 = vadd.f32 %v3579, 1.0
        %v3585 = vadd.f32 %v3581, 1.0
        %v3586 = vrcp.pop %v3582
        %v3587 = vmul.f32 1.0, %v3586
        %v3588 = vrcp.pop %v3583
        %v3589 = vmul.f32 1.0, %v3588
        %v3590 = vrcp.pop %v3584
        %v3591 = vmul.f32 1.0, %v3590
        %v3592 = vrcp.pop %v3585
        %v3593 = vmul.f32 1.0, %v3592
        %v3594 = vmul.f32 %v3566, %v3587
        %v3595 = vmul.f32 %v3567, %v3589
        %v3596 = vmul.f32 %v3568, %v3591
        %v3597 = vmul.f32 %v3569, %v3593
        %3602 = vrot.lane.b32.xlu0 %v3594, 32
        %v3603 = vpop.permute.xlu0 %3602
        %3604 = vrot.lane.b32.xlu0 %v3595, 32
        %v3605 = vpop.permute.xlu0 %3604
        %3606 = vrot.lane.b32.xlu0 %v3596, 32
        %v3607 = vpop.permute.xlu0 %3606
        %3608 = vrot.lane.b32.xlu0 %v3597, 32
        %v3609 = vpop.permute.xlu0 %3608
        %v3614 = vadd.f32 %v3061, %v3603
        %v3615 = vadd.f32 %v3062, %v3605
        %v3616 = vadd.f32 %v3063, %v3607
        %v3617 = vadd.f32 %v3064, %v3609
        %s3618 = scalar_lea.vmem %s15, 128
        %v3619 = vld [vmem:[%s3618] sm:$0xff]
        %v3620 = vld [vmem:[%s3618 + $0x8] sm:$0xff]
        %v3621 = vld [vmem:[%s3618 + $0x10] sm:$0xff]
        %v3622 = vld [vmem:[%s3618 + $0x18] sm:$0xff]
        %v3623 = vpack.c.bf16 %v3016, %v3015
        %v3624 = vpack.c.bf16 %v3620, %v3619
        %v3625 = vpack.c.bf16 %v3622, %v3621
        %s3626 = scalar_lea.vmem %s16, 4
        %v3627 = vld [vmem:[%s3626] sm:$0x1]
        %v3629 = vlaneseq
        %v3630 = vshrl.u32 %v3629, 7
        %v3631 = vsub.s32 0, %v3630
        %v3632 = vrot.slane %v3627, %v3631
        %v3635 = vsel %vm995, %v3623, 0
        %3637 = vmatprep.subr.bf16.mxu0 0
        %3638 = vmatpush1.bf16.msra.mxu0 %v3624
        %3639 = vmatprep.subr.bf16.mxu0 0
        %3640 = vmatpush1.bf16.msra.mxu0 %v3625
        %3641 = vmatprep.subr.bf16.mxu0 0
        %3642 = vmatpush1.bf16.msra.mxu0 0
        %3643 = vmatprep.subr.bf16.mxu0 0
        %3644 = vmatpush1.bf16.msra.mxu0 0
        %3645 = vmatprep.subr.bf16.mxu0 0
        %3646 = vmatpush1.bf16.msra.mxu0 0
        %3647 = vmatprep.subr.bf16.mxu0 0
        %3648 = vmatpush1.bf16.msra.mxu0 0
        %3649 = vmatprep.subr.bf16.mxu0 0
        %3650 = vmatpush1.bf16.msra.mxu0 0
        %3651 = vmatprep.subr.bf16.mxu0 0
        %3652 = vmatpush1.bf16.msra.mxu0 0
        %3653 = vmatprep.subr.bf16.mxu0 0
        %3654 = vmatpush1.bf16.msra.mxu0 0
        %3655 = vmatprep.subr.bf16.mxu0 0
        %3656 = vmatpush1.bf16.msra.mxu0 0
        %3657 = vmatprep.subr.bf16.mxu0 0
        %3658 = vmatpush1.bf16.msra.mxu0 0
        %3659 = vmatprep.subr.bf16.mxu0 0
        %3660 = vmatpush1.bf16.msra.mxu0 0
        %3661 = vmatprep.subr.bf16.mxu0 0
        %3662 = vmatpush1.bf16.msra.mxu0 0
        %3663 = vmatprep.subr.bf16.mxu0 0
        %3664 = vmatpush1.bf16.msra.mxu0 0
        %3665 = vmatprep.subr.bf16.mxu0 0
        %3666 = vmatpush1.bf16.msra.mxu0 0
        %3667 = vmatprep.subr.bf16.mxu0 0
        %3668 = vmatpush1.bf16.msra.mxu0 0
        %3669 = vmatprep.mubr.bf16.mxu0 0
        %3670 = vmatmul.mubr.bf16.gmra.mrb[0].mxu0 %v3635
        %v3671 = vpop.f32.mrb[0].mxu0
        %v3672 = vadd.f32 %v3632, %v3671
        %v3673 = vpop.f32.mrb[0].mxu0
        %v3674 = vpop.f32.mrb[0].mxu0
        %v3675 = vadd.f32 %v3632, %v3674
        %v3676 = vpop.f32.mrb[0].mxu0
        %3677 = vdwg.mxu0
        %v3678 = vpack.c.bf16 %v3675, %v3672
        %3679 = vmatprep.subr.bf16.mxu0 0
        %3680 = vmatpush1.bf16.msra.mxu0 %v3678
        %3681 = vmatprep.subr.bf16.mxu0 0
        %3682 = vmatpush1.bf16.msra.mxu0 0
        %3683 = vmatprep.subr.bf16.mxu0 0
        %3684 = vmatpush1.bf16.msra.mxu0 0
        %3685 = vmatprep.subr.bf16.mxu0 0
        %3686 = vmatpush1.bf16.msra.mxu0 0
        %3687 = vmatprep.subr.bf16.mxu0 0
        %3688 = vmatpush1.bf16.msra.mxu0 0
        %3689 = vmatprep.subr.bf16.mxu0 0
        %3690 = vmatpush1.bf16.msra.mxu0 0
        %3691 = vmatprep.subr.bf16.mxu0 0
        %3692 = vmatpush1.bf16.msra.mxu0 0
        %3693 = vmatprep.subr.bf16.mxu0 0
        %3694 = vmatpush1.bf16.msra.mxu0 0
        %3695 = vmatprep.subr.bf16.mxu0 0
        %3696 = vmatpush1.bf16.msra.mxu0 0
        %3697 = vmatprep.subr.bf16.mxu0 0
        %3698 = vmatpush1.bf16.msra.mxu0 0
        %3699 = vmatprep.subr.bf16.mxu0 0
        %3700 = vmatpush1.bf16.msra.mxu0 0
        %3701 = vmatprep.subr.bf16.mxu0 0
        %3702 = vmatpush1.bf16.msra.mxu0 0
        %3703 = vmatprep.subr.bf16.mxu0 0
        %3704 = vmatpush1.bf16.msra.mxu0 0
        %3705 = vmatprep.subr.bf16.mxu0 0
        %3706 = vmatpush1.bf16.msra.mxu0 0
        %3707 = vmatprep.subr.bf16.mxu0 0
        %3708 = vmatpush1.bf16.msra.mxu0 0
        %3709 = vmatprep.subr.bf16.mxu0 0
        %3710 = vmatpush1.bf16.msra.mxu0 0
        %3711 = vmatprep.mubr.bf16.mxu0 0
        %3712 = vmatmul.mubr.bf16.gmra.mrb[0].mxu0 %v1496
        %v3713 = vpop.f32.mrb[0].mxu0
        %v3714 = vadd.f32 0.0, %v3713
        %v3715 = vpop.f32.mrb[0].mxu0
        %v3716 = vpop.f32.mrb[0].mxu0
        %v3717 = vadd.f32 0.0, %v3716
        %v3718 = vpop.f32.mrb[0].mxu0
        %3719 = vmatprep.mubr.bf16.mxu0 0
        %3720 = vmatmul.mubr.bf16.gmra.mrb[0].mxu0 %v1499
        %v3721 = vpop.f32.mrb[0].mxu0
        %v3722 = vadd.f32 0.0, %v3721
        %v3723 = vpop.f32.mrb[0].mxu0
        %v3724 = vpop.f32.mrb[0].mxu0
        %v3725 = vadd.f32 0.0, %v3724
        %v3726 = vpop.f32.mrb[0].mxu0
        %3727 = vmatprep.mubr.bf16.mxu0 0
        %3728 = vmatmul.mubr.bf16.gmra.mrb[0].mxu0 %v1502
        %v3729 = vpop.f32.mrb[0].mxu0
        %v3730 = vadd.f32 0.0, %v3729
        %v3731 = vpop.f32.mrb[0].mxu0
        %v3732 = vpop.f32.mrb[0].mxu0
        %v3733 = vadd.f32 0.0, %v3732
        %v3734 = vpop.f32.mrb[0].mxu0
        %3735 = vmatprep.mubr.bf16.mxu0 0
        %3736 = vmatmul.mubr.bf16.gmra.mrb[0].mxu0 %v1505
        %v3737 = vpop.f32.mrb[0].mxu0
        %v3738 = vadd.f32 0.0, %v3737
        %v3739 = vpop.f32.mrb[0].mxu0
        %v3740 = vpop.f32.mrb[0].mxu0
        %v3741 = vadd.f32 0.0, %v3740
        %v3742 = vpop.f32.mrb[0].mxu0
        %3743 = vdwg.mxu0
        %3748 = vrot.lane.b32.xlu0 %v3730, 64
        %v3749 = vpop.permute.xlu0 %3748
        %3750 = vrot.lane.b32.xlu0 %v3733, 64
        %v3751 = vpop.permute.xlu0 %3750
        %3752 = vrot.lane.b32.xlu0 %v3738, 64
        %v3753 = vpop.permute.xlu0 %3752
        %3754 = vrot.lane.b32.xlu0 %v3741, 64
        %v3755 = vpop.permute.xlu0 %3754
        %v3760 = vadd.f32 %v3714, %v3749
        %v3761 = vadd.f32 %v3717, %v3751
        %v3762 = vadd.f32 %v3722, %v3753
        %v3763 = vadd.f32 %v3725, %v3755
        %s3764 = scalar_lea.vmem %s17, 128
        %v3765 = vld [vmem:[%s3764] sm:$0xff]
        %v3766 = vld [vmem:[%s3764 + $0x8] sm:$0xff]
        %v3767 = vld [vmem:[%s3764 + $0x10] sm:$0xff]
        %v3768 = vld [vmem:[%s3764 + $0x18] sm:$0xff]
        %v3769 = vpack.c.bf16 %v3615, %v3614
        %v3770 = vpack.c.bf16 %v3617, %v3616
        %v3771 = vpack.c.bf16 %v3766, %v3765
        %v3772 = vpack.c.bf16 %v3768, %v3767
        %v3774 = vsel %vm995, %v3769, 0
        %v3777 = vsel %vm995, %v3770, 0
        %3779 = vmatprep.subr.bf16.mxu0 0
        %3780 = vmatpush1.bf16.msra.mxu0 %v3771
        %3781 = vmatprep.subr.bf16.mxu0 0
        %3782 = vmatpush1.bf16.msra.mxu0 %v3772
        %3783 = vmatprep.subr.bf16.mxu0 0
        %3784 = vmatpush1.bf16.msra.mxu0 0
        %3785 = vmatprep.subr.bf16.mxu0 0
        %3786 = vmatpush1.bf16.msra.mxu0 0
        %3787 = vmatprep.subr.bf16.mxu0 0
        %3788 = vmatpush1.bf16.msra.mxu0 0
        %3789 = vmatprep.subr.bf16.mxu0 0
        %3790 = vmatpush1.bf16.msra.mxu0 0
        %3791 = vmatprep.subr.bf16.mxu0 0
        %3792 = vmatpush1.bf16.msra.mxu0 0
        %3793 = vmatprep.subr.bf16.mxu0 0
        %3794 = vmatpush1.bf16.msra.mxu0 0
        %3795 = vmatprep.subr.bf16.mxu0 0
        %3796 = vmatpush1.bf16.msra.mxu0 0
        %3797 = vmatprep.subr.bf16.mxu0 0
        %3798 = vmatpush1.bf16.msra.mxu0 0
        %3799 = vmatprep.subr.bf16.mxu0 0
        %3800 = vmatpush1.bf16.msra.mxu0 0
        %3801 = vmatprep.subr.bf16.mxu0 0
        %3802 = vmatpush1.bf16.msra.mxu0 0
        %3803 = vmatprep.subr.bf16.mxu0 0
        %3804 = vmatpush1.bf16.msra.mxu0 0
        %3805 = vmatprep.subr.bf16.mxu0 0
        %3806 = vmatpush1.bf16.msra.mxu0 0
        %3807 = vmatprep.subr.bf16.mxu0 0
        %3808 = vmatpush1.bf16.msra.mxu0 0
        %3809 = vmatprep.subr.bf16.mxu0 0
        %3810 = vmatpush1.bf16.msra.mxu0 0
        %3811 = vmatprep.mubr.bf16.mxu0 0
        %3812 = vmatmul.mubr.bf16.gmra.mrb[0].mxu0 %v3774
        %v3813 = vpop.f32.mrb[0].mxu0
        %v3814 = vadd.f32 0.0, %v3813
        %v3815 = vpop.f32.mrb[0].mxu0
        %v3816 = vpop.f32.mrb[0].mxu0
        %v3817 = vadd.f32 0.0, %v3816
        %v3818 = vpop.f32.mrb[0].mxu0
        %3819 = vmatprep.mubr.bf16.mxu0 0
        %3820 = vmatmul.mubr.bf16.gmra.mrb[0].mxu0 %v3777
        %v3821 = vpop.f32.mrb[0].mxu0
        %v3822 = vadd.f32 0.0, %v3821
        %v3823 = vpop.f32.mrb[0].mxu0
        %v3824 = vpop.f32.mrb[0].mxu0
        %v3825 = vadd.f32 0.0, %v3824
        %v3826 = vpop.f32.mrb[0].mxu0
        %3827 = vdwg.mxu0
        %v3828 = vadd.f32 %v3760, %v3814
        %v3829 = vadd.f32 %v3761, %v3817
        %v3830 = vadd.f32 %v3762, %v3822
        %v3831 = vadd.f32 %v3763, %v3825
        %s3832 = scalar_lea.vmem %s18, 4
        %v3833 = vld [vmem:[%s3832] sm:$0x1]
        %v3835 = vlaneseq
        %v3836 = vshrl.u32 %v3835, 7
        %v3837 = vsub.s32 0, %v3836
        %v3838 = vrot.slane %v3833, %v3837
        %v3840 = vadd.f32 %v3828, %v3838
        %v3841 = vadd.f32 %v3829, %v3838
        %v3842 = vadd.f32 %v3830, %v3838
        %v3843 = vadd.f32 %v3831, %v3838
        %v3844 = vxor.u32 %v3840, 2147483648
        %v3845 = vxor.u32 %v3841, 2147483648
        %v3846 = vxor.u32 %v3842, 2147483648
        %v3847 = vxor.u32 %v3843, 2147483648
        %v3848 = vmul.f32 %v3844, 1.442695
        %v3849 = vpow.pop %v3848
        %v3850 = vmul.f32 %v3845, 1.442695
        %v3851 = vpow.pop %v3850
        %v3852 = vmul.f32 %v3846, 1.442695
        %v3853 = vpow.pop %v3852
        %v3854 = vmul.f32 %v3847, 1.442695
        %v3855 = vpow.pop %v3854
        %v3856 = vadd.f32 %v3849, 1.0
        %v3857 = vadd.f32 %v3851, 1.0
        %v3858 = vadd.f32 %v3853, 1.0
        %v3859 = vadd.f32 %v3855, 1.0
        %v3860 = vrcp.pop %v3856
        %v3861 = vmul.f32 1.0, %v3860
        %v3862 = vrcp.pop %v3857
        %v3863 = vmul.f32 1.0, %v3862
        %v3864 = vrcp.pop %v3858
        %v3865 = vmul.f32 1.0, %v3864
        %v3866 = vrcp.pop %v3859
        %v3867 = vmul.f32 1.0, %v3866
        %3872 = vrot.lane.b32.xlu0 %v3714, 96
        %v3873 = vpop.permute.xlu0 %3872
        %3874 = vrot.lane.b32.xlu0 %v3717, 96
        %v3875 = vpop.permute.xlu0 %3874
        %3876 = vrot.lane.b32.xlu0 %v3722, 96
        %v3877 = vpop.permute.xlu0 %3876
        %3878 = vrot.lane.b32.xlu0 %v3725, 96
        %v3879 = vpop.permute.xlu0 %3878
        %v3884 = vmul.f32 %v3861, %v3873
        %v3885 = vmul.f32 %v3863, %v3875
        %v3886 = vmul.f32 %v3865, %v3877
        %v3887 = vmul.f32 %v3867, %v3879
        %v3888 = vpack.c.bf16 %v3885, %v3884
        %v3889 = vpack.c.bf16 %v3887, %v3886
        %3890 = vmatprep.subr.bf16.mxu0 0
        %3891 = vmatpush1.bf16.msra.mxu0 %v3888
        %3892 = vmatprep.subr.bf16.mxu0 0
        %3893 = vmatpush1.bf16.msra.mxu0 %v3889
        %3894 = vmatprep.subr.bf16.mxu0 0
        %3895 = vmatpush1.bf16.msra.mxu0 0
        %3896 = vmatprep.subr.bf16.mxu0 0
        %3897 = vmatpush1.bf16.msra.mxu0 0
        %3898 = vmatprep.subr.bf16.mxu0 0
        %3899 = vmatpush1.bf16.msra.mxu0 0
        %3900 = vmatprep.subr.bf16.mxu0 0
        %3901 = vmatpush1.bf16.msra.mxu0 0
        %3902 = vmatprep.subr.bf16.mxu0 0
        %3903 = vmatpush1.bf16.msra.mxu0 0
        %3904 = vmatprep.subr.bf16.mxu0 0
        %3905 = vmatpush1.bf16.msra.mxu0 0
        %3906 = vmatprep.subr.bf16.mxu0 0
        %3907 = vmatpush1.bf16.msra.mxu0 0
        %3908 = vmatprep.subr.bf16.mxu0 0
        %3909 = vmatpush1.bf16.msra.mxu0 0
        %3910 = vmatprep.subr.bf16.mxu0 0
        %3911 = vmatpush1.bf16.msra.mxu0 0
        %3912 = vmatprep.subr.bf16.mxu0 0
        %3913 = vmatpush1.bf16.msra.mxu0 0
        %3914 = vmatprep.subr.bf16.mxu0 0
        %3915 = vmatpush1.bf16.msra.mxu0 0
        %3916 = vmatprep.subr.bf16.mxu0 0
        %3917 = vmatpush1.bf16.msra.mxu0 0
        %3918 = vmatprep.subr.bf16.mxu0 0
        %3919 = vmatpush1.bf16.msra.mxu0 0
        %3920 = vmatprep.subr.bf16.mxu0 0
        %3921 = vmatpush1.bf16.msra.mxu0 0
        %3922 = vmatprep.mubr.bf16.mxu0 0
        %3923 = vmatmul.mubr.bf16.gmra.mrb[0].mxu0 %v1722
        %v3924 = vpop.f32.mrb[0].mxu0
        %v3925 = vadd.f32 0.0, %v3924
        %v3926 = vpop.f32.mrb[0].mxu0
        %v3927 = vpop.f32.mrb[0].mxu0
        %v3928 = vadd.f32 0.0, %v3927
        %v3929 = vpop.f32.mrb[0].mxu0
        %3930 = vdwg.mxu0
        %v3931 = vpack.c.bf16 %v3863, %v3861
        %v3932 = vpack.c.bf16 %v3867, %v3865
        %3933 = vmatprep.subr.bf16.mxu0 0
        %3934 = vmatpush1.bf16.msra.mxu0 %v3931
        %3935 = vmatprep.subr.bf16.mxu0 0
        %3936 = vmatpush1.bf16.msra.mxu0 %v3932
        %3937 = vmatprep.subr.bf16.mxu0 0
        %3938 = vmatpush1.bf16.msra.mxu0 0
        %3939 = vmatprep.subr.bf16.mxu0 0
        %3940 = vmatpush1.bf16.msra.mxu0 0
        %3941 = vmatprep.subr.bf16.mxu0 0
        %3942 = vmatpush1.bf16.msra.mxu0 0
        %3943 = vmatprep.subr.bf16.mxu0 0
        %3944 = vmatpush1.bf16.msra.mxu0 0
        %3945 = vmatprep.subr.bf16.mxu0 0
        %3946 = vmatpush1.bf16.msra.mxu0 0
        %3947 = vmatprep.subr.bf16.mxu0 0
        %3948 = vmatpush1.bf16.msra.mxu0 0
        %3949 = vmatprep.subr.bf16.mxu0 0
        %3950 = vmatpush1.bf16.msra.mxu0 0
        %3951 = vmatprep.subr.bf16.mxu0 0
        %3952 = vmatpush1.bf16.msra.mxu0 0
        %3953 = vmatprep.subr.bf16.mxu0 0
        %3954 = vmatpush1.bf16.msra.mxu0 0
        %3955 = vmatprep.subr.bf16.mxu0 0
        %3956 = vmatpush1.bf16.msra.mxu0 0
        %3957 = vmatprep.subr.bf16.mxu0 0
        %3958 = vmatpush1.bf16.msra.mxu0 0
        %3959 = vmatprep.subr.bf16.mxu0 0
        %3960 = vmatpush1.bf16.msra.mxu0 0
        %3961 = vmatprep.subr.bf16.mxu0 0
        %3962 = vmatpush1.bf16.msra.mxu0 0
        %3963 = vmatprep.subr.bf16.mxu0 0
        %3964 = vmatpush1.bf16.msra.mxu0 0
        %3965 = vmatprep.mubr.bf16.mxu0 0
        %3966 = vmatmul.mubr.bf16.gmra.mrb[0].mxu0 %v1722
        %v3967 = vpop.f32.mrb[0].mxu0
        %v3968 = vadd.f32 1e-06, %v3967
        %v3969 = vpop.f32.mrb[0].mxu0
        %v3970 = vpop.f32.mrb[0].mxu0
        %v3971 = vadd.f32 1e-06, %v3970
        %v3972 = vpop.f32.mrb[0].mxu0
        %3973 = vdwg.mxu0
        %v3974 = vrcp.pop %v3968
        %v3975 = vrcp.pop %v3971
        %v3976 = vmul.f32 %v3925, %v3974
        %v3977 = vmul.f32 %v3928, %v3975
        %3980 = vrot.lane.b32.xlu0 %v3976, 96
        %v3981 = vpop.permute.xlu0 %3980
        %3982 = vrot.lane.b32.xlu0 %v3977, 96
        %v3983 = vpop.permute.xlu0 %3982
        %v3986 = vadd.f32 %v3672, %v3981
        %v3987 = vadd.f32 %v3675, %v3983
        %s3988 = scalar_lea.vmem %s19, 16
        %v3989 = vld [vmem:[%s3988] sm:$0xf]
        %v3990 = vlaneseq
        %v3991 = vshrl.u32 %v3990, 7
        %v3992 = vsub.s32 0, %v3991
        %v3993 = vrot.slane %v3989, %v3992
        %3995 = vrot.lane.b32.xlu0 %v3993, 96
        %v3996 = vpop.permute.xlu0 %3995
        %v3998 = vmul.f32 %v3986, %v3996
        %v3999 = vmul.f32 %v3987, %v3996
        %v4000 = vlaneseq
        %v4001 = vshrl.u32 %v4000, 7
        %v4002 = vsub.s32 1, %v4001
        %v4003 = vrot.slane %v3989, %v4002
        %4005 = vrot.lane.b32.xlu0 %v4003, 96
        %v4006 = vpop.permute.xlu0 %4005
        %v4008 = vadd.f32 %v3998, %v4006
        %v4009 = vadd.f32 %v3999, %v4006
        %v4010 = vxor.u32 %v4008, 2147483648
        %v4011 = vxor.u32 %v4009, 2147483648
        %v4012 = vmul.f32 %v4010, 1.442695
        %v4013 = vpow.pop %v4012
        %v4014 = vmul.f32 %v4011, 1.442695
        %v4015 = vpow.pop %v4014
        %v4016 = vadd.f32 %v4013, 1.0
        %v4017 = vadd.f32 %v4015, 1.0
        %v4018 = vrcp.pop %v4016
        %v4019 = vmul.f32 1.0, %v4018
        %v4020 = vrcp.pop %v4017
        %v4021 = vmul.f32 1.0, %v4020
        %v4022 = vmul.f32 %v4008, %v4019
        %v4023 = vmul.f32 %v4009, %v4021
        %4026 = vrot.lane.b32.xlu0 %v4022, 32
        %v4027 = vpop.permute.xlu0 %4026
        %4028 = vrot.lane.b32.xlu0 %v4023, 32
        %v4029 = vpop.permute.xlu0 %4028
        %v4032 = vadd.f32 %v3015, %v4027
        %v4033 = vadd.f32 %v3016, %v4029
        %v4034 = vlaneseq
        %v4035 = vshrl.u32 %v4034, 7
        %v4036 = vsub.s32 2, %v4035
        %v4037 = vrot.slane %v3989, %v4036
        %v4038 = vmul.f32 %v3840, %v4037
        %v4039 = vmul.f32 %v3841, %v4037
        %v4040 = vmul.f32 %v3842, %v4037
        %v4041 = vmul.f32 %v3843, %v4037
        %v4042 = vlaneseq
        %v4043 = vshrl.u32 %v4042, 7
        %v4044 = vsub.s32 3, %v4043
        %v4045 = vrot.slane %v3989, %v4044
        %v4046 = vadd.f32 %v4038, %v4045
        %v4047 = vadd.f32 %v4039, %v4045
        %v4048 = vadd.f32 %v4040, %v4045
        %v4049 = vadd.f32 %v4041, %v4045
        %v4050 = vxor.u32 %v4046, 2147483648
        %v4051 = vxor.u32 %v4047, 2147483648
        %v4052 = vxor.u32 %v4048, 2147483648
        %v4053 = vxor.u32 %v4049, 2147483648
        %v4054 = vmul.f32 %v4050, 1.442695
        %v4055 = vpow.pop %v4054
        %v4056 = vmul.f32 %v4051, 1.442695
        %v4057 = vpow.pop %v4056
        %v4058 = vmul.f32 %v4052, 1.442695
        %v4059 = vpow.pop %v4058
        %v4060 = vmul.f32 %v4053, 1.442695
        %v4061 = vpow.pop %v4060
        %v4062 = vadd.f32 %v4055, 1.0
        %v4063 = vadd.f32 %v4057, 1.0
        %v4064 = vadd.f32 %v4059, 1.0
        %v4065 = vadd.f32 %v4061, 1.0
        %v4066 = vrcp.pop %v4062
        %v4067 = vmul.f32 1.0, %v4066
        %v4068 = vrcp.pop %v4063
        %v4069 = vmul.f32 1.0, %v4068
        %v4070 = vrcp.pop %v4064
        %v4071 = vmul.f32 1.0, %v4070
        %v4072 = vrcp.pop %v4065
        %v4073 = vmul.f32 1.0, %v4072
        %v4074 = vmul.f32 %v4046, %v4067
        %v4075 = vmul.f32 %v4047, %v4069
        %v4076 = vmul.f32 %v4048, %v4071
        %v4077 = vmul.f32 %v4049, %v4073
        %v4078 = vadd.f32 %v3614, %v4074
        %v4079 = vadd.f32 %v3615, %v4075
        %v4080 = vadd.f32 %v3616, %v4076
        %v4081 = vadd.f32 %v3617, %v4077
        %s4082 = scalar_lea.vmem %s15, 160
        %v4083 = vld [vmem:[%s4082] sm:$0xff]
        %v4084 = vld [vmem:[%s4082 + $0x8] sm:$0xff]
        %v4085 = vld [vmem:[%s4082 + $0x10] sm:$0xff]
        %v4086 = vld [vmem:[%s4082 + $0x18] sm:$0xff]
        %v4087 = vpack.c.bf16 %v4033, %v4032
        %v4088 = vpack.c.bf16 %v4084, %v4083
        %v4089 = vpack.c.bf16 %v4086, %v4085
        %s4090 = scalar_lea.vmem %s16, 5
        %v4091 = vld [vmem:[%s4090] sm:$0x1]
        %v4093 = vlaneseq
        %v4094 = vshrl.u32 %v4093, 7
        %v4095 = vsub.s32 0, %v4094
        %v4096 = vrot.slane %v4091, %v4095
        %v4099 = vsel %vm995, %v4087, 0
        %4101 = vmatprep.subr.bf16.mxu0 0
        %4102 = vmatpush1.bf16.msra.mxu0 %v4088
        %4103 = vmatprep.subr.bf16.mxu0 0
        %4104 = vmatpush1.bf16.msra.mxu0 %v4089
        %4105 = vmatprep.subr.bf16.mxu0 0
        %4106 = vmatpush1.bf16.msra.mxu0 0
        %4107 = vmatprep.subr.bf16.mxu0 0
        %4108 = vmatpush1.bf16.msra.mxu0 0
        %4109 = vmatprep.subr.bf16.mxu0 0
        %4110 = vmatpush1.bf16.msra.mxu0 0
        %4111 = vmatprep.subr.bf16.mxu0 0
        %4112 = vmatpush1.bf16.msra.mxu0 0
        %4113 = vmatprep.subr.bf16.mxu0 0
        %4114 = vmatpush1.bf16.msra.mxu0 0
        %4115 = vmatprep.subr.bf16.mxu0 0
        %4116 = vmatpush1.bf16.msra.mxu0 0
        %4117 = vmatprep.subr.bf16.mxu0 0
        %4118 = vmatpush1.bf16.msra.mxu0 0
        %4119 = vmatprep.subr.bf16.mxu0 0
        %4120 = vmatpush1.bf16.msra.mxu0 0
        %4121 = vmatprep.subr.bf16.mxu0 0
        %4122 = vmatpush1.bf16.msra.mxu0 0
        %4123 = vmatprep.subr.bf16.mxu0 0
        %4124 = vmatpush1.bf16.msra.mxu0 0
        %4125 = vmatprep.subr.bf16.mxu0 0
        %4126 = vmatpush1.bf16.msra.mxu0 0
        %4127 = vmatprep.subr.bf16.mxu0 0
        %4128 = vmatpush1.bf16.msra.mxu0 0
        %4129 = vmatprep.subr.bf16.mxu0 0
        %4130 = vmatpush1.bf16.msra.mxu0 0
        %4131 = vmatprep.subr.bf16.mxu0 0
        %4132 = vmatpush1.bf16.msra.mxu0 0
        %4133 = vmatprep.mubr.bf16.mxu0 0
        %4134 = vmatmul.mubr.bf16.gmra.mrb[0].mxu0 %v4099
        %v4135 = vpop.f32.mrb[0].mxu0
        %v4136 = vadd.f32 %v4096, %v4135
        %v4137 = vpop.f32.mrb[0].mxu0
        %v4138 = vpop.f32.mrb[0].mxu0
        %v4139 = vadd.f32 %v4096, %v4138
        %v4140 = vpop.f32.mrb[0].mxu0
        %4141 = vdwg.mxu0
        %v4142 = vpack.c.bf16 %v4139, %v4136
        %4143 = vmatprep.subr.bf16.mxu0 0
        %4144 = vmatpush1.bf16.msra.mxu0 %v4142
        %4145 = vmatprep.subr.bf16.mxu0 0
        %4146 = vmatpush1.bf16.msra.mxu0 0
        %4147 = vmatprep.subr.bf16.mxu0 0
        %4148 = vmatpush1.bf16.msra.mxu0 0
        %4149 = vmatprep.subr.bf16.mxu0 0
        %4150 = vmatpush1.bf16.msra.mxu0 0
        %4151 = vmatprep.subr.bf16.mxu0 0
        %4152 = vmatpush1.bf16.msra.mxu0 0
        %4153 = vmatprep.subr.bf16.mxu0 0
        %4154 = vmatpush1.bf16.msra.mxu0 0
        %4155 = vmatprep.subr.bf16.mxu0 0
        %4156 = vmatpush1.bf16.msra.mxu0 0
        %4157 = vmatprep.subr.bf16.mxu0 0
        %4158 = vmatpush1.bf16.msra.mxu0 0
        %4159 = vmatprep.subr.bf16.mxu0 0
        %4160 = vmatpush1.bf16.msra.mxu0 0
        %4161 = vmatprep.subr.bf16.mxu0 0
        %4162 = vmatpush1.bf16.msra.mxu0 0
        %4163 = vmatprep.subr.bf16.mxu0 0
        %4164 = vmatpush1.bf16.msra.mxu0 0
        %4165 = vmatprep.subr.bf16.mxu0 0
        %4166 = vmatpush1.bf16.msra.mxu0 0
        %4167 = vmatprep.subr.bf16.mxu0 0
        %4168 = vmatpush1.bf16.msra.mxu0 0
        %4169 = vmatprep.subr.bf16.mxu0 0
        %4170 = vmatpush1.bf16.msra.mxu0 0
        %4171 = vmatprep.subr.bf16.mxu0 0
        %4172 = vmatpush1.bf16.msra.mxu0 0
        %4173 = vmatprep.subr.bf16.mxu0 0
        %4174 = vmatpush1.bf16.msra.mxu0 0
        %4175 = vmatprep.mubr.bf16.mxu0 0
        %4176 = vmatmul.mubr.bf16.gmra.mrb[0].mxu0 %v1496
        %v4177 = vpop.f32.mrb[0].mxu0
        %v4178 = vadd.f32 0.0, %v4177
        %v4179 = vpop.f32.mrb[0].mxu0
        %v4180 = vpop.f32.mrb[0].mxu0
        %v4181 = vadd.f32 0.0, %v4180
        %v4182 = vpop.f32.mrb[0].mxu0
        %4183 = vmatprep.mubr.bf16.mxu0 0
        %4184 = vmatmul.mubr.bf16.gmra.mrb[0].mxu0 %v1499
        %v4185 = vpop.f32.mrb[0].mxu0
        %v4186 = vadd.f32 0.0, %v4185
        %v4187 = vpop.f32.mrb[0].mxu0
        %v4188 = vpop.f32.mrb[0].mxu0
        %v4189 = vadd.f32 0.0, %v4188
        %v4190 = vpop.f32.mrb[0].mxu0
        %4191 = vmatprep.mubr.bf16.mxu0 0
        %4192 = vmatmul.mubr.bf16.gmra.mrb[0].mxu0 %v1502
        %v4193 = vpop.f32.mrb[0].mxu0
        %v4194 = vadd.f32 0.0, %v4193
        %v4195 = vpop.f32.mrb[0].mxu0
        %v4196 = vpop.f32.mrb[0].mxu0
        %v4197 = vadd.f32 0.0, %v4196
        %v4198 = vpop.f32.mrb[0].mxu0
        %4199 = vmatprep.mubr.bf16.mxu0 0
        %4200 = vmatmul.mubr.bf16.gmra.mrb[0].mxu0 %v1505
        %v4201 = vpop.f32.mrb[0].mxu0
        %v4202 = vadd.f32 0.0, %v4201
        %v4203 = vpop.f32.mrb[0].mxu0
        %v4204 = vpop.f32.mrb[0].mxu0
        %v4205 = vadd.f32 0.0, %v4204
        %v4206 = vpop.f32.mrb[0].mxu0
        %4207 = vdwg.mxu0
        %4212 = vrot.lane.b32.xlu0 %v4194, 64
        %v4213 = vpop.permute.xlu0 %4212
        %4214 = vrot.lane.b32.xlu0 %v4197, 64
        %v4215 = vpop.permute.xlu0 %4214
        %4216 = vrot.lane.b32.xlu0 %v4202, 64
        %v4217 = vpop.permute.xlu0 %4216
        %4218 = vrot.lane.b32.xlu0 %v4205, 64
        %v4219 = vpop.permute.xlu0 %4218
        %v4224 = vadd.f32 %v4178, %v4213
        %v4225 = vadd.f32 %v4181, %v4215
        %v4226 = vadd.f32 %v4186, %v4217
        %v4227 = vadd.f32 %v4189, %v4219
        %s4228 = scalar_lea.vmem %s17, 160
        %v4229 = vld [vmem:[%s4228] sm:$0xff]
        %v4230 = vld [vmem:[%s4228 + $0x8] sm:$0xff]
        %v4231 = vld [vmem:[%s4228 + $0x10] sm:$0xff]
        %v4232 = vld [vmem:[%s4228 + $0x18] sm:$0xff]
        %v4233 = vpack.c.bf16 %v4079, %v4078
        %v4234 = vpack.c.bf16 %v4081, %v4080
        %v4235 = vpack.c.bf16 %v4230, %v4229
        %v4236 = vpack.c.bf16 %v4232, %v4231
        %v4238 = vsel %vm995, %v4233, 0
        %v4241 = vsel %vm995, %v4234, 0
        %4243 = vmatprep.subr.bf16.mxu0 0
        %4244 = vmatpush1.bf16.msra.mxu0 %v4235
        %4245 = vmatprep.subr.bf16.mxu0 0
        %4246 = vmatpush1.bf16.msra.mxu0 %v4236
        %4247 = vmatprep.subr.bf16.mxu0 0
        %4248 = vmatpush1.bf16.msra.mxu0 0
        %4249 = vmatprep.subr.bf16.mxu0 0
        %4250 = vmatpush1.bf16.msra.mxu0 0
        %4251 = vmatprep.subr.bf16.mxu0 0
        %4252 = vmatpush1.bf16.msra.mxu0 0
        %4253 = vmatprep.subr.bf16.mxu0 0
        %4254 = vmatpush1.bf16.msra.mxu0 0
        %4255 = vmatprep.subr.bf16.mxu0 0
        %4256 = vmatpush1.bf16.msra.mxu0 0
        %4257 = vmatprep.subr.bf16.mxu0 0
        %4258 = vmatpush1.bf16.msra.mxu0 0
        %4259 = vmatprep.subr.bf16.mxu0 0
        %4260 = vmatpush1.bf16.msra.mxu0 0
        %4261 = vmatprep.subr.bf16.mxu0 0
        %4262 = vmatpush1.bf16.msra.mxu0 0
        %4263 = vmatprep.subr.bf16.mxu0 0
        %4264 = vmatpush1.bf16.msra.mxu0 0
        %4265 = vmatprep.subr.bf16.mxu0 0
        %4266 = vmatpush1.bf16.msra.mxu0 0
        %4267 = vmatprep.subr.bf16.mxu0 0
        %4268 = vmatpush1.bf16.msra.mxu0 0
        %4269 = vmatprep.subr.bf16.mxu0 0
        %4270 = vmatpush1.bf16.msra.mxu0 0
        %4271 = vmatprep.subr.bf16.mxu0 0
        %4272 = vmatpush1.bf16.msra.mxu0 0
        %4273 = vmatprep.subr.bf16.mxu0 0
        %4274 = vmatpush1.bf16.msra.mxu0 0
        %4275 = vmatprep.mubr.bf16.mxu0 0
        %4276 = vmatmul.mubr.bf16.gmra.mrb[0].mxu0 %v4238
        %v4277 = vpop.f32.mrb[0].mxu0
        %v4278 = vadd.f32 0.0, %v4277
        %v4279 = vpop.f32.mrb[0].mxu0
        %v4280 = vpop.f32.mrb[0].mxu0
        %v4281 = vadd.f32 0.0, %v4280
        %v4282 = vpop.f32.mrb[0].mxu0
        %4283 = vmatprep.mubr.bf16.mxu0 0
        %4284 = vmatmul.mubr.bf16.gmra.mrb[0].mxu0 %v4241
        %v4285 = vpop.f32.mrb[0].mxu0
        %v4286 = vadd.f32 0.0, %v4285
        %v4287 = vpop.f32.mrb[0].mxu0
        %v4288 = vpop.f32.mrb[0].mxu0
        %v4289 = vadd.f32 0.0, %v4288
        %v4290 = vpop.f32.mrb[0].mxu0
        %4291 = vdwg.mxu0
        %v4292 = vadd.f32 %v4224, %v4278
        %v4293 = vadd.f32 %v4225, %v4281
        %v4294 = vadd.f32 %v4226, %v4286
        %v4295 = vadd.f32 %v4227, %v4289
        %s4296 = scalar_lea.vmem %s18, 5
        %v4297 = vld [vmem:[%s4296] sm:$0x1]
        %v4299 = vlaneseq
        %v4300 = vshrl.u32 %v4299, 7
        %v4301 = vsub.s32 0, %v4300
        %v4302 = vrot.slane %v4297, %v4301
        %v4304 = vadd.f32 %v4292, %v4302
        %v4305 = vadd.f32 %v4293, %v4302
        %v4306 = vadd.f32 %v4294, %v4302
        %v4307 = vadd.f32 %v4295, %v4302
        %v4308 = vxor.u32 %v4304, 2147483648
        %v4309 = vxor.u32 %v4305, 2147483648
        %v4310 = vxor.u32 %v4306, 2147483648
        %v4311 = vxor.u32 %v4307, 2147483648
        %v4312 = vmul.f32 %v4308, 1.442695
        %v4313 = vpow.pop %v4312
        %v4314 = vmul.f32 %v4309, 1.442695
        %v4315 = vpow.pop %v4314
        %v4316 = vmul.f32 %v4310, 1.442695
        %v4317 = vpow.pop %v4316
        %v4318 = vmul.f32 %v4311, 1.442695
        %v4319 = vpow.pop %v4318
        %v4320 = vadd.f32 %v4313, 1.0
        %v4321 = vadd.f32 %v4315, 1.0
        %v4322 = vadd.f32 %v4317, 1.0
        %v4323 = vadd.f32 %v4319, 1.0
        %v4324 = vrcp.pop %v4320
        %v4325 = vmul.f32 1.0, %v4324
        %v4326 = vrcp.pop %v4321
        %v4327 = vmul.f32 1.0, %v4326
        %v4328 = vrcp.pop %v4322
        %v4329 = vmul.f32 1.0, %v4328
        %v4330 = vrcp.pop %v4323
        %v4331 = vmul.f32 1.0, %v4330
        %4336 = vrot.lane.b32.xlu0 %v4178, 96
        %v4337 = vpop.permute.xlu0 %4336
        %4338 = vrot.lane.b32.xlu0 %v4181, 96
        %v4339 = vpop.permute.xlu0 %4338
        %4340 = vrot.lane.b32.xlu0 %v4186, 96
        %v4341 = vpop.permute.xlu0 %4340
        %4342 = vrot.lane.b32.xlu0 %v4189, 96
        %v4343 = vpop.permute.xlu0 %4342
        %v4348 = vmul.f32 %v4325, %v4337
        %v4349 = vmul.f32 %v4327, %v4339
        %v4350 = vmul.f32 %v4329, %v4341
        %v4351 = vmul.f32 %v4331, %v4343
        %v4352 = vpack.c.bf16 %v4349, %v4348
        %v4353 = vpack.c.bf16 %v4351, %v4350
        %4354 = vmatprep.subr.bf16.mxu0 0
        %4355 = vmatpush1.bf16.msra.mxu0 %v4352
        %4356 = vmatprep.subr.bf16.mxu0 0
        %4357 = vmatpush1.bf16.msra.mxu0 %v4353
        %4358 = vmatprep.subr.bf16.mxu0 0
        %4359 = vmatpush1.bf16.msra.mxu0 0
        %4360 = vmatprep.subr.bf16.mxu0 0
        %4361 = vmatpush1.bf16.msra.mxu0 0
        %4362 = vmatprep.subr.bf16.mxu0 0
        %4363 = vmatpush1.bf16.msra.mxu0 0
        %4364 = vmatprep.subr.bf16.mxu0 0
        %4365 = vmatpush1.bf16.msra.mxu0 0
        %4366 = vmatprep.subr.bf16.mxu0 0
        %4367 = vmatpush1.bf16.msra.mxu0 0
        %4368 = vmatprep.subr.bf16.mxu0 0
        %4369 = vmatpush1.bf16.msra.mxu0 0
        %4370 = vmatprep.subr.bf16.mxu0 0
        %4371 = vmatpush1.bf16.msra.mxu0 0
        %4372 = vmatprep.subr.bf16.mxu0 0
        %4373 = vmatpush1.bf16.msra.mxu0 0
        %4374 = vmatprep.subr.bf16.mxu0 0
        %4375 = vmatpush1.bf16.msra.mxu0 0
        %4376 = vmatprep.subr.bf16.mxu0 0
        %4377 = vmatpush1.bf16.msra.mxu0 0
        %4378 = vmatprep.subr.bf16.mxu0 0
        %4379 = vmatpush1.bf16.msra.mxu0 0
        %4380 = vmatprep.subr.bf16.mxu0 0
        %4381 = vmatpush1.bf16.msra.mxu0 0
        %4382 = vmatprep.subr.bf16.mxu0 0
        %4383 = vmatpush1.bf16.msra.mxu0 0
        %4384 = vmatprep.subr.bf16.mxu0 0
        %4385 = vmatpush1.bf16.msra.mxu0 0
        %4386 = vmatprep.mubr.bf16.mxu0 0
        %4387 = vmatmul.mubr.bf16.gmra.mrb[0].mxu0 %v1722
        %v4388 = vpop.f32.mrb[0].mxu0
        %v4389 = vadd.f32 0.0, %v4388
        %v4390 = vpop.f32.mrb[0].mxu0
        %v4391 = vpop.f32.mrb[0].mxu0
        %v4392 = vadd.f32 0.0, %v4391
        %v4393 = vpop.f32.mrb[0].mxu0
        %4394 = vdwg.mxu0
        %v4395 = vpack.c.bf16 %v4327, %v4325
        %v4396 = vpack.c.bf16 %v4331, %v4329
        %4397 = vmatprep.subr.bf16.mxu0 0
        %4398 = vmatpush1.bf16.msra.mxu0 %v4395
        %4399 = vmatprep.subr.bf16.mxu0 0
        %4400 = vmatpush1.bf16.msra.mxu0 %v4396
        %4401 = vmatprep.subr.bf16.mxu0 0
        %4402 = vmatpush1.bf16.msra.mxu0 0
        %4403 = vmatprep.subr.bf16.mxu0 0
        %4404 = vmatpush1.bf16.msra.mxu0 0
        %4405 = vmatprep.subr.bf16.mxu0 0
        %4406 = vmatpush1.bf16.msra.mxu0 0
        %4407 = vmatprep.subr.bf16.mxu0 0
        %4408 = vmatpush1.bf16.msra.mxu0 0
        %4409 = vmatprep.subr.bf16.mxu0 0
        %4410 = vmatpush1.bf16.msra.mxu0 0
        %4411 = vmatprep.subr.bf16.mxu0 0
        %4412 = vmatpush1.bf16.msra.mxu0 0
        %4413 = vmatprep.subr.bf16.mxu0 0
        %4414 = vmatpush1.bf16.msra.mxu0 0
        %4415 = vmatprep.subr.bf16.mxu0 0
        %4416 = vmatpush1.bf16.msra.mxu0 0
        %4417 = vmatprep.subr.bf16.mxu0 0
        %4418 = vmatpush1.bf16.msra.mxu0 0
        %4419 = vmatprep.subr.bf16.mxu0 0
        %4420 = vmatpush1.bf16.msra.mxu0 0
        %4421 = vmatprep.subr.bf16.mxu0 0
        %4422 = vmatpush1.bf16.msra.mxu0 0
        %4423 = vmatprep.subr.bf16.mxu0 0
        %4424 = vmatpush1.bf16.msra.mxu0 0
        %4425 = vmatprep.subr.bf16.mxu0 0
        %4426 = vmatpush1.bf16.msra.mxu0 0
        %4427 = vmatprep.subr.bf16.mxu0 0
        %4428 = vmatpush1.bf16.msra.mxu0 0
        %4429 = vmatprep.mubr.bf16.mxu0 0
        %4430 = vmatmul.mubr.bf16.gmra.mrb[0].mxu0 %v1722
        %v4431 = vpop.f32.mrb[0].mxu0
        %v4432 = vadd.f32 1e-06, %v4431
        %v4433 = vpop.f32.mrb[0].mxu0
        %v4434 = vpop.f32.mrb[0].mxu0
        %v4435 = vadd.f32 1e-06, %v4434
        %v4436 = vpop.f32.mrb[0].mxu0
        %4437 = vdwg.mxu0
        %v4438 = vrcp.pop %v4432
        %v4439 = vrcp.pop %v4435
        %v4440 = vmul.f32 %v4389, %v4438
        %v4441 = vmul.f32 %v4392, %v4439
        %4444 = vrot.lane.b32.xlu0 %v4440, 96
        %v4445 = vpop.permute.xlu0 %4444
        %4446 = vrot.lane.b32.xlu0 %v4441, 96
        %v4447 = vpop.permute.xlu0 %4446
        %v4450 = vadd.f32 %v4136, %v4445
        %v4451 = vadd.f32 %v4139, %v4447
        %s4452 = scalar_lea.vmem %s19, 20
        %v4453 = vld [vmem:[%s4452] sm:$0xf]
        %v4454 = vlaneseq
        %v4455 = vshrl.u32 %v4454, 7
        %v4456 = vsub.s32 0, %v4455
        %v4457 = vrot.slane %v4453, %v4456
        %4459 = vrot.lane.b32.xlu0 %v4457, 96
        %v4460 = vpop.permute.xlu0 %4459
        %v4462 = vmul.f32 %v4450, %v4460
        %v4463 = vmul.f32 %v4451, %v4460
        %v4464 = vlaneseq
        %v4465 = vshrl.u32 %v4464, 7
        %v4466 = vsub.s32 1, %v4465
        %v4467 = vrot.slane %v4453, %v4466
        %4469 = vrot.lane.b32.xlu0 %v4467, 96
        %v4470 = vpop.permute.xlu0 %4469
        %v4472 = vadd.f32 %v4462, %v4470
        %v4473 = vadd.f32 %v4463, %v4470
        %v4474 = vxor.u32 %v4472, 2147483648
        %v4475 = vxor.u32 %v4473, 2147483648
        %v4476 = vmul.f32 %v4474, 1.442695
        %v4477 = vpow.pop %v4476
        %v4478 = vmul.f32 %v4475, 1.442695
        %v4479 = vpow.pop %v4478
        %v4480 = vadd.f32 %v4477, 1.0
        %v4481 = vadd.f32 %v4479, 1.0
        %v4482 = vrcp.pop %v4480
        %v4483 = vmul.f32 1.0, %v4482
        %v4484 = vrcp.pop %v4481
        %v4485 = vmul.f32 1.0, %v4484
        %v4486 = vmul.f32 %v4472, %v4483
        %v4487 = vmul.f32 %v4473, %v4485
        %4490 = vrot.lane.b32.xlu0 %v4486, 32
        %v4491 = vpop.permute.xlu0 %4490
        %4492 = vrot.lane.b32.xlu0 %v4487, 32
        %v4493 = vpop.permute.xlu0 %4492
        %v4496 = vadd.f32 %v4032, %v4491
        %v4497 = vadd.f32 %v4033, %v4493
        %s4498 = sld [smem:[#allocation2 + %s37]]
        %4500 = vset.pattern.permute.xlu0 0
        %4501 = vperm.xlu0 %4500, %v768
        %v4502 = vpop.permute.xlu0 %4501
        %4505 = vset.pattern.permute.xlu0 0
        %4506 = vperm.xlu0 %4505, %v769
        %v4507 = vpop.permute.xlu0 %4506
        %v4509 = vmul.f32 %v4496, %v4502
        %v4510 = vmul.f32 %v4497, %v4507
        %v4511 = vsel %vm995, %v4509, 0.0
        %v4512 = vsel %vm995, %v4510, 0.0
        %v4513 = vadd.f32 %v4511, %v4512
        %v4514 = vrot.slane %v4513, 4
        %v4515 = vadd.f32 %v4513, %v4514
        %v4516 = vrot.slane %v4515, 2
        %v4517 = vadd.f32 %v4515, %v4516
        %v4518 = vrot.slane %v4517, 1
        %v4519 = vadd.f32 %v4517, %v4518
        %v4520 = vstv %s4498
        %v4521 = vmul.f32 %v4519, %v4520
        %v4522 = vld [vmem:[%s20] sm:$0xff]
        %v4523 = vld [vmem:[%s20 + $0x8] sm:$0xff]
        %v4524 = vld [vmem:[%s20 + $0x10] sm:$0xff]
        %v4525 = vld [vmem:[%s20 + $0x18] sm:$0xff]
        %v4526 = vld [vmem:[%s21] sm:$0x1]
        %v4528 = vsel %vm995, %v4521, 0
        %4530 = vmatprep.subr.mxu0 0.0
        %4531 = vmatpush1.msra.mxu0 %v4522
        %4532 = vmatprep.subr.mxu0 0.0
        %4533 = vmatpush1.msra.mxu0 %v4523
        %4534 = vmatprep.subr.mxu0 0.0
        %4535 = vmatpush1.msra.mxu0 %v4524
        %4536 = vmatprep.subr.mxu0 0.0
        %4537 = vmatpush1.msra.mxu0 %v4525
        %4538 = vmatprep.subr.mxu0 0.0
        %4539 = vmatpush1.msra.mxu0 0.0
        %4540 = vmatprep.subr.mxu0 0.0
        %4541 = vmatpush1.msra.mxu0 0.0
        %4542 = vmatprep.subr.mxu0 0.0
        %4543 = vmatpush1.msra.mxu0 0.0
        %4544 = vmatprep.subr.mxu0 0.0
        %4545 = vmatpush1.msra.mxu0 0.0
        %4546 = vmatprep.subr.mxu0 0.0
        %4547 = vmatpush1.msra.mxu0 0.0
        %4548 = vmatprep.subr.mxu0 0.0
        %4549 = vmatpush1.msra.mxu0 0.0
        %4550 = vmatprep.subr.mxu0 0.0
        %4551 = vmatpush1.msra.mxu0 0.0
        %4552 = vmatprep.subr.mxu0 0.0
        %4553 = vmatpush1.msra.mxu0 0.0
        %4554 = vmatprep.subr.mxu0 0.0
        %4555 = vmatpush1.msra.mxu0 0.0
        %4556 = vmatprep.subr.mxu0 0.0
        %4557 = vmatpush1.msra.mxu0 0.0
        %4558 = vmatprep.subr.mxu0 0.0
        %4559 = vmatpush1.msra.mxu0 0.0
        %4560 = vmatprep.subr.mxu0 0.0
        %4561 = vmatpush1.msra.mxu0 0.0
        %4562 = vmatprep.subr.mxu0 0.0
        %4563 = vmatpush1.msra.mxu0 0.0
        %4564 = vmatprep.subr.mxu0 0.0
        %4565 = vmatpush1.msra.mxu0 0.0
        %4566 = vmatprep.subr.mxu0 0.0
        %4567 = vmatpush1.msra.mxu0 0.0
        %4568 = vmatprep.subr.mxu0 0.0
        %4569 = vmatpush1.msra.mxu0 0.0
        %4570 = vmatprep.subr.mxu0 0.0
        %4571 = vmatpush1.msra.mxu0 0.0
        %4572 = vmatprep.subr.mxu0 0.0
        %4573 = vmatpush1.msra.mxu0 0.0
        %4574 = vmatprep.subr.mxu0 0.0
        %4575 = vmatpush1.msra.mxu0 0.0
        %4576 = vmatprep.subr.mxu0 0.0
        %4577 = vmatpush1.msra.mxu0 0.0
        %4578 = vmatprep.subr.mxu0 0.0
        %4579 = vmatpush1.msra.mxu0 0.0
        %4580 = vmatprep.subr.mxu0 0.0
        %4581 = vmatpush1.msra.mxu0 0.0
        %4582 = vmatprep.subr.mxu0 0.0
        %4583 = vmatpush1.msra.mxu0 0.0
        %4584 = vmatprep.subr.mxu0 0.0
        %4585 = vmatpush1.msra.mxu0 0.0
        %4586 = vmatprep.subr.mxu0 0.0
        %4587 = vmatpush1.msra.mxu0 0.0
        %4588 = vmatprep.subr.mxu0 0.0
        %4589 = vmatpush1.msra.mxu0 0.0
        %4590 = vmatprep.subr.mxu0 0.0
        %4591 = vmatpush1.msra.mxu0 0.0
        %4592 = vmatprep.subr.mxu0 0.0
        %4593 = vmatpush1.msra.mxu0 0.0
        %4594 = vmatprep.mubr.f32.mxu0 0.0
        %4595 = vmatmul.mubr.f32.gmra.mrb[0].mxu0 %v4528
        %v4596 = vpop.f32.mrb[0].mxu0
        %v4597 = vadd.f32 %v4526, %v4596
        %v4598 = vpop.f32.mrb[0].mxu0
        %4599 = vdwg.mxu0
        %vm4600 = vcmask 1040384
        %v4601 = vsel %vm4600, %v4597, -inf
        %4602 = vmax.xlane.f32.xlu0 %v4601
        %v4603 = vpop.xlane.xlu0 %4602
        %v4604 = vsub.f32 %v4597, %v4603
        %v4605 = vmul.f32 %v4604, 1.442695
        %v4606 = vpow.pop %v4605
        %v4607 = vsel %vm4600, %v4606, 0.0
        %4608 = vadd.xlane.f32.xlu0 %v4607
        %v4609 = vpop.xlane.xlu0 %4608
        %v4610 = vlog2.pop %v4609
        %v4611 = vmul.f32 %v4610, 0.6931472
        %v4612 = vadd.f32 %v4603, %v4611
        %v4613 = vsub.f32 %v4597, %v4612
        %4614 = vst [vmem:[%s734] sm:$0x1] %v4613
        %s4615 = sand.u32 %s527, 1
        %s4616 = scalar_lea.sflag [#allocation3], %s4615
        %s4617 = sand.u32 %s527, 1
        %s4618 = scalar_lea.vmem [#allocation5], %s4617
        // Predicated region
        $region113: #{tpu_custom_call.1} parent=107 // pred_check
          %p4619 = pneg %p537
        $region114: #{tpu_custom_call.1} parent=107 // pred_check_branch
          %4621 = sbr.rel (%p4619) target = $region116
        $region115: #{tpu_custom_call.1} parent=107 // pred_region
          %s4623 = ssub.s32 16, 16
          %4624 = vsyncadd %s4616, %s4623
          %s4625 = smul.addr %s37, 16
          %s4626 = scalar_lea.hbm %s22, %s4625
          %s4628 = sshll.u32 %s4618, 4
          %s4629 = int_to_ptr.vmem [resolvable:$true] %s4628
          %4631 = dma.vmem_to_hbm [thread:$0]  %s4629, 16, %s4626, %s4616
        $region116: #{tpu_custom_call.1} parent=107 // pred_fallthru
          _
      $region108: #{tpu_custom_call.1} parent=5 // pred_fallthru
        _
      %p4632 = scmp.le.s32.totalorder 2, %s32
      // Predicated region
      $region117: #{tpu_custom_call.1} parent=5 // pred_check
        %p4633 = pneg %p4632
      $region118: #{tpu_custom_call.1} parent=5 // pred_check_branch
        %4635 = sbr.rel (%p4633) target = $region120
      $region119: #{tpu_custom_call.1} parent=5 // pred_region
        %s4636 = ssub.s32 %s32, 2
        // Predicated region
        $region121: #{tpu_custom_call.1} parent=119 // pred_check
          %p4637 = pneg %p543
        $region122: #{tpu_custom_call.1} parent=119 // pred_check_branch
          %4639 = sbr.rel (%p4637) target = $region124
        $region123: #{tpu_custom_call.1} parent=119 // pred_region
          %s4640 = sand.u32 %s528, 1
          %s4641 = scalar_lea.sflag [#allocation3], %s4640
          %s4642 = sand.u32 %s528, 1
          %s4643 = scalar_lea.vmem [#allocation5], %s4642
          %4644 = dma.done %s4641, 16
        $region124: #{tpu_custom_call.1} parent=119 // pred_fallthru
          _
      $region120: #{tpu_custom_call.1} parent=5 // pred_fallthru
        _
    $region6: #{tpu_custom_call.1} parent=1 // loop_footer
      %s36 = sadd.s32 1, %s32
    $region7: #{tpu_custom_call.1} parent=1 // loop_footer_branch
      %31 = sbr.rel target = $region3
    $region8: #{tpu_custom_call.1} parent=1 // loop_exit
      _
    %4645 = vsyncpa [#allocation3], 1
    %s4646 = scalar_lea.sflag [#allocation3], 1
    %4647 = vsyncpa %s4646, 1
    %4648 = vsyncpa [#allocation4], 1
    %s4649 = scalar_lea.sflag [#allocation4], 1
    %4650 = vsyncpa %s4649, 1

</llo_original>
